<compile_context>
chip_gen: v7x
topology: tpu7x:2x2x1
jax: 0.10.0
libtpu: 0.0.40
codegen_flags: <defaults>
</compile_context>

<pallas_src>
import functools

import numpy as np
import jax
import jax.numpy as jnp
from jax.experimental import pallas as pl
from jax.experimental.pallas import tpu as pltpu


# ----------------------------------------------------------------------------
# Positional encoding (torch helper semantics).  Only used for the references;
# the kernel computes the PE internally.
# ----------------------------------------------------------------------------
def positional_encoding(positions, freqs):
    freq_bands = 2.0 ** jnp.arange(freqs, dtype=jnp.float32)            # (freqs,)
    pts = positions[..., None] * freq_bands                             # (..., C, freqs)
    pts = pts.reshape(positions.shape[:-1] + (freqs * positions.shape[-1],))
    return jnp.concatenate([jnp.sin(pts), jnp.cos(pts)], axis=-1)


def build_mlp_input(pts, viewdirs, features, frame_time,
                    t_pe=6, fea_pe=6, pos_pe=6, view_pe=6):
    indata = [features,
              frame_time, positional_encoding(frame_time, t_pe),
              positional_encoding(features, fea_pe),
              pts, positional_encoding(pts, pos_pe),
              viewdirs, positional_encoding(viewdirs, view_pe)]
    return jnp.concatenate(indata, axis=-1)


# ----------------------------------------------------------------------------
# Static column bookkeeping for the fused-PE first layer.
#
# TODO(synk): only the default module config (all PE freqs >= 1, all inputs
# used, gen_latent present) is wired through the fused-PE path.
# ----------------------------------------------------------------------------
def _build_layout(inChanel, t_pe, fea_pe, pos_pe, view_pe):
    o = 0

    def seg(n):
        nonlocal o
        s = list(range(o, o + n)); o += n
        return s

    feat_raw = seg(inChanel)
    time_raw = seg(1)
    time_sin = seg(t_pe);              time_cos = seg(t_pe)
    fea_sin = seg(inChanel * fea_pe);  fea_cos = seg(inChanel * fea_pe)
    pts_raw = seg(3)
    pts_sin = seg(3 * pos_pe);         pts_cos = seg(3 * pos_pe)
    view_raw = seg(3)
    view_sin = seg(3 * view_pe);       view_cos = seg(3 * view_pe)
    in_mlpC = o

    # Kernel raw-block column order: [features | time | pts | viewdirs | gen].
    raw_rows = feat_raw + time_raw + pts_raw + view_raw       # 11 original cols
    sin_rows = fea_sin + time_sin + pts_sin + view_sin
    cos_rows = fea_cos + time_cos + pts_cos + view_cos
    n_raw = len(raw_rows) + 1                                 # + gen column
    gen_col = n_raw - 1
    n_scaled = len(sin_rows)

    # scaled = raw @ S, with S a power-of-two selection matrix laid out so
    # sin(scaled)/cos(scaled) columns line up with sin_rows / cos_rows.
    groups = [(list(range(inChanel)), fea_pe),                    # features
              ([inChanel], t_pe),                                 # frame_time
              (list(range(inChanel + 1, inChanel + 4)), pos_pe),  # pts
              (list(range(inChanel + 4, inChanel + 7)), view_pe)] # viewdirs
    S = np.zeros((n_raw, n_scaled), np.float32)
    col = 0
    for cols, freqs in groups:
        for c in cols:
            for f in range(freqs):
                S[c, col] = 2.0 ** f
                col += 1
    assert col == n_scaled
    return in_mlpC, n_raw, gen_col, n_scaled, raw_rows, sin_rows, cos_rows, S


# ----------------------------------------------------------------------------
# Pallas kernel: fused PE + full MLP chain for one batch tile.
#   x tile: (T, n_raw) fp32 raw columns, last column = gen_latents.
#   scaled  = x @ S                  (MXU, bf16 hi/lo split -> ~f32 args)
#   h0      = relu(x @ W0a + sin(scaled) @ W0b + cos(scaled) @ W0c + b0)
#   h1      = relu(h0 @ W1 + b1)
#   h2      = h1 @ W2 + b2
#   f1      = relu(h2 @ Wf1 + gen * Wf1g + bf1)    (== relu(cat(h2, gen) @ fc1))
#   out     = sigmoid(f1 @ Wf2_pad + bf2_pad)      (128-lane bf16 output block)
# All dots: bf16 inputs, fp32 MXU accumulation.  Bias / ReLU / sigmoid in fp32.
# ----------------------------------------------------------------------------
def general_mlp_kernel(x_ref, s_ref, w0a_ref, w0b_ref, w0c_ref, b0_ref,
                       w1_ref, b1_ref, w2_ref, b2_ref,
                       wf1_ref, wf1g_ref, bf1_ref, wf2_ref, bf2_ref,
                       o_ref, *, gen_col):
    f32 = jnp.float32
    x = x_ref[...]                                     # (T, n_raw) fp32
    g = x[:, gen_col:gen_col + 1]                      # (T, 1) fp32 gen_latents

    # Fused positional encoding.  S entries are powers of two (exact in bf16);
    # the hi/lo split of x keeps sin/cos arguments at ~f32 precision even
    # though the MXU runs bf16.
    x_hi = x.astype(jnp.bfloat16)
    x_lo = (x - x_hi.astype(f32)).astype(jnp.bfloat16)
    s = s_ref[...]
    scaled = (jnp.dot(x_hi, s, preferred_element_type=f32)
              + jnp.dot(x_lo, s, preferred_element_type=f32))       # (T, n_scaled)
    sin_t = jnp.sin(scaled).astype(jnp.bfloat16)
    cos_t = jnp.cos(scaled).astype(jnp.bfloat16)

    # Layer 0: relu(mlp_in @ W0 + b0), mlp_in never materialized (W0 rows were
    # permuted/split into raw / sin / cos parts in the wrapper).
    h = (jnp.dot(x_hi, w0a_ref[...], preferred_element_type=f32)
         + jnp.dot(sin_t, w0b_ref[...], preferred_element_type=f32)
         + jnp.dot(cos_t, w0c_ref[...], preferred_element_type=f32)
         + b0_ref[...])
    h = jnp.maximum(h, 0.0).astype(jnp.bfloat16)

    h = jnp.dot(h, w1_ref[...], preferred_element_type=f32) + b1_ref[...]
    h = jnp.maximum(h, 0.0).astype(jnp.bfloat16)

    h = jnp.dot(h, w2_ref[...], preferred_element_type=f32) + b2_ref[...]
    h = h.astype(jnp.bfloat16)                         # (T, 256)

    # cat(h2, gen) @ Wfc1  ==  h2 @ Wfc1[:256] + gen * Wfc1[256]   (gen in fp32)
    h = (jnp.dot(h, wf1_ref[...], preferred_element_type=f32)
         + g * wf1g_ref[...] + bf1_ref[...])
    h = jnp.maximum(h, 0.0).astype(jnp.bfloat16)       # (T, 128)

    h = jnp.dot(h, wf2_ref[...], preferred_element_type=f32) + bf2_ref[...]
    o_ref[...] = jax.nn.sigmoid(h).astype(o_ref.dtype)  # (T, out_pad) bf16


# ----------------------------------------------------------------------------
# Wrapper: permute/pad weights once, launch the kernel tiled over the batch.
# ----------------------------------------------------------------------------
def _prepare_params(params, layout, out_pad):
    (w0, b0, w1, b1, w2, b2, wf1, wf1g, bf1, wf2, bf2) = params
    _, n_raw, _, _, raw_rows, sin_rows, cos_rows, S = layout
    featC = w0.shape[1]
    f1C, outC = wf2.shape
    bf = jnp.bfloat16

    take = lambda rows: jnp.take(w0, jnp.asarray(rows, jnp.int32), axis=0)
    # Raw part: last (gen) row stays zero, gen does not feed layer 0.
    w0a = jnp.zeros((n_raw, featC), jnp.float32).at[:len(raw_rows)].set(take(raw_rows))
    w0b = take(sin_rows)
    w0c = take(cos_rows)
    wf2p = jnp.zeros((f1C, out_pad), jnp.float32).at[:, :outC].set(wf2)
    bf2p = jnp.zeros((1, out_pad), jnp.float32).at[:, :outC].set(bf2)

    return (jnp.asarray(S, bf),                        # power-of-two scaling matrix
            w0a.astype(bf), w0b.astype(bf), w0c.astype(bf), b0,
            w1.astype(bf), b1, w2.astype(bf), b2,
            wf1.astype(bf), wf1g, bf1, wf2p.astype(bf), bf2p)


def _pick_tile(n_rows, tile_target):
    tile = min(int(tile_target), pl.cdiv(n_rows, 128) * 128)   # never exceed padded N
    tile = max(128, (tile // 128) * 128)
    # Keep >= ~8 grid steps when the batch allows (>= 4 per TensorCore on v7x's
    # 2-TC megacore) so per-tile DMA stays hidden behind compute.
    cap = max(128, pl.cdiv(pl.cdiv(n_rows, 8), 128) * 128)
    return min(tile, cap)


@functools.partial(jax.jit,
                   static_argnames=("t_pe", "fea_pe", "pos_pe", "view_pe", "tile_n"))
def general_mlp_forward(pts, viewdirs, features, frame_time, gen_latents, params,
                        *, t_pe=6, fea_pe=6, pos_pe=6, view_pe=6, tile_n=2048):
    N = pts.shape[0]
    inChanel = features.shape[1]
    layout = _build_layout(inChanel, t_pe, fea_pe, pos_pe, view_pe)
    in_mlpC, n_raw, gen_col, n_scaled = layout[:4]
    assert params[0].shape[0] == in_mlpC, "params do not match the PE config"
    featC = params[0].shape[1]
    midC = params[4].shape[1]            # 256
    f1C, outC = params[9].shape          # 128, outC

    out_pad = max(128, pl.cdiv(outC, 128) * 128)       # lane-dense output block
    tile = _pick_tile(N, tile_n)
    n_pad = pl.cdiv(N, tile) * tile
    grid = (n_pad // tile,)

    # Raw kernel input (~48 B/row): [features | time | pts | viewdirs | gen].
    # The PE / concat that used to be a separate ~0.5 KB/row HBM pass is now
    # computed inside the kernel.
    raw = jnp.concatenate([features, frame_time, pts, viewdirs, gen_latents],
                          axis=-1).astype(jnp.float32)
    if n_pad != N:
        raw = jnp.pad(raw, ((0, n_pad - N), (0, 0)))

    prepped = _prepare_params(params, layout, out_pad)
    full = lambda a: pl.BlockSpec(a.shape, lambda i: (0, 0))

    weight_bytes = sum(int(p.size) * p.dtype.itemsize for p in prepped)
    flops = 2 * n_pad * (2 * n_raw * n_scaled + n_raw * featC
                         + 2 * n_scaled * featC + featC * featC
                         + featC * midC + midC * f1C + f1C * out_pad)
    cost = pl.CostEstimate(
        flops=int(flops),
        transcendentals=int(n_pad * (2 * n_scaled + out_pad)),
        bytes_accessed=int(n_pad * n_raw * 4 + n_pad * out_pad * 2 + weight_bytes))

    out = pl.pallas_call(
        functools.partial(general_mlp_kernel, gen_col=gen_col),
        out_shape=jax.ShapeDtypeStruct((n_pad, out_pad), jnp.bfloat16),
        grid_spec=pltpu.PrefetchScalarGridSpec(
            num_scalar_prefetch=0,
            grid=grid,
            in_specs=[pl.BlockSpec((tile, n_raw), lambda i: (i, 0))]   # x tile
                     + [full(p) for p in prepped],                     # weights/biases
            out_specs=pl.BlockSpec((tile, out_pad), lambda i: (i, 0)),
        ),
        compiler_params=pltpu.CompilerParams(
            dimension_semantics=("parallel",)),
        cost_estimate=cost,
    )(raw, *prepped)

    # Slice to the true shape inside the same jit so XLA fuses it; downstream
    # consumers that can take the padded (n_pad, out_pad) bf16 slab directly
    # should grab `out` before this slice.
    return out[:N, :outC].astype(jnp.float32)


# ----------------------------------------------------------------------------
# Parameter init (mimics torch.nn.Linear default: U(-1/sqrt(fan_in), +..)),
# deterministic from PRNGKey(0).  zero_init => last MLP-layer bias is zero.
# ----------------------------------------------------------------------------
def init_linear(key, fan_in, fan_out, zero_bias=False):
    kw, kb = jax.random.split(key)
    bound = 1.0 / jnp.sqrt(fan_in)
    w = jax.random.uniform(kw, (fan_in, fan_out), jnp.float32, -bound, bound)
    b = (jnp.zeros((1, fan_out), jnp.float32) if zero_bias else
         jax.random.uniform(kb, (1, fan_out), jnp.float32, -bound, bound))
    return w, b


def make_params(key, in_mlpC, outC, featC=128):
    keys = jax.random.split(key, 5)
    w0, b0 = init_linear(keys[0], in_mlpC, featC)
    w1, b1 = init_linear(keys[1], featC, featC)
    w2, b2 = init_linear(keys[2], featC, 256, zero_bias=True)   # zero_init
    wfc1, bf1 = init_linear(keys[3], 256 + 1, 128)              # fc1: Linear(257, 128)
    wf1, wf1g = wfc1[:256, :], wfc1[256:257, :]                 # split cat(h, gen)
    wf2, bf2 = init_linear(keys[4], 128, outC)                  # fc2: Linear(128, outC)
    return (w0, b0, w1, b1, w2, b2, wf1, wf1g, bf1, wf2, bf2)


# ----------------------------------------------------------------------------
# References for correctness checking.
# ----------------------------------------------------------------------------
def reference_forward(mlp_in, gen_latents, params):
    """Pure fp32 reference (matches the torch module)."""
    (w0, b0, w1, b1, w2, b2, wf1, wf1g, bf1, wf2, bf2) = params
    h = jax.nn.relu(mlp_in @ w0 + b0)
    h = jax.nn.relu(h @ w1 + b1)
    h = h @ w2 + b2
    h = jnp.concatenate([h, gen_latents], axis=1)
    wfc1 = jnp.concatenate([wf1, wf1g], axis=0)
    h = jax.nn.relu(h @ wfc1 + bf1)
    return jax.nn.sigmoid(h @ wf2 + bf2)


def reference_forward_bf16(mlp_in, gen_latents, params):
    """Reference matching the kernel's structure: PE columns computed in fp32
    then bf16-quantized for the first matmul, bf16 MXU / fp32 accumulate,
    gen_latents kept fp32."""
    (w0, b0, w1, b1, w2, b2, wf1, wf1g, bf1, wf2, bf2) = params
    bf = lambda a: a.astype(jnp.bfloat16)
    f32 = jnp.float32
    x = bf(mlp_in)
    g = gen_latents.astype(f32)
    h = jnp.dot(x, bf(w0), preferred_element_type=f32) + b0
    h = bf(jax.nn.relu(h))
    h = jnp.dot(h, bf(w1), preferred_element_type=f32) + b1
    h = bf(jax.nn.relu(h))
    h = bf(jnp.dot(h, bf(w2), preferred_element_type=f32) + b2)
    h = jnp.dot(h, bf(wf1), preferred_element_type=f32) + g * wf1g + bf1
    h = bf(jax.nn.relu(h))
    h = jnp.dot(h, bf(wf2), preferred_element_type=f32) + bf2
    return jax.nn.sigmoid(h)


if __name__ == "__main__":
    # Small, module-consistent shapes.
    N = 256          # number of rays / points (batch)
    inChanel = 4     # feature channels
    outChanel = 3    # rgb
    t_pe = fea_pe = pos_pe = view_pe = 6
    featureC = 128

    key = jax.random.PRNGKey(0)
    k_pts, k_view, k_feat, k_time, k_gen, k_param = jax.random.split(key, 6)

    pts         = jax.random.normal(k_pts,  (N, 3), jnp.float32)
    viewdirs    = jax.random.normal(k_view, (N, 3), jnp.float32)
    features    = jax.random.normal(k_feat, (N, inChanel), jnp.float32)
    frame_time  = jax.random.uniform(k_time, (N, 1), jnp.float32)
    gen_latents = jax.random.normal(k_gen, (N, 1), jnp.float32)

    in_mlpC = inChanel + (1 + 2 * t_pe) + (2 * fea_pe * inChanel) \
        + (3 + 2 * pos_pe * 3) + (3 + 2 * view_pe * 3)           # = 143

    params = make_params(k_param, in_mlpC, outChanel, featureC)

    rgb = general_mlp_forward(pts, viewdirs, features, frame_time, gen_latents,
                              params, t_pe=t_pe, fea_pe=fea_pe,
                              pos_pe=pos_pe, view_pe=view_pe)
    rgb = jax.block_until_ready(rgb)
    assert rgb.shape == (N, outChanel)

    # References use the explicitly materialized mlp_in (kernel never builds it).
    mlp_in = build_mlp_input(pts, viewdirs, features, frame_time,
                             t_pe, fea_pe, pos_pe, view_pe)
    assert mlp_in.shape == (N, in_mlpC)

    ref_bf16 = reference_forward_bf16(mlp_in, gen_latents, params)
    ref_f32 = reference_forward(mlp_in, gen_latents, params)
    # Output is stored in bf16 (halves HBM writeback); bf16 ulp near 1.0 is
    # ~4e-3, so the structural check uses 1e-2 and the fp32 sanity check 5e-2.
    assert jnp.allclose(rgb, ref_bf16, atol=1e-2, rtol=0), "mismatch vs bf16 reference"
    assert jnp.allclose(rgb, ref_f32, atol=5e-2, rtol=0), "mismatch vs fp32 reference"

    print("KERNEL_OK")
</pallas_src>

<mosaic_0001>
module attributes {stable_mosaic.version = 11 : i64} {
  func.func @general_mlp_kernel(%arg0: i32, %arg1: memref<128x12xf32, #tpu.memory_space<vmem>>, %arg2: memref<12x66xbf16, #tpu.memory_space<vmem>>, %arg3: memref<12x128xbf16, #tpu.memory_space<vmem>>, %arg4: memref<66x128xbf16, #tpu.memory_space<vmem>>, %arg5: memref<66x128xbf16, #tpu.memory_space<vmem>>, %arg6: memref<1x128xf32, #tpu.memory_space<vmem>>, %arg7: memref<128x128xbf16, #tpu.memory_space<vmem>>, %arg8: memref<1x128xf32, #tpu.memory_space<vmem>>, %arg9: memref<128x256xbf16, #tpu.memory_space<vmem>>, %arg10: memref<1x256xf32, #tpu.memory_space<vmem>>, %arg11: memref<256x128xbf16, #tpu.memory_space<vmem>>, %arg12: memref<1x128xf32, #tpu.memory_space<vmem>>, %arg13: memref<1x128xf32, #tpu.memory_space<vmem>>, %arg14: memref<128x128xbf16, #tpu.memory_space<vmem>>, %arg15: memref<1x128xf32, #tpu.memory_space<vmem>>, %arg16: memref<128x128xbf16, #tpu.memory_space<vmem>>) attributes {dimension_semantics = [#tpu.dimension_semantics<parallel>], iteration_bounds = array<i64: 2>, scalar_prefetch = 0 : i64, scratch_operands = 0 : i64, tpu.core_type = #tpu.core_type<tc>, window_params = [{transform_indices = @transform_0, window_bounds = array<i64: 128, 12>}, {pipeline_mode = #tpu.pipeline_mode<synchronous>, transform_indices = @transform_1, window_bounds = array<i64: 12, 66>}, {pipeline_mode = #tpu.pipeline_mode<synchronous>, transform_indices = @transform_2, window_bounds = array<i64: 12, 128>}, {pipeline_mode = #tpu.pipeline_mode<synchronous>, transform_indices = @transform_3, window_bounds = array<i64: 66, 128>}, {pipeline_mode = #tpu.pipeline_mode<synchronous>, transform_indices = @transform_4, window_bounds = array<i64: 66, 128>}, {pipeline_mode = #tpu.pipeline_mode<synchronous>, transform_indices = @transform_5, window_bounds = array<i64: 1, 128>}, {pipeline_mode = #tpu.pipeline_mode<synchronous>, transform_indices = @transform_6, window_bounds = array<i64: 128, 128>}, {pipeline_mode = #tpu.pipeline_mode<synchronous>, transform_indices = @transform_7, window_bounds = array<i64: 1, 128>}, {pipeline_mode = #tpu.pipeline_mode<synchronous>, transform_indices = @transform_8, window_bounds = array<i64: 128, 256>}, {pipeline_mode = #tpu.pipeline_mode<synchronous>, transform_indices = @transform_9, window_bounds = array<i64: 1, 256>}, {pipeline_mode = #tpu.pipeline_mode<synchronous>, transform_indices = @transform_10, window_bounds = array<i64: 256, 128>}, {pipeline_mode = #tpu.pipeline_mode<synchronous>, transform_indices = @transform_11, window_bounds = array<i64: 1, 128>}, {pipeline_mode = #tpu.pipeline_mode<synchronous>, transform_indices = @transform_12, window_bounds = array<i64: 1, 128>}, {pipeline_mode = #tpu.pipeline_mode<synchronous>, transform_indices = @transform_13, window_bounds = array<i64: 128, 128>}, {pipeline_mode = #tpu.pipeline_mode<synchronous>, transform_indices = @transform_14, window_bounds = array<i64: 1, 128>}, {transform_indices = @transform_15, window_bounds = array<i64: 128, 128>}]} {
    %c0 = arith.constant 0 : index
    %c0_0 = arith.constant 0 : index
    %0 = vector.load %arg1[%c0, %c0_0] : memref<128x12xf32, #tpu.memory_space<vmem>>, vector<128x12xf32>
    %1 = vector.extract_strided_slice %0 {offsets = [0, 11], sizes = [128, 1], strides = [1, 1]} : vector<128x12xf32> to vector<128x1xf32>
    %2 = arith.truncf %0 : vector<128x12xf32> to vector<128x12xbf16>
    %3 = arith.extf %2 : vector<128x12xbf16> to vector<128x12xf32>
    %4 = arith.subf %0, %3 : vector<128x12xf32>
    %5 = arith.truncf %4 : vector<128x12xf32> to vector<128x12xbf16>
    %c0_1 = arith.constant 0 : index
    %c0_2 = arith.constant 0 : index
    %6 = vector.load %arg2[%c0_1, %c0_2] : memref<12x66xbf16, #tpu.memory_space<vmem>>, vector<12x66xbf16>
    %cst = arith.constant dense<0.000000e+00> : vector<128x66xf32>
    %7 = tpu.matmul %2, %6, %cst {dimension_numbers = #tpu.dot_dimension_numbers<[1], [0], [0], [1], [0, 0, 1, 1], [], []>} : vector<128x12xbf16>, vector<12x66xbf16>, vector<128x66xf32> -> vector<128x66xf32>
    %cst_3 = arith.constant dense<0.000000e+00> : vector<128x66xf32>
    %8 = tpu.matmul %5, %6, %cst_3 {dimension_numbers = #tpu.dot_dimension_numbers<[1], [0], [0], [1], [0, 0, 1, 1], [], []>} : vector<128x12xbf16>, vector<12x66xbf16>, vector<128x66xf32> -> vector<128x66xf32>
    %9 = arith.addf %7, %8 : vector<128x66xf32>
    %10 = math.sin %9 : vector<128x66xf32>
    %11 = arith.truncf %10 : vector<128x66xf32> to vector<128x66xbf16>
    %12 = math.cos %9 : vector<128x66xf32>
    %13 = arith.truncf %12 : vector<128x66xf32> to vector<128x66xbf16>
    %c0_4 = arith.constant 0 : index
    %c0_5 = arith.constant 0 : index
    %14 = vector.load %arg3[%c0_4, %c0_5] : memref<12x128xbf16, #tpu.memory_space<vmem>>, vector<12x128xbf16>
    %cst_6 = arith.constant dense<0.000000e+00> : vector<128x128xf32>
    %15 = tpu.matmul %2, %14, %cst_6 {dimension_numbers = #tpu.dot_dimension_numbers<[1], [0], [0], [1], [0, 0, 1, 1], [], []>} : vector<128x12xbf16>, vector<12x128xbf16>, vector<128x128xf32> -> vector<128x128xf32>
    %c0_7 = arith.constant 0 : index
    %c0_8 = arith.constant 0 : index
    %16 = vector.load %arg4[%c0_7, %c0_8] : memref<66x128xbf16, #tpu.memory_space<vmem>>, vector<66x128xbf16>
    %cst_9 = arith.constant dense<0.000000e+00> : vector<128x128xf32>
    %17 = tpu.matmul %11, %16, %cst_9 {dimension_numbers = #tpu.dot_dimension_numbers<[1], [0], [0], [1], [0, 0, 1, 1], [], []>} : vector<128x66xbf16>, vector<66x128xbf16>, vector<128x128xf32> -> vector<128x128xf32>
    %18 = arith.addf %15, %17 : vector<128x128xf32>
    %c0_10 = arith.constant 0 : index
    %c0_11 = arith.constant 0 : index
    %19 = vector.load %arg5[%c0_10, %c0_11] : memref<66x128xbf16, #tpu.memory_space<vmem>>, vector<66x128xbf16>
    %cst_12 = arith.constant dense<0.000000e+00> : vector<128x128xf32>
    %20 = tpu.matmul %13, %19, %cst_12 {dimension_numbers = #tpu.dot_dimension_numbers<[1], [0], [0], [1], [0, 0, 1, 1], [], []>} : vector<128x66xbf16>, vector<66x128xbf16>, vector<128x128xf32> -> vector<128x128xf32>
    %21 = arith.addf %18, %20 : vector<128x128xf32>
    %c0_13 = arith.constant 0 : index
    %c0_14 = arith.constant 0 : index
    %22 = vector.load %arg6[%c0_13, %c0_14] : memref<1x128xf32, #tpu.memory_space<vmem>>, vector<1x128xf32>
    %23 = vector.broadcast %22 : vector<1x128xf32> to vector<128x128xf32>
    %24 = arith.addf %21, %23 : vector<128x128xf32>
    %cst_15 = arith.constant 0.000000e+00 : f32
    %25 = vector.broadcast %cst_15 : f32 to vector<128x128xf32>
    %26 = arith.maximumf %24, %25 : vector<128x128xf32>
    %27 = arith.truncf %26 : vector<128x128xf32> to vector<128x128xbf16>
    %c0_16 = arith.constant 0 : index
    %c0_17 = arith.constant 0 : index
    %28 = vector.load %arg7[%c0_16, %c0_17] : memref<128x128xbf16, #tpu.memory_space<vmem>>, vector<128x128xbf16>
    %cst_18 = arith.constant dense<0.000000e+00> : vector<128x128xf32>
    %29 = tpu.matmul %27, %28, %cst_18 {dimension_numbers = #tpu.dot_dimension_numbers<[1], [0], [0], [1], [0, 0, 1, 1], [], []>} : vector<128x128xbf16>, vector<128x128xbf16>, vector<128x128xf32> -> vector<128x128xf32>
    %c0_19 = arith.constant 0 : index
    %c0_20 = arith.constant 0 : index
    %30 = vector.load %arg8[%c0_19, %c0_20] : memref<1x128xf32, #tpu.memory_space<vmem>>, vector<1x128xf32>
    %31 = vector.broadcast %30 : vector<1x128xf32> to vector<128x128xf32>
    %32 = arith.addf %29, %31 : vector<128x128xf32>
    %cst_21 = arith.constant 0.000000e+00 : f32
    %33 = vector.broadcast %cst_21 : f32 to vector<128x128xf32>
    %34 = arith.maximumf %32, %33 : vector<128x128xf32>
    %35 = arith.truncf %34 : vector<128x128xf32> to vector<128x128xbf16>
    %c0_22 = arith.constant 0 : index
    %c0_23 = arith.constant 0 : index
    %36 = vector.load %arg9[%c0_22, %c0_23] : memref<128x256xbf16, #tpu.memory_space<vmem>>, vector<128x256xbf16>
    %cst_24 = arith.constant dense<0.000000e+00> : vector<128x256xf32>
    %37 = tpu.matmul %35, %36, %cst_24 {dimension_numbers = #tpu.dot_dimension_numbers<[1], [0], [0], [1], [0, 0, 1, 1], [], []>} : vector<128x128xbf16>, vector<128x256xbf16>, vector<128x256xf32> -> vector<128x256xf32>
    %c0_25 = arith.constant 0 : index
    %c0_26 = arith.constant 0 : index
    %38 = vector.load %arg10[%c0_25, %c0_26] : memref<1x256xf32, #tpu.memory_space<vmem>>, vector<1x256xf32>
    %39 = vector.broadcast %38 : vector<1x256xf32> to vector<128x256xf32>
    %40 = arith.addf %37, %39 : vector<128x256xf32>
    %41 = arith.truncf %40 : vector<128x256xf32> to vector<128x256xbf16>
    %c0_27 = arith.constant 0 : index
    %c0_28 = arith.constant 0 : index
    %42 = vector.load %arg11[%c0_27, %c0_28] : memref<256x128xbf16, #tpu.memory_space<vmem>>, vector<256x128xbf16>
    %cst_29 = arith.constant dense<0.000000e+00> : vector<128x128xf32>
    %43 = tpu.matmul %41, %42, %cst_29 {dimension_numbers = #tpu.dot_dimension_numbers<[1], [0], [0], [1], [0, 0, 1, 1], [], []>} : vector<128x256xbf16>, vector<256x128xbf16>, vector<128x128xf32> -> vector<128x128xf32>
    %c0_30 = arith.constant 0 : index
    %c0_31 = arith.constant 0 : index
    %44 = vector.load %arg12[%c0_30, %c0_31] : memref<1x128xf32, #tpu.memory_space<vmem>>, vector<1x128xf32>
    %45 = vector.broadcast %1 : vector<128x1xf32> to vector<128x128xf32>
    %46 = vector.broadcast %44 : vector<1x128xf32> to vector<128x128xf32>
    %47 = arith.mulf %45, %46 : vector<128x128xf32>
    %48 = arith.addf %43, %47 : vector<128x128xf32>
    %c0_32 = arith.constant 0 : index
    %c0_33 = arith.constant 0 : index
    %49 = vector.load %arg13[%c0_32, %c0_33] : memref<1x128xf32, #tpu.memory_space<vmem>>, vector<1x128xf32>
    %50 = vector.broadcast %49 : vector<1x128xf32> to vector<128x128xf32>
    %51 = arith.addf %48, %50 : vector<128x128xf32>
    %cst_34 = arith.constant 0.000000e+00 : f32
    %52 = vector.broadcast %cst_34 : f32 to vector<128x128xf32>
    %53 = arith.maximumf %51, %52 : vector<128x128xf32>
    %54 = arith.truncf %53 : vector<128x128xf32> to vector<128x128xbf16>
    %c0_35 = arith.constant 0 : index
    %c0_36 = arith.constant 0 : index
    %55 = vector.load %arg14[%c0_35, %c0_36] : memref<128x128xbf16, #tpu.memory_space<vmem>>, vector<128x128xbf16>
    %cst_37 = arith.constant dense<0.000000e+00> : vector<128x128xf32>
    %56 = tpu.matmul %54, %55, %cst_37 {dimension_numbers = #tpu.dot_dimension_numbers<[1], [0], [0], [1], [0, 0, 1, 1], [], []>} : vector<128x128xbf16>, vector<128x128xbf16>, vector<128x128xf32> -> vector<128x128xf32>
    %c0_38 = arith.constant 0 : index
    %c0_39 = arith.constant 0 : index
    %57 = vector.load %arg15[%c0_38, %c0_39] : memref<1x128xf32, #tpu.memory_space<vmem>>, vector<1x128xf32>
    %58 = vector.broadcast %57 : vector<1x128xf32> to vector<128x128xf32>
    %59 = arith.addf %56, %58 : vector<128x128xf32>
    %60 = arith.negf %59 : vector<128x128xf32>
    %61 = math.exp %60 : vector<128x128xf32>
    %cst_40 = arith.constant 1.000000e+00 : f32
    %62 = vector.broadcast %cst_40 : f32 to vector<128x128xf32>
    %63 = arith.addf %62, %61 : vector<128x128xf32>
    %64 = arith.divf %62, %63 : vector<128x128xf32>
    %65 = arith.truncf %64 : vector<128x128xf32> to vector<128x128xbf16>
    %c0_41 = arith.constant 0 : index
    %c0_42 = arith.constant 0 : index
    %66 = vector.load %arg16[%c0_41, %c0_42] : memref<128x128xbf16, #tpu.memory_space<vmem>>, vector<128x128xbf16>
    tpu.vector_store %arg16[%c0_41, %c0_42], %65 {strides = array<i32>} : memref<128x128xbf16, #tpu.memory_space<vmem>>, vector<128x128xbf16>,
    return
  }
  func.func @transform_0(%arg0: i32) -> (i32, i32) {
    %c0_i32 = arith.constant 0 : i32
    %c0_i32_0 = arith.constant 0 : i32
    return %arg0, %c0_i32 : i32, i32
  }
  func.func @transform_1(%arg0: i32) -> (i32, i32) {
    %c0_i32 = arith.constant 0 : i32
    %c0_i32_0 = arith.constant 0 : i32
    %c0_i32_1 = arith.constant 0 : i32
    return %c0_i32, %c0_i32_0 : i32, i32
  }
  func.func @transform_2(%arg0: i32) -> (i32, i32) {
    %c0_i32 = arith.constant 0 : i32
    %c0_i32_0 = arith.constant 0 : i32
    %c0_i32_1 = arith.constant 0 : i32
    return %c0_i32, %c0_i32_0 : i32, i32
  }
  func.func @transform_3(%arg0: i32) -> (i32, i32) {
    %c0_i32 = arith.constant 0 : i32
    %c0_i32_0 = arith.constant 0 : i32
    %c0_i32_1 = arith.constant 0 : i32
    return %c0_i32, %c0_i32_0 : i32, i32
  }
  func.func @transform_4(%arg0: i32) -> (i32, i32) {
    %c0_i32 = arith.constant 0 : i32
    %c0_i32_0 = arith.constant 0 : i32
    %c0_i32_1 = arith.constant 0 : i32
    return %c0_i32, %c0_i32_0 : i32, i32
  }
  func.func @transform_5(%arg0: i32) -> (i32, i32) {
    %c0_i32 = arith.constant 0 : i32
    %c0_i32_0 = arith.constant 0 : i32
    %c0_i32_1 = arith.constant 0 : i32
    return %c0_i32, %c0_i32_0 : i32, i32
  }
  func.func @transform_6(%arg0: i32) -> (i32, i32) {
    %c0_i32 = arith.constant 0 : i32
    %c0_i32_0 = arith.constant 0 : i32
    %c0_i32_1 = arith.constant 0 : i32
    return %c0_i32, %c0_i32_0 : i32, i32
  }
  func.func @transform_7(%arg0: i32) -> (i32, i32) {
    %c0_i32 = arith.constant 0 : i32
    %c0_i32_0 = arith.constant 0 : i32
    %c0_i32_1 = arith.constant 0 : i32
    return %c0_i32, %c0_i32_0 : i32, i32
  }
  func.func @transform_8(%arg0: i32) -> (i32, i32) {
    %c0_i32 = arith.constant 0 : i32
    %c0_i32_0 = arith.constant 0 : i32
    %c0_i32_1 = arith.constant 0 : i32
    return %c0_i32, %c0_i32_0 : i32, i32
  }
  func.func @transform_9(%arg0: i32) -> (i32, i32) {
    %c0_i32 = arith.constant 0 : i32
    %c0_i32_0 = arith.constant 0 : i32
    %c0_i32_1 = arith.constant 0 : i32
    return %c0_i32, %c0_i32_0 : i32, i32
  }
  func.func @transform_10(%arg0: i32) -> (i32, i32) {
    %c0_i32 = arith.constant 0 : i32
    %c0_i32_0 = arith.constant 0 : i32
    %c0_i32_1 = arith.constant 0 : i32
    return %c0_i32, %c0_i32_0 : i32, i32
  }
  func.func @transform_11(%arg0: i32) -> (i32, i32) {
    %c0_i32 = arith.constant 0 : i32
    %c0_i32_0 = arith.constant 0 : i32
    %c0_i32_1 = arith.constant 0 : i32
    return %c0_i32, %c0_i32_0 : i32, i32
  }
  func.func @transform_12(%arg0: i32) -> (i32, i32) {
    %c0_i32 = arith.constant 0 : i32
    %c0_i32_0 = arith.constant 0 : i32
    %c0_i32_1 = arith.constant 0 : i32
    return %c0_i32, %c0_i32_0 : i32, i32
  }
  func.func @transform_13(%arg0: i32) -> (i32, i32) {
    %c0_i32 = arith.constant 0 : i32
    %c0_i32_0 = arith.constant 0 : i32
    %c0_i32_1 = arith.constant 0 : i32
    return %c0_i32, %c0_i32_0 : i32, i32
  }
  func.func @transform_14(%arg0: i32) -> (i32, i32) {
    %c0_i32 = arith.constant 0 : i32
    %c0_i32_0 = arith.constant 0 : i32
    %c0_i32_1 = arith.constant 0 : i32
    return %c0_i32, %c0_i32_0 : i32, i32
  }
  func.func @transform_15(%arg0: i32) -> (i32, i32) {
    %c0_i32 = arith.constant 0 : i32
    %c0_i32_0 = arith.constant 0 : i32
    return %arg0, %c0_i32 : i32, i32
  }
}

</mosaic_0001>

<llo_original>
// kernel: general_mlp_forward.1
$region0: #{general_mlp_forward.1}
  #allocation0 [shape = 'u32[]', space=smem, size = 0x4, offset = 0x4, fixed_abs, tag = 'smem constant byte address 0x4 - core index']
  #allocation1 [shape = 'u32[144,128]{1,0:T(1,128)}', space=vmem, size = 0x12000, scoped, tag = 'internal scratch']
  %s0 = inlined_call_operand.vmem [shape: f32[256,12], index: 0, kind: input, shape index: {}]
  %s1 = inlined_call_operand.vmem [shape: bf16[12,66], index: 1, kind: input, shape index: {}]
  %s2 = inlined_call_operand.vmem [shape: bf16[12,128], index: 2, kind: input, shape index: {}]
  %s3 = inlined_call_operand.vmem [shape: bf16[66,128], index: 3, kind: input, shape index: {}]
  %s4 = inlined_call_operand.vmem [shape: bf16[66,128], index: 4, kind: input, shape index: {}]
  %s5 = inlined_call_operand.vmem [shape: f32[1,128], index: 5, kind: input, shape index: {}]
  %s6 = inlined_call_operand.vmem [shape: bf16[128,128], index: 6, kind: input, shape index: {}]
  %s7 = inlined_call_operand.vmem [shape: f32[1,128], index: 7, kind: input, shape index: {}]
  %s8 = inlined_call_operand.vmem [shape: bf16[128,256], index: 8, kind: input, shape index: {}]
  %s9 = inlined_call_operand.vmem [shape: f32[1,256], index: 9, kind: input, shape index: {}]
  %s10 = inlined_call_operand.vmem [shape: bf16[256,128], index: 10, kind: input, shape index: {}]
  %s11 = inlined_call_operand.vmem [shape: f32[1,128], index: 11, kind: input, shape index: {}]
  %s12 = inlined_call_operand.vmem [shape: f32[1,128], index: 12, kind: input, shape index: {}]
  %s13 = inlined_call_operand.vmem [shape: bf16[128,128], index: 13, kind: input, shape index: {}]
  %s14 = inlined_call_operand.vmem [shape: f32[1,128], index: 14, kind: input, shape index: {}]
  %s15 = inlined_call_operand.vmem [shape: bf16[256,128], index: 15, kind: output, shape index: {}]
  %s16 = sld [smem:[#allocation0]]
  $region93: #{general_mlp_forward.1} parent=0
    _
  %s18 = ssub.s32 1, %s16
  %s19 = scalar_select 0, %s18, %s16
  loop: start=0, step=1, limit=4
  $region2: #{general_mlp_forward.1} parent=0 // loop_pre_header
    _
  $region3: #{general_mlp_forward.1} parent=0 // loop_header
    %s21 = sphi 0, %s25
    %p22 = scmp.ge.s32.totalorder %s21, 4
    %s31 = sphi 0, %s33
    %s34 = sphi 0, %s31
    %s35 = sphi 0, %s34
    %s51 = sphi 0, %s35
    %s55 = sphi 0, %s55
    %s57 = sphi 0, %s55
    %s58 = sphi 0, %s57
    %s72 = sphi 0, %s58
    %s76 = sphi 0, %s76
    %s78 = sphi 0, %s76
    %s79 = sphi 0, %s78
    %s93 = sphi 0, %s79
    %s97 = sphi 0, %s97
    %s99 = sphi 0, %s97
    %s100 = sphi 0, %s99
    %s114 = sphi 0, %s100
    %s118 = sphi 0, %s118
    %s120 = sphi 0, %s118
    %s121 = sphi 0, %s120
    %s135 = sphi 0, %s121
    %s139 = sphi 0, %s139
    %s141 = sphi 0, %s139
    %s142 = sphi 0, %s141
    %s156 = sphi 0, %s142
    %s160 = sphi 0, %s160
    %s162 = sphi 0, %s160
    %s163 = sphi 0, %s162
    %s177 = sphi 0, %s163
    %s181 = sphi 0, %s181
    %s183 = sphi 0, %s181
    %s184 = sphi 0, %s183
    %s198 = sphi 0, %s184
    %s202 = sphi 0, %s202
    %s204 = sphi 0, %s202
    %s205 = sphi 0, %s204
    %s219 = sphi 0, %s205
    %s223 = sphi 0, %s223
    %s225 = sphi 0, %s223
    %s226 = sphi 0, %s225
    %s240 = sphi 0, %s226
    %s244 = sphi 0, %s244
    %s246 = sphi 0, %s244
    %s247 = sphi 0, %s246
    %s261 = sphi 0, %s247
    %s265 = sphi 0, %s265
    %s267 = sphi 0, %s265
    %s268 = sphi 0, %s267
    %s282 = sphi 0, %s268
    %s286 = sphi 0, %s286
    %s288 = sphi 0, %s286
    %s289 = sphi 0, %s288
    %s303 = sphi 0, %s289
    %s307 = sphi 0, %s307
    %s309 = sphi 0, %s307
    %s310 = sphi 0, %s309
    %s324 = sphi 0, %s310
    %s328 = sphi 0, %s328
    %s330 = sphi 0, %s328
    %s331 = sphi 0, %s330
    %s345 = sphi 0, %s331
    %s351 = sphi 0, %s353
    %s354 = sphi 0, %s351
    %s355 = sphi 0, %s354
    %s371 = sphi 0, %s355
  $region4: #{general_mlp_forward.1} parent=0 // loop_header_branch
    %24 = sbr.rel (%p22) target = $region8
  $region5: #{general_mlp_forward.1} parent=0 // loop_body
    %s26 = ssub.s32 %s21, 1
    %s27 = ssub.s32 %s21, 2
    %s28 = sadd.s32 %s21, 1
    %s29 = ssub.s32 %s21, %s28
    %p30 = scmp.eq.s32.totalorder %s29, 0
    %s32 = sadd.s32 %s31, 1
    %s33 = scalar_select %p30, %s31, %s32
    %p36 = pneg %p30
    %p37 = scmp.eq.s32.totalorder %s21, 1
    %p38 = por %p36, %p37
    %p39 = scmp.ne.s32.totalorder %s31, %s34
    %p40 = scmp.eq.s32.totalorder %s21, 0
    %p41 = por %p39, %p40
    %p42 = scmp.ne.s32.totalorder %s31, %s34
    %p43 = scmp.eq.s32.totalorder %s26, 1
    %p44 = por %p42, %p43
    %p45 = scmp.ne.s32.totalorder %s34, %s35
    %p46 = scmp.eq.s32.totalorder %s26, 0
    %p47 = por %p45, %p46
    %p48 = scmp.ne.s32.totalorder %s34, %s35
    %p49 = scmp.eq.s32.totalorder %s27, 1
    %p50 = por %p48, %p49
    %p52 = scmp.ne.s32.totalorder %s35, %s51
    %p53 = scmp.eq.s32.totalorder %s27, 0
    %p54 = por %p52, %p53
    %s56 = sadd.s32 %s55, 1
    %p59 = scmp.eq.s32.totalorder %s21, 1
    %p60 = scmp.ne.s32.totalorder %s55, %s57
    %p61 = scmp.eq.s32.totalorder %s21, 0
    %p62 = por %p60, %p61
    %p63 = scmp.ne.s32.totalorder %s55, %s57
    %p64 = scmp.eq.s32.totalorder %s26, 1
    %p65 = por %p63, %p64
    %p66 = scmp.ne.s32.totalorder %s57, %s58
    %p67 = scmp.eq.s32.totalorder %s26, 0
    %p68 = por %p66, %p67
    %p69 = scmp.ne.s32.totalorder %s57, %s58
    %p70 = scmp.eq.s32.totalorder %s27, 1
    %p71 = por %p69, %p70
    %p73 = scmp.ne.s32.totalorder %s58, %s72
    %p74 = scmp.eq.s32.totalorder %s27, 0
    %p75 = por %p73, %p74
    %s77 = sadd.s32 %s76, 1
    %p80 = scmp.eq.s32.totalorder %s21, 1
    %p81 = scmp.ne.s32.totalorder %s76, %s78
    %p82 = scmp.eq.s32.totalorder %s21, 0
    %p83 = por %p81, %p82
    %p84 = scmp.ne.s32.totalorder %s76, %s78
    %p85 = scmp.eq.s32.totalorder %s26, 1
    %p86 = por %p84, %p85
    %p87 = scmp.ne.s32.totalorder %s78, %s79
    %p88 = scmp.eq.s32.totalorder %s26, 0
    %p89 = por %p87, %p88
    %p90 = scmp.ne.s32.totalorder %s78, %s79
    %p91 = scmp.eq.s32.totalorder %s27, 1
    %p92 = por %p90, %p91
    %p94 = scmp.ne.s32.totalorder %s79, %s93
    %p95 = scmp.eq.s32.totalorder %s27, 0
    %p96 = por %p94, %p95
    %s98 = sadd.s32 %s97, 1
    %p101 = scmp.eq.s32.totalorder %s21, 1
    %p102 = scmp.ne.s32.totalorder %s97, %s99
    %p103 = scmp.eq.s32.totalorder %s21, 0
    %p104 = por %p102, %p103
    %p105 = scmp.ne.s32.totalorder %s97, %s99
    %p106 = scmp.eq.s32.totalorder %s26, 1
    %p107 = por %p105, %p106
    %p108 = scmp.ne.s32.totalorder %s99, %s100
    %p109 = scmp.eq.s32.totalorder %s26, 0
    %p110 = por %p108, %p109
    %p111 = scmp.ne.s32.totalorder %s99, %s100
    %p112 = scmp.eq.s32.totalorder %s27, 1
    %p113 = por %p111, %p112
    %p115 = scmp.ne.s32.totalorder %s100, %s114
    %p116 = scmp.eq.s32.totalorder %s27, 0
    %p117 = por %p115, %p116
    %s119 = sadd.s32 %s118, 1
    %p122 = scmp.eq.s32.totalorder %s21, 1
    %p123 = scmp.ne.s32.totalorder %s118, %s120
    %p124 = scmp.eq.s32.totalorder %s21, 0
    %p125 = por %p123, %p124
    %p126 = scmp.ne.s32.totalorder %s118, %s120
    %p127 = scmp.eq.s32.totalorder %s26, 1
    %p128 = por %p126, %p127
    %p129 = scmp.ne.s32.totalorder %s120, %s121
    %p130 = scmp.eq.s32.totalorder %s26, 0
    %p131 = por %p129, %p130
    %p132 = scmp.ne.s32.totalorder %s120, %s121
    %p133 = scmp.eq.s32.totalorder %s27, 1
    %p134 = por %p132, %p133
    %p136 = scmp.ne.s32.totalorder %s121, %s135
    %p137 = scmp.eq.s32.totalorder %s27, 0
    %p138 = por %p136, %p137
    %s140 = sadd.s32 %s139, 1
    %p143 = scmp.eq.s32.totalorder %s21, 1
    %p144 = scmp.ne.s32.totalorder %s139, %s141
    %p145 = scmp.eq.s32.totalorder %s21, 0
    %p146 = por %p144, %p145
    %p147 = scmp.ne.s32.totalorder %s139, %s141
    %p148 = scmp.eq.s32.totalorder %s26, 1
    %p149 = por %p147, %p148
    %p150 = scmp.ne.s32.totalorder %s141, %s142
    %p151 = scmp.eq.s32.totalorder %s26, 0
    %p152 = por %p150, %p151
    %p153 = scmp.ne.s32.totalorder %s141, %s142
    %p154 = scmp.eq.s32.totalorder %s27, 1
    %p155 = por %p153, %p154
    %p157 = scmp.ne.s32.totalorder %s142, %s156
    %p158 = scmp.eq.s32.totalorder %s27, 0
    %p159 = por %p157, %p158
    %s161 = sadd.s32 %s160, 1
    %p164 = scmp.eq.s32.totalorder %s21, 1
    %p165 = scmp.ne.s32.totalorder %s160, %s162
    %p166 = scmp.eq.s32.totalorder %s21, 0
    %p167 = por %p165, %p166
    %p168 = scmp.ne.s32.totalorder %s160, %s162
    %p169 = scmp.eq.s32.totalorder %s26, 1
    %p170 = por %p168, %p169
    %p171 = scmp.ne.s32.totalorder %s162, %s163
    %p172 = scmp.eq.s32.totalorder %s26, 0
    %p173 = por %p171, %p172
    %p174 = scmp.ne.s32.totalorder %s162, %s163
    %p175 = scmp.eq.s32.totalorder %s27, 1
    %p176 = por %p174, %p175
    %p178 = scmp.ne.s32.totalorder %s163, %s177
    %p179 = scmp.eq.s32.totalorder %s27, 0
    %p180 = por %p178, %p179
    %s182 = sadd.s32 %s181, 1
    %p185 = scmp.eq.s32.totalorder %s21, 1
    %p186 = scmp.ne.s32.totalorder %s181, %s183
    %p187 = scmp.eq.s32.totalorder %s21, 0
    %p188 = por %p186, %p187
    %p189 = scmp.ne.s32.totalorder %s181, %s183
    %p190 = scmp.eq.s32.totalorder %s26, 1
    %p191 = por %p189, %p190
    %p192 = scmp.ne.s32.totalorder %s183, %s184
    %p193 = scmp.eq.s32.totalorder %s26, 0
    %p194 = por %p192, %p193
    %p195 = scmp.ne.s32.totalorder %s183, %s184
    %p196 = scmp.eq.s32.totalorder %s27, 1
    %p197 = por %p195, %p196
    %p199 = scmp.ne.s32.totalorder %s184, %s198
    %p200 = scmp.eq.s32.totalorder %s27, 0
    %p201 = por %p199, %p200
    %s203 = sadd.s32 %s202, 1
    %p206 = scmp.eq.s32.totalorder %s21, 1
    %p207 = scmp.ne.s32.totalorder %s202, %s204
    %p208 = scmp.eq.s32.totalorder %s21, 0
    %p209 = por %p207, %p208
    %p210 = scmp.ne.s32.totalorder %s202, %s204
    %p211 = scmp.eq.s32.totalorder %s26, 1
    %p212 = por %p210, %p211
    %p213 = scmp.ne.s32.totalorder %s204, %s205
    %p214 = scmp.eq.s32.totalorder %s26, 0
    %p215 = por %p213, %p214
    %p216 = scmp.ne.s32.totalorder %s204, %s205
    %p217 = scmp.eq.s32.totalorder %s27, 1
    %p218 = por %p216, %p217
    %p220 = scmp.ne.s32.totalorder %s205, %s219
    %p221 = scmp.eq.s32.totalorder %s27, 0
    %p222 = por %p220, %p221
    %s224 = sadd.s32 %s223, 1
    %p227 = scmp.eq.s32.totalorder %s21, 1
    %p228 = scmp.ne.s32.totalorder %s223, %s225
    %p229 = scmp.eq.s32.totalorder %s21, 0
    %p230 = por %p228, %p229
    %p231 = scmp.ne.s32.totalorder %s223, %s225
    %p232 = scmp.eq.s32.totalorder %s26, 1
    %p233 = por %p231, %p232
    %p234 = scmp.ne.s32.totalorder %s225, %s226
    %p235 = scmp.eq.s32.totalorder %s26, 0
    %p236 = por %p234, %p235
    %p237 = scmp.ne.s32.totalorder %s225, %s226
    %p238 = scmp.eq.s32.totalorder %s27, 1
    %p239 = por %p237, %p238
    %p241 = scmp.ne.s32.totalorder %s226, %s240
    %p242 = scmp.eq.s32.totalorder %s27, 0
    %p243 = por %p241, %p242
    %s245 = sadd.s32 %s244, 1
    %p248 = scmp.eq.s32.totalorder %s21, 1
    %p249 = scmp.ne.s32.totalorder %s244, %s246
    %p250 = scmp.eq.s32.totalorder %s21, 0
    %p251 = por %p249, %p250
    %p252 = scmp.ne.s32.totalorder %s244, %s246
    %p253 = scmp.eq.s32.totalorder %s26, 1
    %p254 = por %p252, %p253
    %p255 = scmp.ne.s32.totalorder %s246, %s247
    %p256 = scmp.eq.s32.totalorder %s26, 0
    %p257 = por %p255, %p256
    %p258 = scmp.ne.s32.totalorder %s246, %s247
    %p259 = scmp.eq.s32.totalorder %s27, 1
    %p260 = por %p258, %p259
    %p262 = scmp.ne.s32.totalorder %s247, %s261
    %p263 = scmp.eq.s32.totalorder %s27, 0
    %p264 = por %p262, %p263
    %s266 = sadd.s32 %s265, 1
    %p269 = scmp.eq.s32.totalorder %s21, 1
    %p270 = scmp.ne.s32.totalorder %s265, %s267
    %p271 = scmp.eq.s32.totalorder %s21, 0
    %p272 = por %p270, %p271
    %p273 = scmp.ne.s32.totalorder %s265, %s267
    %p274 = scmp.eq.s32.totalorder %s26, 1
    %p275 = por %p273, %p274
    %p276 = scmp.ne.s32.totalorder %s267, %s268
    %p277 = scmp.eq.s32.totalorder %s26, 0
    %p278 = por %p276, %p277
    %p279 = scmp.ne.s32.totalorder %s267, %s268
    %p280 = scmp.eq.s32.totalorder %s27, 1
    %p281 = por %p279, %p280
    %p283 = scmp.ne.s32.totalorder %s268, %s282
    %p284 = scmp.eq.s32.totalorder %s27, 0
    %p285 = por %p283, %p284
    %s287 = sadd.s32 %s286, 1
    %p290 = scmp.eq.s32.totalorder %s21, 1
    %p291 = scmp.ne.s32.totalorder %s286, %s288
    %p292 = scmp.eq.s32.totalorder %s21, 0
    %p293 = por %p291, %p292
    %p294 = scmp.ne.s32.totalorder %s286, %s288
    %p295 = scmp.eq.s32.totalorder %s26, 1
    %p296 = por %p294, %p295
    %p297 = scmp.ne.s32.totalorder %s288, %s289
    %p298 = scmp.eq.s32.totalorder %s26, 0
    %p299 = por %p297, %p298
    %p300 = scmp.ne.s32.totalorder %s288, %s289
    %p301 = scmp.eq.s32.totalorder %s27, 1
    %p302 = por %p300, %p301
    %p304 = scmp.ne.s32.totalorder %s289, %s303
    %p305 = scmp.eq.s32.totalorder %s27, 0
    %p306 = por %p304, %p305
    %s308 = sadd.s32 %s307, 1
    %p311 = scmp.eq.s32.totalorder %s21, 1
    %p312 = scmp.ne.s32.totalorder %s307, %s309
    %p313 = scmp.eq.s32.totalorder %s21, 0
    %p314 = por %p312, %p313
    %p315 = scmp.ne.s32.totalorder %s307, %s309
    %p316 = scmp.eq.s32.totalorder %s26, 1
    %p317 = por %p315, %p316
    %p318 = scmp.ne.s32.totalorder %s309, %s310
    %p319 = scmp.eq.s32.totalorder %s26, 0
    %p320 = por %p318, %p319
    %p321 = scmp.ne.s32.totalorder %s309, %s310
    %p322 = scmp.eq.s32.totalorder %s27, 1
    %p323 = por %p321, %p322
    %p325 = scmp.ne.s32.totalorder %s310, %s324
    %p326 = scmp.eq.s32.totalorder %s27, 0
    %p327 = por %p325, %p326
    %s329 = sadd.s32 %s328, 1
    %p332 = scmp.eq.s32.totalorder %s21, 1
    %p333 = scmp.ne.s32.totalorder %s328, %s330
    %p334 = scmp.eq.s32.totalorder %s21, 0
    %p335 = por %p333, %p334
    %p336 = scmp.ne.s32.totalorder %s328, %s330
    %p337 = scmp.eq.s32.totalorder %s26, 1
    %p338 = por %p336, %p337
    %p339 = scmp.ne.s32.totalorder %s330, %s331
    %p340 = scmp.eq.s32.totalorder %s26, 0
    %p341 = por %p339, %p340
    %p342 = scmp.ne.s32.totalorder %s330, %s331
    %p343 = scmp.eq.s32.totalorder %s27, 1
    %p344 = por %p342, %p343
    %p346 = scmp.ne.s32.totalorder %s331, %s345
    %p347 = scmp.eq.s32.totalorder %s27, 0
    %p348 = por %p346, %p347
    %s349 = ssub.s32 %s21, %s28
    %p350 = scmp.eq.s32.totalorder %s349, 0
    %s352 = sadd.s32 %s351, 1
    %s353 = scalar_select %p350, %s351, %s352
    %p356 = pneg %p350
    %p357 = scmp.eq.s32.totalorder %s21, 1
    %p358 = por %p356, %p357
    %p359 = scmp.ne.s32.totalorder %s351, %s354
    %p360 = scmp.eq.s32.totalorder %s21, 0
    %p361 = por %p359, %p360
    %p362 = scmp.ne.s32.totalorder %s351, %s354
    %p363 = scmp.eq.s32.totalorder %s26, 1
    %p364 = por %p362, %p363
    %p365 = scmp.ne.s32.totalorder %s354, %s355
    %p366 = scmp.eq.s32.totalorder %s26, 0
    %p367 = por %p365, %p366
    %p368 = scmp.ne.s32.totalorder %s354, %s355
    %p369 = scmp.eq.s32.totalorder %s27, 1
    %p370 = por %p368, %p369
    %p372 = scmp.ne.s32.totalorder %s355, %s371
    %p373 = scmp.eq.s32.totalorder %s27, 0
    %p374 = por %p372, %p373
    %p375 = scmp.le.s32.totalorder 1, %s21
    %p376 = scmp.lt.s32.totalorder %s21, 3
    %p377 = pnand %p375, %p376
    %p378 = pneg %p377
    // Predicated region
    $region9: #{general_mlp_forward.1} parent=5 // pred_check
      _
    $region10: #{general_mlp_forward.1} parent=5 // pred_check_branch
      %380 = sbr.rel (%p377) target = $region12
    $region11: #{general_mlp_forward.1} parent=5 // pred_region
      %s381 = ssub.s32 %s21, 1
      // Predicated region
      $region13: #{general_mlp_forward.1} parent=11 // pred_check
        %p382 = pneg %p68
      $region14: #{general_mlp_forward.1} parent=11 // pred_check_branch
        %384 = sbr.rel (%p382) target = $region16
      $region15: #{general_mlp_forward.1} parent=11 // pred_region
        _
      $region16: #{general_mlp_forward.1} parent=11 // pred_fallthru
        _
      // Predicated region
      $region17: #{general_mlp_forward.1} parent=11 // pred_check
        %p385 = pneg %p89
      $region18: #{general_mlp_forward.1} parent=11 // pred_check_branch
        %387 = sbr.rel (%p385) target = $region20
      $region19: #{general_mlp_forward.1} parent=11 // pred_region
        _
      $region20: #{general_mlp_forward.1} parent=11 // pred_fallthru
        _
      // Predicated region
      $region21: #{general_mlp_forward.1} parent=11 // pred_check
        %p388 = pneg %p110
      $region22: #{general_mlp_forward.1} parent=11 // pred_check_branch
        %390 = sbr.rel (%p388) target = $region24
      $region23: #{general_mlp_forward.1} parent=11 // pred_region
        _
      $region24: #{general_mlp_forward.1} parent=11 // pred_fallthru
        _
      // Predicated region
      $region25: #{general_mlp_forward.1} parent=11 // pred_check
        %p391 = pneg %p131
      $region26: #{general_mlp_forward.1} parent=11 // pred_check_branch
        %393 = sbr.rel (%p391) target = $region28
      $region27: #{general_mlp_forward.1} parent=11 // pred_region
        _
      $region28: #{general_mlp_forward.1} parent=11 // pred_fallthru
        _
      // Predicated region
      $region29: #{general_mlp_forward.1} parent=11 // pred_check
        %p394 = pneg %p152
      $region30: #{general_mlp_forward.1} parent=11 // pred_check_branch
        %396 = sbr.rel (%p394) target = $region32
      $region31: #{general_mlp_forward.1} parent=11 // pred_region
        _
      $region32: #{general_mlp_forward.1} parent=11 // pred_fallthru
        _
      // Predicated region
      $region33: #{general_mlp_forward.1} parent=11 // pred_check
        %p397 = pneg %p173
      $region34: #{general_mlp_forward.1} parent=11 // pred_check_branch
        %399 = sbr.rel (%p397) target = $region36
      $region35: #{general_mlp_forward.1} parent=11 // pred_region
        _
      $region36: #{general_mlp_forward.1} parent=11 // pred_fallthru
        _
      // Predicated region
      $region37: #{general_mlp_forward.1} parent=11 // pred_check
        %p400 = pneg %p194
      $region38: #{general_mlp_forward.1} parent=11 // pred_check_branch
        %402 = sbr.rel (%p400) target = $region40
      $region39: #{general_mlp_forward.1} parent=11 // pred_region
        _
      $region40: #{general_mlp_forward.1} parent=11 // pred_fallthru
        _
      // Predicated region
      $region41: #{general_mlp_forward.1} parent=11 // pred_check
        %p403 = pneg %p215
      $region42: #{general_mlp_forward.1} parent=11 // pred_check_branch
        %405 = sbr.rel (%p403) target = $region44
      $region43: #{general_mlp_forward.1} parent=11 // pred_region
        _
      $region44: #{general_mlp_forward.1} parent=11 // pred_fallthru
        _
      // Predicated region
      $region45: #{general_mlp_forward.1} parent=11 // pred_check
        %p406 = pneg %p236
      $region46: #{general_mlp_forward.1} parent=11 // pred_check_branch
        %408 = sbr.rel (%p406) target = $region48
      $region47: #{general_mlp_forward.1} parent=11 // pred_region
        _
      $region48: #{general_mlp_forward.1} parent=11 // pred_fallthru
        _
      // Predicated region
      $region49: #{general_mlp_forward.1} parent=11 // pred_check
        %p409 = pneg %p257
      $region50: #{general_mlp_forward.1} parent=11 // pred_check_branch
        %411 = sbr.rel (%p409) target = $region52
      $region51: #{general_mlp_forward.1} parent=11 // pred_region
        _
      $region52: #{general_mlp_forward.1} parent=11 // pred_fallthru
        _
      // Predicated region
      $region53: #{general_mlp_forward.1} parent=11 // pred_check
        %p412 = pneg %p278
      $region54: #{general_mlp_forward.1} parent=11 // pred_check_branch
        %414 = sbr.rel (%p412) target = $region56
      $region55: #{general_mlp_forward.1} parent=11 // pred_region
        _
      $region56: #{general_mlp_forward.1} parent=11 // pred_fallthru
        _
      // Predicated region
      $region57: #{general_mlp_forward.1} parent=11 // pred_check
        %p415 = pneg %p299
      $region58: #{general_mlp_forward.1} parent=11 // pred_check_branch
        %417 = sbr.rel (%p415) target = $region60
      $region59: #{general_mlp_forward.1} parent=11 // pred_region
        _
      $region60: #{general_mlp_forward.1} parent=11 // pred_fallthru
        _
      // Predicated region
      $region61: #{general_mlp_forward.1} parent=11 // pred_check
        %p418 = pneg %p320
      $region62: #{general_mlp_forward.1} parent=11 // pred_check_branch
        %420 = sbr.rel (%p418) target = $region64
      $region63: #{general_mlp_forward.1} parent=11 // pred_region
        _
      $region64: #{general_mlp_forward.1} parent=11 // pred_fallthru
        _
      // Predicated region
      $region65: #{general_mlp_forward.1} parent=11 // pred_check
        %p421 = pneg %p341
      $region66: #{general_mlp_forward.1} parent=11 // pred_check_branch
        %423 = sbr.rel (%p421) target = $region68
      $region67: #{general_mlp_forward.1} parent=11 // pred_region
        _
      $region68: #{general_mlp_forward.1} parent=11 // pred_fallthru
        _
    $region12: #{general_mlp_forward.1} parent=5 // pred_fallthru
      _
    %p424 = scmp.lt.s32.totalorder %s21, 2
    // Predicated region
    $region69: #{general_mlp_forward.1} parent=5 // pred_check
      %p425 = pneg %p424
    $region70: #{general_mlp_forward.1} parent=5 // pred_check_branch
      %427 = sbr.rel (%p425) target = $region72
    $region71: #{general_mlp_forward.1} parent=5 // pred_region
      // Predicated region
      $region73: #{general_mlp_forward.1} parent=71 // pred_check
        %p428 = pneg %p41
      $region74: #{general_mlp_forward.1} parent=71 // pred_check_branch
        %430 = sbr.rel (%p428) target = $region76
      $region75: #{general_mlp_forward.1} parent=71 // pred_region
        %s431 = smul.u32 16, %s21
        %p432 = scmp.lt.s32.totalorder %s431, 31
        %s433 = scalar_select %p432, %s431, 31
        %s434 = smul.addr %s433, 8
        %s435 = scalar_lea.vmem %s0, %s434
        %s436 = smul.u32 16, %s21
      $region76: #{general_mlp_forward.1} parent=71 // pred_fallthru
        _
    $region72: #{general_mlp_forward.1} parent=5 // pred_fallthru
      _
    %p437 = scmp.le.s32.totalorder 1, %s21
    %p438 = scmp.lt.s32.totalorder %s21, 3
    %p439 = pnand %p437, %p438
    %p440 = pneg %p439
    // Predicated region
    $region77: #{general_mlp_forward.1} parent=5 // pred_check
      _
    $region78: #{general_mlp_forward.1} parent=5 // pred_check_branch
      %442 = sbr.rel (%p439) target = $region80
    $region79: #{general_mlp_forward.1} parent=5 // pred_region
      %s443 = ssub.s32 %s21, 1
      %s444 = smul.u32 16, %s26
      %p445 = scmp.lt.s32.totalorder %s444, 31
      %s446 = scalar_select %p445, %s444, 31
      %s447 = smul.addr %s446, 8
      %s448 = scalar_lea.vmem %s0, %s447
      %p449 = pneg %p47
      %p450 = pneg %p44
      %p451 = pneg %p68
      %p452 = pneg %p65
      %p453 = pneg %p89
      %p454 = pneg %p86
      %p455 = pneg %p110
      %p456 = pneg %p107
      %p457 = pneg %p131
      %p458 = pneg %p128
      %p459 = pneg %p152
      %p460 = pneg %p149
      %p461 = pneg %p173
      %p462 = pneg %p170
      %p463 = pneg %p194
      %p464 = pneg %p191
      %p465 = pneg %p215
      %p466 = pneg %p212
      %p467 = pneg %p236
      %p468 = pneg %p233
      %p469 = pneg %p257
      %p470 = pneg %p254
      %p471 = pneg %p278
      %p472 = pneg %p275
      %p473 = pneg %p299
      %p474 = pneg %p296
      %p475 = pneg %p320
      %p476 = pneg %p317
      %p477 = pneg %p341
      %p478 = pneg %p338
      %p479 = pneg %p367
      %p480 = pneg %p364
      %s481 = smul.u32 16, %s26
      %p482 = scmp.lt.s32.totalorder %s481, 31
      %s483 = scalar_select %p482, %s481, 31
      %s484 = smul.addr %s483, 4
      %s485 = scalar_lea.vmem %s15, %s484
      %s486 = smul.u32 16, %s26
      %p487 = scmp.lt.s32.totalorder %s486, 31
      %s488 = scalar_select %p487, %s486, 31
      %s489 = smul.addr %s488, 8
      %s490 = scalar_lea.vmem %s0, %s489
      %s491 = smul.u32 16, %s26
      %s492 = smul.u32 16, %s26
      %p493 = scmp.lt.s32.totalorder %s492, 31
      %s494 = scalar_select %p493, %s492, 31
      %s495 = smul.addr %s494, 4
      %s496 = scalar_lea.vmem %s15, %s495
      %s497 = smul.u32 16, %s26
      %v499 = vld [vmem:[%s490] sm:$0xff]
      %v500 = vld [vmem:[%s490 + $0x8] sm:$0xff]
      %v501 = vld [vmem:[%s490 + $0x10] sm:$0xff]
      %v502 = vld [vmem:[%s490 + $0x18] sm:$0xff]
      %v503 = vld [vmem:[%s490 + $0x20] sm:$0xff]
      %v504 = vld [vmem:[%s490 + $0x28] sm:$0xff]
      %v505 = vld [vmem:[%s490 + $0x30] sm:$0xff]
      %v506 = vld [vmem:[%s490 + $0x38] sm:$0xff]
      %v507 = vld [vmem:[%s490 + $0x40] sm:$0xff]
      %v508 = vld [vmem:[%s490 + $0x48] sm:$0xff]
      %v509 = vld [vmem:[%s490 + $0x50] sm:$0xff]
      %v510 = vld [vmem:[%s490 + $0x58] sm:$0xff]
      %v511 = vld [vmem:[%s490 + $0x60] sm:$0xff]
      %v512 = vld [vmem:[%s490 + $0x68] sm:$0xff]
      %v513 = vld [vmem:[%s490 + $0x70] sm:$0xff]
      %v514 = vld [vmem:[%s490 + $0x78] sm:$0xff]
      %v515 = vpack.c.bf16 %v500, %v499
      %v516 = vpack.c.bf16 %v502, %v501
      %v517 = vpack.c.bf16 %v504, %v503
      %v518 = vpack.c.bf16 %v506, %v505
      %v519 = vpack.c.bf16 %v508, %v507
      %v520 = vpack.c.bf16 %v510, %v509
      %v521 = vpack.c.bf16 %v512, %v511
      %v522 = vpack.c.bf16 %v514, %v513
      %v523 = vunpack.c.l.bf16 %v515
      %v524 = vunpack.c.h.bf16 %v515
      %v525 = vunpack.c.l.bf16 %v516
      %v526 = vunpack.c.h.bf16 %v516
      %v527 = vunpack.c.l.bf16 %v517
      %v528 = vunpack.c.h.bf16 %v517
      %v529 = vunpack.c.l.bf16 %v518
      %v530 = vunpack.c.h.bf16 %v518
      %v531 = vunpack.c.l.bf16 %v519
      %v532 = vunpack.c.h.bf16 %v519
      %v533 = vunpack.c.l.bf16 %v520
      %v534 = vunpack.c.h.bf16 %v520
      %v535 = vunpack.c.l.bf16 %v521
      %v536 = vunpack.c.h.bf16 %v521
      %v537 = vunpack.c.l.bf16 %v522
      %v538 = vunpack.c.h.bf16 %v522
      %v539 = vsub.f32 %v499, %v523
      %v540 = vsub.f32 %v500, %v524
      %v541 = vsub.f32 %v501, %v525
      %v542 = vsub.f32 %v502, %v526
      %v543 = vsub.f32 %v503, %v527
      %v544 = vsub.f32 %v504, %v528
      %v545 = vsub.f32 %v505, %v529
      %v546 = vsub.f32 %v506, %v530
      %v547 = vsub.f32 %v507, %v531
      %v548 = vsub.f32 %v508, %v532
      %v549 = vsub.f32 %v509, %v533
      %v550 = vsub.f32 %v510, %v534
      %v551 = vsub.f32 %v511, %v535
      %v552 = vsub.f32 %v512, %v536
      %v553 = vsub.f32 %v513, %v537
      %v554 = vsub.f32 %v514, %v538
      %v555 = vpack.c.bf16 %v540, %v539
      %v556 = vpack.c.bf16 %v542, %v541
      %v557 = vpack.c.bf16 %v544, %v543
      %v558 = vpack.c.bf16 %v546, %v545
      %v559 = vpack.c.bf16 %v548, %v547
      %v560 = vpack.c.bf16 %v550, %v549
      %v561 = vpack.c.bf16 %v552, %v551
      %v562 = vpack.c.bf16 %v554, %v553
      %v563 = vld [vmem:[%s1] sm:$0xf]
      %v564 = vld [vmem:[%s1 + $0x4] sm:$0x3]
      %v567 = vunpack.c.l.b16 %v563
      %v568 = vunpack.c.l.b16 %v564
      %v569 = vpack.c.b16 %v568, %v567
      %vm570 = vcmask 97280
      %v572 = vsel %vm570, %v555, 0
      %v575 = vsel %vm570, %v556, 0
      %v578 = vsel %vm570, %v557, 0
      %v581 = vsel %vm570, %v558, 0
      %v584 = vsel %vm570, %v559, 0
      %v587 = vsel %vm570, %v560, 0
      %v590 = vsel %vm570, %v561, 0
      %v593 = vsel %vm570, %v562, 0
      %vm595 = vcmask 1045504
      %v597 = vsel %vm595, %v569, 0
      %599 = vmatprep.subr.bf16.mxu0 0
      %600 = vmatpush1.bf16.msra.mxu0 %v597
      %601 = vmatprep.subr.bf16.mxu0 0
      %602 = vmatpush1.bf16.msra.mxu0 0
      %603 = vmatprep.subr.bf16.mxu0 0
      %604 = vmatpush1.bf16.msra.mxu0 0
      %605 = vmatprep.subr.bf16.mxu0 0
      %606 = vmatpush1.bf16.msra.mxu0 0
      %607 = vmatprep.subr.bf16.mxu0 0
      %608 = vmatpush1.bf16.msra.mxu0 0
      %609 = vmatprep.subr.bf16.mxu0 0
      %610 = vmatpush1.bf16.msra.mxu0 0
      %611 = vmatprep.subr.bf16.mxu0 0
      %612 = vmatpush1.bf16.msra.mxu0 0
      %613 = vmatprep.subr.bf16.mxu0 0
      %614 = vmatpush1.bf16.msra.mxu0 0
      %615 = vmatprep.subr.bf16.mxu0 0
      %616 = vmatpush1.bf16.msra.mxu0 0
      %617 = vmatprep.subr.bf16.mxu0 0
      %618 = vmatpush1.bf16.msra.mxu0 0
      %619 = vmatprep.subr.bf16.mxu0 0
      %620 = vmatpush1.bf16.msra.mxu0 0
      %621 = vmatprep.subr.bf16.mxu0 0
      %622 = vmatpush1.bf16.msra.mxu0 0
      %623 = vmatprep.subr.bf16.mxu0 0
      %624 = vmatpush1.bf16.msra.mxu0 0
      %625 = vmatprep.subr.bf16.mxu0 0
      %626 = vmatpush1.bf16.msra.mxu0 0
      %627 = vmatprep.subr.bf16.mxu0 0
      %628 = vmatpush1.bf16.msra.mxu0 0
      %629 = vmatprep.subr.bf16.mxu0 0
      %630 = vmatpush1.bf16.msra.mxu0 0
      %631 = vmatprep.mubr.bf16.mxu0 0
      %632 = vmatmul.mubr.bf16.gmra.mrb[0].mxu0 %v572
      %v633 = vpop.f32.mrb[0].mxu0
      %v634 = vadd.f32 0.0, %v633
      %v635 = vpop.f32.mrb[0].mxu0
      %v636 = vpop.f32.mrb[0].mxu0
      %v637 = vadd.f32 0.0, %v636
      %v638 = vpop.f32.mrb[0].mxu0
      %639 = vmatprep.mubr.bf16.mxu0 0
      %640 = vmatmul.mubr.bf16.gmra.mrb[0].mxu0 %v575
      %v641 = vpop.f32.mrb[0].mxu0
      %v642 = vadd.f32 0.0, %v641
      %v643 = vpop.f32.mrb[0].mxu0
      %v644 = vpop.f32.mrb[0].mxu0
      %v645 = vadd.f32 0.0, %v644
      %v646 = vpop.f32.mrb[0].mxu0
      %647 = vmatprep.mubr.bf16.mxu0 0
      %648 = vmatmul.mubr.bf16.gmra.mrb[0].mxu0 %v578
      %v649 = vpop.f32.mrb[0].mxu0
      %v650 = vadd.f32 0.0, %v649
      %v651 = vpop.f32.mrb[0].mxu0
      %v652 = vpop.f32.mrb[0].mxu0
      %v653 = vadd.f32 0.0, %v652
      %v654 = vpop.f32.mrb[0].mxu0
      %655 = vmatprep.mubr.bf16.mxu0 0
      %656 = vmatmul.mubr.bf16.gmra.mrb[0].mxu0 %v581
      %v657 = vpop.f32.mrb[0].mxu0
      %v658 = vadd.f32 0.0, %v657
      %v659 = vpop.f32.mrb[0].mxu0
      %v660 = vpop.f32.mrb[0].mxu0
      %v661 = vadd.f32 0.0, %v660
      %v662 = vpop.f32.mrb[0].mxu0
      %663 = vmatprep.mubr.bf16.mxu0 0
      %664 = vmatmul.mubr.bf16.gmra.mrb[0].mxu0 %v584
      %v665 = vpop.f32.mrb[0].mxu0
      %v666 = vadd.f32 0.0, %v665
      %v667 = vpop.f32.mrb[0].mxu0
      %v668 = vpop.f32.mrb[0].mxu0
      %v669 = vadd.f32 0.0, %v668
      %v670 = vpop.f32.mrb[0].mxu0
      %671 = vmatprep.mubr.bf16.mxu0 0
      %672 = vmatmul.mubr.bf16.gmra.mrb[0].mxu0 %v587
      %v673 = vpop.f32.mrb[0].mxu0
      %v674 = vadd.f32 0.0, %v673
      %v675 = vpop.f32.mrb[0].mxu0
      %v676 = vpop.f32.mrb[0].mxu0
      %v677 = vadd.f32 0.0, %v676
      %v678 = vpop.f32.mrb[0].mxu0
      %679 = vmatprep.mubr.bf16.mxu0 0
      %680 = vmatmul.mubr.bf16.gmra.mrb[0].mxu0 %v590
      %v681 = vpop.f32.mrb[0].mxu0
      %v682 = vadd.f32 0.0, %v681
      %v683 = vpop.f32.mrb[0].mxu0
      %v684 = vpop.f32.mrb[0].mxu0
      %v685 = vadd.f32 0.0, %v684
      %v686 = vpop.f32.mrb[0].mxu0
      %687 = vmatprep.mubr.bf16.mxu0 0
      %688 = vmatmul.mubr.bf16.gmra.mrb[0].mxu0 %v593
      %v689 = vpop.f32.mrb[0].mxu0
      %v690 = vadd.f32 0.0, %v689
      %v691 = vpop.f32.mrb[0].mxu0
      %v692 = vpop.f32.mrb[0].mxu0
      %v693 = vadd.f32 0.0, %v692
      %v694 = vpop.f32.mrb[0].mxu0
      %695 = vdwg.mxu0
      %v697 = vsel %vm570, %v515, 0
      %v700 = vsel %vm570, %v516, 0
      %v703 = vsel %vm570, %v517, 0
      %v706 = vsel %vm570, %v518, 0
      %v709 = vsel %vm570, %v519, 0
      %v712 = vsel %vm570, %v520, 0
      %v715 = vsel %vm570, %v521, 0
      %v718 = vsel %vm570, %v522, 0
      %720 = vmatprep.subr.bf16.mxu0 0
      %721 = vmatpush1.bf16.msra.mxu0 %v597
      %722 = vmatprep.subr.bf16.mxu0 0
      %723 = vmatpush1.bf16.msra.mxu0 0
      %724 = vmatprep.subr.bf16.mxu0 0
      %725 = vmatpush1.bf16.msra.mxu0 0
      %726 = vmatprep.subr.bf16.mxu0 0
      %727 = vmatpush1.bf16.msra.mxu0 0
      %728 = vmatprep.subr.bf16.mxu0 0
      %729 = vmatpush1.bf16.msra.mxu0 0
      %730 = vmatprep.subr.bf16.mxu0 0
      %731 = vmatpush1.bf16.msra.mxu0 0
      %732 = vmatprep.subr.bf16.mxu0 0
      %733 = vmatpush1.bf16.msra.mxu0 0
      %734 = vmatprep.subr.bf16.mxu0 0
      %735 = vmatpush1.bf16.msra.mxu0 0
      %736 = vmatprep.subr.bf16.mxu0 0
      %737 = vmatpush1.bf16.msra.mxu0 0
      %738 = vmatprep.subr.bf16.mxu0 0
      %739 = vmatpush1.bf16.msra.mxu0 0
      %740 = vmatprep.subr.bf16.mxu0 0
      %741 = vmatpush1.bf16.msra.mxu0 0
      %742 = vmatprep.subr.bf16.mxu0 0
      %743 = vmatpush1.bf16.msra.mxu0 0
      %744 = vmatprep.subr.bf16.mxu0 0
      %745 = vmatpush1.bf16.msra.mxu0 0
      %746 = vmatprep.subr.bf16.mxu0 0
      %747 = vmatpush1.bf16.msra.mxu0 0
      %748 = vmatprep.subr.bf16.mxu0 0
      %749 = vmatpush1.bf16.msra.mxu0 0
      %750 = vmatprep.subr.bf16.mxu0 0
      %751 = vmatpush1.bf16.msra.mxu0 0
      %752 = vmatprep.mubr.bf16.mxu0 0
      %753 = vmatmul.mubr.bf16.gmra.mrb[0].mxu0 %v697
      %v754 = vpop.f32.mrb[0].mxu0
      %v755 = vadd.f32 %v634, %v754
      %v756 = vpop.f32.mrb[0].mxu0
      %v757 = vpop.f32.mrb[0].mxu0
      %v758 = vadd.f32 %v637, %v757
      %v759 = vpop.f32.mrb[0].mxu0
      %760 = vmatprep.mubr.bf16.mxu0 0
      %761 = vmatmul.mubr.bf16.gmra.mrb[0].mxu0 %v700
      %v762 = vpop.f32.mrb[0].mxu0
      %v763 = vadd.f32 %v642, %v762
      %v764 = vpop.f32.mrb[0].mxu0
      %v765 = vpop.f32.mrb[0].mxu0
      %v766 = vadd.f32 %v645, %v765
      %v767 = vpop.f32.mrb[0].mxu0
      %768 = vmatprep.mubr.bf16.mxu0 0
      %769 = vmatmul.mubr.bf16.gmra.mrb[0].mxu0 %v703
      %v770 = vpop.f32.mrb[0].mxu0
      %v771 = vadd.f32 %v650, %v770
      %v772 = vpop.f32.mrb[0].mxu0
      %v773 = vpop.f32.mrb[0].mxu0
      %v774 = vadd.f32 %v653, %v773
      %v775 = vpop.f32.mrb[0].mxu0
      %776 = vmatprep.mubr.bf16.mxu0 0
      %777 = vmatmul.mubr.bf16.gmra.mrb[0].mxu0 %v706
      %v778 = vpop.f32.mrb[0].mxu0
      %v779 = vadd.f32 %v658, %v778
      %v780 = vpop.f32.mrb[0].mxu0
      %v781 = vpop.f32.mrb[0].mxu0
      %v782 = vadd.f32 %v661, %v781
      %v783 = vpop.f32.mrb[0].mxu0
      %784 = vmatprep.mubr.bf16.mxu0 0
      %785 = vmatmul.mubr.bf16.gmra.mrb[0].mxu0 %v709
      %v786 = vpop.f32.mrb[0].mxu0
      %v787 = vadd.f32 %v666, %v786
      %v788 = vpop.f32.mrb[0].mxu0
      %v789 = vpop.f32.mrb[0].mxu0
      %v790 = vadd.f32 %v669, %v789
      %v791 = vpop.f32.mrb[0].mxu0
      %792 = vmatprep.mubr.bf16.mxu0 0
      %793 = vmatmul.mubr.bf16.gmra.mrb[0].mxu0 %v712
      %v794 = vpop.f32.mrb[0].mxu0
      %v795 = vadd.f32 %v674, %v794
      %v796 = vpop.f32.mrb[0].mxu0
      %v797 = vpop.f32.mrb[0].mxu0
      %v798 = vadd.f32 %v677, %v797
      %v799 = vpop.f32.mrb[0].mxu0
      %800 = vmatprep.mubr.bf16.mxu0 0
      %801 = vmatmul.mubr.bf16.gmra.mrb[0].mxu0 %v715
      %v802 = vpop.f32.mrb[0].mxu0
      %v803 = vadd.f32 %v682, %v802
      %v804 = vpop.f32.mrb[0].mxu0
      %v805 = vpop.f32.mrb[0].mxu0
      %v806 = vadd.f32 %v685, %v805
      %v807 = vpop.f32.mrb[0].mxu0
      %808 = vmatprep.mubr.bf16.mxu0 0
      %809 = vmatmul.mubr.bf16.gmra.mrb[0].mxu0 %v718
      %v810 = vpop.f32.mrb[0].mxu0
      %v811 = vadd.f32 %v690, %v810
      %v812 = vpop.f32.mrb[0].mxu0
      %v813 = vpop.f32.mrb[0].mxu0
      %v814 = vadd.f32 %v693, %v813
      %v815 = vpop.f32.mrb[0].mxu0
      %816 = vdwg.mxu0
      %v817 = vand.u32 2147483647, %v755
      %vm818 = vcmp.le.f32.partialorder %v817, 0.7853982
      %vm819 = vcmp.lt.s32.totalorder %v755, 0
      %v820 = vand.u32 %v755, 2139095040
      %v821 = vshrl.u32 %v820, 23
      %v822 = vsub.s32 %v821, 127
      %v823 = vand.u32 2147483647, %v755
      %v824 = vand.u32 %v823, 8388607
      %v825 = vor.u32 %v824, 8388608
      %v826 = vsub.s32 0, %v825
      %v827 = vadd.s32 %v822, 1
      %vm828 = vcmp.gt.s32.totalorder %v827, 0
      %v829 = vsel %vm828, %v827, 0
      %v830 = vshrl.u32 %v829, 5
      %v831 = vand.u32 %v829, 31
      %v832 = vsub.s32 32, %v831
      %v833 = vshrl.u32 683565275, %v832
      %v834 = vshll.u32 683565275, %v831
      %v835 = vshrl.u32 2475754826, %v832
      %v836 = vor.u32 %v834, %v835
      %v837 = vshll.u32 2475754826, %v831
      %v838 = vshrl.u32 2131351028, %v832
      %v839 = vor.u32 %v837, %v838
      %v840 = vshll.u32 2131351028, %v831
      %v841 = vshrl.u32 2102212464, %v832
      %v842 = vor.u32 %v840, %v841
      %v843 = vshll.u32 2102212464, %v831
      %v844 = vshrl.u32 920167782, %v832
      %v845 = vor.u32 %v843, %v844
      %v846 = vshll.u32 920167782, %v831
      %v847 = vshrl.u32 1326507024, %v832
      %v848 = vor.u32 %v846, %v847
      %vm849 = vcmp.lt.s32.totalorder %v830, 1
      %vm850 = vcmp.lt.s32.totalorder %v830, 2
      %vm851 = vcmp.lt.s32.totalorder %v830, 3
      %vm852 = vcmp.lt.s32.totalorder %v830, 4
      %v853 = vsel %vm849, %v833, %v836
      %v854 = vsel %vm852, %v842, 2102212464
      %v855 = vsel %vm851, %v839, %v854
      %v856 = vsel %vm850, %v853, %v855
      %v857 = vsel %vm849, %v836, %v839
      %v858 = vsel %vm852, %v845, 920167782
      %v859 = vsel %vm851, %v842, %v858
      %v860 = vsel %vm850, %v857, %v859
      %v861 = vsel %vm849, %v839, %v842
      %v862 = vsel %vm852, %v848, 1326507024
      %v863 = vsel %vm851, %v845, %v862
      %v864 = vsel %vm850, %v861, %v863
      %v865 = vshll.u32 %v825, 8
      %v866 = vmul.u32.u64.compose %v865, %v864
      %v867 = vextract.low.u32 %v866
      %v868 = vextract.high.u32 %v866
      %v869 = vmul.u32.u64.compose %v865, %v860
      %v870 = vextract.low.u32 %v869
      %v871 = vextract.high.u32 %v869
      %v872 = vmul.u32 %v865, %v856
      %v873 = vadd.s32 %v868, %v870
      %vm874 = vc.u32 %v868, %v870
      %v875 = vadd.s32 %v871, 1
      %v876 = vsel %vm874, %v875, %v871
      %v877 = vadd.s32 %v872, %v876
      %v878 = vadd.s32 %v877, 536870912
      %v879 = vshrl.u32 %v878, 30
      %v880 = vshll.u32 %v879, 30
      %v881 = vsub.s32 %v877, %v880
      %vm882 = vcmp.lt.s32.totalorder %v881, 0
      %v883 = vsub.s32 0, %v881
      %v884 = vsel %vm882, %v883, %v881
      %v885 = vclz %v884
      %v886 = vsub.s32 %v885, 2
      %vm887 = vcmp.gt.s32.totalorder 0, %v886
      %v888 = vsel %vm887, 0, %v886
      %v889 = vsub.s32 32, %v888
      %v890 = vshll.u32 %v881, %v888
      %v891 = vshrl.u32 %v873, %v889
      %v892 = vor.u32 %v890, %v891
      %v893 = vsub.s32 4294967266, %v888
      %v894 = vadd.s32 %v893, 127
      %v895 = vshll.u32 %v894, 23
      %v896 = vor.u32 4788187, %v895
      %v897 = vand.u32 2147483647, %v896
      %v899 = vcvt.s32.f32 %v892
      %v900 = vmul.f32 %v899, %v897
      %v901 = vxor.u32 %v900, 2147483648
      %v902 = vsel %vm819, %v901, %v900
      %v903 = vsub.s32 4, %v879
      %v904 = vsel %vm819, %v903, %v879
      %v905 = vsel %vm818, %v755, %v902
      %v906 = vsel %vm818, 0, %v904
      %v907 = vcosq.f32.pop %v905
      %v908 = vsinq.f32.pop %v905
      %vm909 = vweird.f32 %v755
      %v910 = vadd.s32 %v906, 3
      %v911 = vand.u32 %v910, 3
      %vm912 = vcmp.lt.s32.totalorder %v911, 2
      %vm913 = vcmp.eq.s32.totalorder %v911, 0
      %v914 = vxor.u32 %v908, 2147483648
      %v915 = vsel %vm913, %v907, %v914
      %vm916 = vcmp.eq.s32.totalorder %v911, 2
      %v917 = vxor.u32 %v907, 2147483648
      %v918 = vsel %vm916, %v917, %v908
      %v919 = vsel %vm912, %v915, %v918
      %v920 = vsel %vm909, nan, %v919
      %v921 = vand.u32 2147483647, %v758
      %vm922 = vcmp.le.f32.partialorder %v921, 0.7853982
      %vm923 = vcmp.lt.s32.totalorder %v758, 0
      %v924 = vand.u32 %v758, 2139095040
      %v925 = vshrl.u32 %v924, 23
      %v926 = vsub.s32 %v925, 127
      %v927 = vand.u32 2147483647, %v758
      %v928 = vand.u32 %v927, 8388607
      %v929 = vor.u32 %v928, 8388608
      %v930 = vsub.s32 0, %v929
      %v931 = vadd.s32 %v926, 1
      %vm932 = vcmp.gt.s32.totalorder %v931, 0
      %v933 = vsel %vm932, %v931, 0
      %v934 = vshrl.u32 %v933, 5
      %v935 = vand.u32 %v933, 31
      %v936 = vsub.s32 32, %v935
      %v937 = vshrl.u32 683565275, %v936
      %v938 = vshll.u32 683565275, %v935
      %v939 = vshrl.u32 2475754826, %v936
      %v940 = vor.u32 %v938, %v939
      %v941 = vshll.u32 2475754826, %v935
      %v942 = vshrl.u32 2131351028, %v936
      %v943 = vor.u32 %v941, %v942
      %v944 = vshll.u32 2131351028, %v935
      %v945 = vshrl.u32 2102212464, %v936
      %v946 = vor.u32 %v944, %v945
      %v947 = vshll.u32 2102212464, %v935
      %v948 = vshrl.u32 920167782, %v936
      %v949 = vor.u32 %v947, %v948
      %v950 = vshll.u32 920167782, %v935
      %v951 = vshrl.u32 1326507024, %v936
      %v952 = vor.u32 %v950, %v951
      %vm953 = vcmp.lt.s32.totalorder %v934, 1
      %vm954 = vcmp.lt.s32.totalorder %v934, 2
      %vm955 = vcmp.lt.s32.totalorder %v934, 3
      %vm956 = vcmp.lt.s32.totalorder %v934, 4
      %v957 = vsel %vm953, %v937, %v940
      %v958 = vsel %vm956, %v946, 2102212464
      %v959 = vsel %vm955, %v943, %v958
      %v960 = vsel %vm954, %v957, %v959
      %v961 = vsel %vm953, %v940, %v943
      %v962 = vsel %vm956, %v949, 920167782
      %v963 = vsel %vm955, %v946, %v962
      %v964 = vsel %vm954, %v961, %v963
      %v965 = vsel %vm953, %v943, %v946
      %v966 = vsel %vm956, %v952, 1326507024
      %v967 = vsel %vm955, %v949, %v966
      %v968 = vsel %vm954, %v965, %v967
      %v969 = vshll.u32 %v929, 8
      %v970 = vmul.u32.u64.compose %v969, %v968
      %v971 = vextract.low.u32 %v970
      %v972 = vextract.high.u32 %v970
      %v973 = vmul.u32.u64.compose %v969, %v964
      %v974 = vextract.low.u32 %v973
      %v975 = vextract.high.u32 %v973
      %v976 = vmul.u32 %v969, %v960
      %v977 = vadd.s32 %v972, %v974
      %vm978 = vc.u32 %v972, %v974
      %v979 = vadd.s32 %v975, 1
      %v980 = vsel %vm978, %v979, %v975
      %v981 = vadd.s32 %v976, %v980
      %v982 = vadd.s32 %v981, 536870912
      %v983 = vshrl.u32 %v982, 30
      %v984 = vshll.u32 %v983, 30
      %v985 = vsub.s32 %v981, %v984
      %vm986 = vcmp.lt.s32.totalorder %v985, 0
      %v987 = vsub.s32 0, %v985
      %v988 = vsel %vm986, %v987, %v985
      %v989 = vclz %v988
      %v990 = vsub.s32 %v989, 2
      %vm991 = vcmp.gt.s32.totalorder 0, %v990
      %v992 = vsel %vm991, 0, %v990
      %v993 = vsub.s32 32, %v992
      %v994 = vshll.u32 %v985, %v992
      %v995 = vshrl.u32 %v977, %v993
      %v996 = vor.u32 %v994, %v995
      %v997 = vsub.s32 4294967266, %v992
      %v998 = vadd.s32 %v997, 127
      %v999 = vshll.u32 %v998, 23
      %v1000 = vor.u32 4788187, %v999
      %v1001 = vand.u32 2147483647, %v1000
      %v1003 = vcvt.s32.f32 %v996
      %v1004 = vmul.f32 %v1003, %v1001
      %v1005 = vxor.u32 %v1004, 2147483648
      %v1006 = vsel %vm923, %v1005, %v1004
      %v1007 = vsub.s32 4, %v983
      %v1008 = vsel %vm923, %v1007, %v983
      %v1009 = vsel %vm922, %v758, %v1006
      %v1010 = vsel %vm922, 0, %v1008
      %v1011 = vcosq.f32.pop %v1009
      %v1012 = vsinq.f32.pop %v1009
      %vm1013 = vweird.f32 %v758
      %v1014 = vadd.s32 %v1010, 3
      %v1015 = vand.u32 %v1014, 3
      %vm1016 = vcmp.lt.s32.totalorder %v1015, 2
      %vm1017 = vcmp.eq.s32.totalorder %v1015, 0
      %v1018 = vxor.u32 %v1012, 2147483648
      %v1019 = vsel %vm1017, %v1011, %v1018
      %vm1020 = vcmp.eq.s32.totalorder %v1015, 2
      %v1021 = vxor.u32 %v1011, 2147483648
      %v1022 = vsel %vm1020, %v1021, %v1012
      %v1023 = vsel %vm1016, %v1019, %v1022
      %v1024 = vsel %vm1013, nan, %v1023
      %v1025 = vand.u32 2147483647, %v763
      %vm1026 = vcmp.le.f32.partialorder %v1025, 0.7853982
      %vm1027 = vcmp.lt.s32.totalorder %v763, 0
      %v1028 = vand.u32 %v763, 2139095040
      %v1029 = vshrl.u32 %v1028, 23
      %v1030 = vsub.s32 %v1029, 127
      %v1031 = vand.u32 2147483647, %v763
      %v1032 = vand.u32 %v1031, 8388607
      %v1033 = vor.u32 %v1032, 8388608
      %v1034 = vsub.s32 0, %v1033
      %v1035 = vadd.s32 %v1030, 1
      %vm1036 = vcmp.gt.s32.totalorder %v1035, 0
      %v1037 = vsel %vm1036, %v1035, 0
      %v1038 = vshrl.u32 %v1037, 5
      %v1039 = vand.u32 %v1037, 31
      %v1040 = vsub.s32 32, %v1039
      %v1041 = vshrl.u32 683565275, %v1040
      %v1042 = vshll.u32 683565275, %v1039
      %v1043 = vshrl.u32 2475754826, %v1040
      %v1044 = vor.u32 %v1042, %v1043
      %v1045 = vshll.u32 2475754826, %v1039
      %v1046 = vshrl.u32 2131351028, %v1040
      %v1047 = vor.u32 %v1045, %v1046
      %v1048 = vshll.u32 2131351028, %v1039
      %v1049 = vshrl.u32 2102212464, %v1040
      %v1050 = vor.u32 %v1048, %v1049
      %v1051 = vshll.u32 2102212464, %v1039
      %v1052 = vshrl.u32 920167782, %v1040
      %v1053 = vor.u32 %v1051, %v1052
      %v1054 = vshll.u32 920167782, %v1039
      %v1055 = vshrl.u32 1326507024, %v1040
      %v1056 = vor.u32 %v1054, %v1055
      %vm1057 = vcmp.lt.s32.totalorder %v1038, 1
      %vm1058 = vcmp.lt.s32.totalorder %v1038, 2
      %vm1059 = vcmp.lt.s32.totalorder %v1038, 3
      %vm1060 = vcmp.lt.s32.totalorder %v1038, 4
      %v1061 = vsel %vm1057, %v1041, %v1044
      %v1062 = vsel %vm1060, %v1050, 2102212464
      %v1063 = vsel %vm1059, %v1047, %v1062
      %v1064 = vsel %vm1058, %v1061, %v1063
      %v1065 = vsel %vm1057, %v1044, %v1047
      %v1066 = vsel %vm1060, %v1053, 920167782
      %v1067 = vsel %vm1059, %v1050, %v1066
      %v1068 = vsel %vm1058, %v1065, %v1067
      %v1069 = vsel %vm1057, %v1047, %v1050
      %v1070 = vsel %vm1060, %v1056, 1326507024
      %v1071 = vsel %vm1059, %v1053, %v1070
      %v1072 = vsel %vm1058, %v1069, %v1071
      %v1073 = vshll.u32 %v1033, 8
      %v1074 = vmul.u32.u64.compose %v1073, %v1072
      %v1075 = vextract.low.u32 %v1074
      %v1076 = vextract.high.u32 %v1074
      %v1077 = vmul.u32.u64.compose %v1073, %v1068
      %v1078 = vextract.low.u32 %v1077
      %v1079 = vextract.high.u32 %v1077
      %v1080 = vmul.u32 %v1073, %v1064
      %v1081 = vadd.s32 %v1076, %v1078
      %vm1082 = vc.u32 %v1076, %v1078
      %v1083 = vadd.s32 %v1079, 1
      %v1084 = vsel %vm1082, %v1083, %v1079
      %v1085 = vadd.s32 %v1080, %v1084
      %v1086 = vadd.s32 %v1085, 536870912
      %v1087 = vshrl.u32 %v1086, 30
      %v1088 = vshll.u32 %v1087, 30
      %v1089 = vsub.s32 %v1085, %v1088
      %vm1090 = vcmp.lt.s32.totalorder %v1089, 0
      %v1091 = vsub.s32 0, %v1089
      %v1092 = vsel %vm1090, %v1091, %v1089
      %v1093 = vclz %v1092
      %v1094 = vsub.s32 %v1093, 2
      %vm1095 = vcmp.gt.s32.totalorder 0, %v1094
      %v1096 = vsel %vm1095, 0, %v1094
      %v1097 = vsub.s32 32, %v1096
      %v1098 = vshll.u32 %v1089, %v1096
      %v1099 = vshrl.u32 %v1081, %v1097
      %v1100 = vor.u32 %v1098, %v1099
      %v1101 = vsub.s32 4294967266, %v1096
      %v1102 = vadd.s32 %v1101, 127
      %v1103 = vshll.u32 %v1102, 23
      %v1104 = vor.u32 4788187, %v1103
      %v1105 = vand.u32 2147483647, %v1104
      %v1107 = vcvt.s32.f32 %v1100
      %v1108 = vmul.f32 %v1107, %v1105
      %v1109 = vxor.u32 %v1108, 2147483648
      %v1110 = vsel %vm1027, %v1109, %v1108
      %v1111 = vsub.s32 4, %v1087
      %v1112 = vsel %vm1027, %v1111, %v1087
      %v1113 = vsel %vm1026, %v763, %v1110
      %v1114 = vsel %vm1026, 0, %v1112
      %v1115 = vcosq.f32.pop %v1113
      %v1116 = vsinq.f32.pop %v1113
      %vm1117 = vweird.f32 %v763
      %v1118 = vadd.s32 %v1114, 3
      %v1119 = vand.u32 %v1118, 3
      %vm1120 = vcmp.lt.s32.totalorder %v1119, 2
      %vm1121 = vcmp.eq.s32.totalorder %v1119, 0
      %v1122 = vxor.u32 %v1116, 2147483648
      %v1123 = vsel %vm1121, %v1115, %v1122
      %vm1124 = vcmp.eq.s32.totalorder %v1119, 2
      %v1125 = vxor.u32 %v1115, 2147483648
      %v1126 = vsel %vm1124, %v1125, %v1116
      %v1127 = vsel %vm1120, %v1123, %v1126
      %v1128 = vsel %vm1117, nan, %v1127
      %v1129 = vand.u32 2147483647, %v766
      %vm1130 = vcmp.le.f32.partialorder %v1129, 0.7853982
      %vm1131 = vcmp.lt.s32.totalorder %v766, 0
      %v1132 = vand.u32 %v766, 2139095040
      %v1133 = vshrl.u32 %v1132, 23
      %v1134 = vsub.s32 %v1133, 127
      %v1135 = vand.u32 2147483647, %v766
      %v1136 = vand.u32 %v1135, 8388607
      %v1137 = vor.u32 %v1136, 8388608
      %v1138 = vsub.s32 0, %v1137
      %v1139 = vadd.s32 %v1134, 1
      %vm1140 = vcmp.gt.s32.totalorder %v1139, 0
      %v1141 = vsel %vm1140, %v1139, 0
      %v1142 = vshrl.u32 %v1141, 5
      %v1143 = vand.u32 %v1141, 31
      %v1144 = vsub.s32 32, %v1143
      %v1145 = vshrl.u32 683565275, %v1144
      %v1146 = vshll.u32 683565275, %v1143
      %v1147 = vshrl.u32 2475754826, %v1144
      %v1148 = vor.u32 %v1146, %v1147
      %v1149 = vshll.u32 2475754826, %v1143
      %v1150 = vshrl.u32 2131351028, %v1144
      %v1151 = vor.u32 %v1149, %v1150
      %v1152 = vshll.u32 2131351028, %v1143
      %v1153 = vshrl.u32 2102212464, %v1144
      %v1154 = vor.u32 %v1152, %v1153
      %v1155 = vshll.u32 2102212464, %v1143
      %v1156 = vshrl.u32 920167782, %v1144
      %v1157 = vor.u32 %v1155, %v1156
      %v1158 = vshll.u32 920167782, %v1143
      %v1159 = vshrl.u32 1326507024, %v1144
      %v1160 = vor.u32 %v1158, %v1159
      %vm1161 = vcmp.lt.s32.totalorder %v1142, 1
      %vm1162 = vcmp.lt.s32.totalorder %v1142, 2
      %vm1163 = vcmp.lt.s32.totalorder %v1142, 3
      %vm1164 = vcmp.lt.s32.totalorder %v1142, 4
      %v1165 = vsel %vm1161, %v1145, %v1148
      %v1166 = vsel %vm1164, %v1154, 2102212464
      %v1167 = vsel %vm1163, %v1151, %v1166
      %v1168 = vsel %vm1162, %v1165, %v1167
      %v1169 = vsel %vm1161, %v1148, %v1151
      %v1170 = vsel %vm1164, %v1157, 920167782
      %v1171 = vsel %vm1163, %v1154, %v1170
      %v1172 = vsel %vm1162, %v1169, %v1171
      %v1173 = vsel %vm1161, %v1151, %v1154
      %v1174 = vsel %vm1164, %v1160, 1326507024
      %v1175 = vsel %vm1163, %v1157, %v1174
      %v1176 = vsel %vm1162, %v1173, %v1175
      %v1177 = vshll.u32 %v1137, 8
      %v1178 = vmul.u32.u64.compose %v1177, %v1176
      %v1179 = vextract.low.u32 %v1178
      %v1180 = vextract.high.u32 %v1178
      %v1181 = vmul.u32.u64.compose %v1177, %v1172
      %v1182 = vextract.low.u32 %v1181
      %v1183 = vextract.high.u32 %v1181
      %v1184 = vmul.u32 %v1177, %v1168
      %v1185 = vadd.s32 %v1180, %v1182
      %vm1186 = vc.u32 %v1180, %v1182
      %v1187 = vadd.s32 %v1183, 1
      %v1188 = vsel %vm1186, %v1187, %v1183
      %v1189 = vadd.s32 %v1184, %v1188
      %v1190 = vadd.s32 %v1189, 536870912
      %v1191 = vshrl.u32 %v1190, 30
      %v1192 = vshll.u32 %v1191, 30
      %v1193 = vsub.s32 %v1189, %v1192
      %vm1194 = vcmp.lt.s32.totalorder %v1193, 0
      %v1195 = vsub.s32 0, %v1193
      %v1196 = vsel %vm1194, %v1195, %v1193
      %v1197 = vclz %v1196
      %v1198 = vsub.s32 %v1197, 2
      %vm1199 = vcmp.gt.s32.totalorder 0, %v1198
      %v1200 = vsel %vm1199, 0, %v1198
      %v1201 = vsub.s32 32, %v1200
      %v1202 = vshll.u32 %v1193, %v1200
      %v1203 = vshrl.u32 %v1185, %v1201
      %v1204 = vor.u32 %v1202, %v1203
      %v1205 = vsub.s32 4294967266, %v1200
      %v1206 = vadd.s32 %v1205, 127
      %v1207 = vshll.u32 %v1206, 23
      %v1208 = vor.u32 4788187, %v1207
      %v1209 = vand.u32 2147483647, %v1208
      %v1211 = vcvt.s32.f32 %v1204
      %v1212 = vmul.f32 %v1211, %v1209
      %v1213 = vxor.u32 %v1212, 2147483648
      %v1214 = vsel %vm1131, %v1213, %v1212
      %v1215 = vsub.s32 4, %v1191
      %v1216 = vsel %vm1131, %v1215, %v1191
      %v1217 = vsel %vm1130, %v766, %v1214
      %v1218 = vsel %vm1130, 0, %v1216
      %v1219 = vcosq.f32.pop %v1217
      %v1220 = vsinq.f32.pop %v1217
      %vm1221 = vweird.f32 %v766
      %v1222 = vadd.s32 %v1218, 3
      %v1223 = vand.u32 %v1222, 3
      %vm1224 = vcmp.lt.s32.totalorder %v1223, 2
      %vm1225 = vcmp.eq.s32.totalorder %v1223, 0
      %v1226 = vxor.u32 %v1220, 2147483648
      %v1227 = vsel %vm1225, %v1219, %v1226
      %vm1228 = vcmp.eq.s32.totalorder %v1223, 2
      %v1229 = vxor.u32 %v1219, 2147483648
      %v1230 = vsel %vm1228, %v1229, %v1220
      %v1231 = vsel %vm1224, %v1227, %v1230
      %v1232 = vsel %vm1221, nan, %v1231
      %v1233 = vand.u32 2147483647, %v771
      %vm1234 = vcmp.le.f32.partialorder %v1233, 0.7853982
      %vm1235 = vcmp.lt.s32.totalorder %v771, 0
      %v1236 = vand.u32 %v771, 2139095040
      %v1237 = vshrl.u32 %v1236, 23
      %v1238 = vsub.s32 %v1237, 127
      %v1239 = vand.u32 2147483647, %v771
      %v1240 = vand.u32 %v1239, 8388607
      %v1241 = vor.u32 %v1240, 8388608
      %v1242 = vsub.s32 0, %v1241
      %v1243 = vadd.s32 %v1238, 1
      %vm1244 = vcmp.gt.s32.totalorder %v1243, 0
      %v1245 = vsel %vm1244, %v1243, 0
      %v1246 = vshrl.u32 %v1245, 5
      %v1247 = vand.u32 %v1245, 31
      %v1248 = vsub.s32 32, %v1247
      %v1249 = vshrl.u32 683565275, %v1248
      %v1250 = vshll.u32 683565275, %v1247
      %v1251 = vshrl.u32 2475754826, %v1248
      %v1252 = vor.u32 %v1250, %v1251
      %v1253 = vshll.u32 2475754826, %v1247
      %v1254 = vshrl.u32 2131351028, %v1248
      %v1255 = vor.u32 %v1253, %v1254
      %v1256 = vshll.u32 2131351028, %v1247
      %v1257 = vshrl.u32 2102212464, %v1248
      %v1258 = vor.u32 %v1256, %v1257
      %v1259 = vshll.u32 2102212464, %v1247
      %v1260 = vshrl.u32 920167782, %v1248
      %v1261 = vor.u32 %v1259, %v1260
      %v1262 = vshll.u32 920167782, %v1247
      %v1263 = vshrl.u32 1326507024, %v1248
      %v1264 = vor.u32 %v1262, %v1263
      %vm1265 = vcmp.lt.s32.totalorder %v1246, 1
      %vm1266 = vcmp.lt.s32.totalorder %v1246, 2
      %vm1267 = vcmp.lt.s32.totalorder %v1246, 3
      %vm1268 = vcmp.lt.s32.totalorder %v1246, 4
      %v1269 = vsel %vm1265, %v1249, %v1252
      %v1270 = vsel %vm1268, %v1258, 2102212464
      %v1271 = vsel %vm1267, %v1255, %v1270
      %v1272 = vsel %vm1266, %v1269, %v1271
      %v1273 = vsel %vm1265, %v1252, %v1255
      %v1274 = vsel %vm1268, %v1261, 920167782
      %v1275 = vsel %vm1267, %v1258, %v1274
      %v1276 = vsel %vm1266, %v1273, %v1275
      %v1277 = vsel %vm1265, %v1255, %v1258
      %v1278 = vsel %vm1268, %v1264, 1326507024
      %v1279 = vsel %vm1267, %v1261, %v1278
      %v1280 = vsel %vm1266, %v1277, %v1279
      %v1281 = vshll.u32 %v1241, 8
      %v1282 = vmul.u32.u64.compose %v1281, %v1280
      %v1283 = vextract.low.u32 %v1282
      %v1284 = vextract.high.u32 %v1282
      %v1285 = vmul.u32.u64.compose %v1281, %v1276
      %v1286 = vextract.low.u32 %v1285
      %v1287 = vextract.high.u32 %v1285
      %v1288 = vmul.u32 %v1281, %v1272
      %v1289 = vadd.s32 %v1284, %v1286
      %vm1290 = vc.u32 %v1284, %v1286
      %v1291 = vadd.s32 %v1287, 1
      %v1292 = vsel %vm1290, %v1291, %v1287
      %v1293 = vadd.s32 %v1288, %v1292
      %v1294 = vadd.s32 %v1293, 536870912
      %v1295 = vshrl.u32 %v1294, 30
      %v1296 = vshll.u32 %v1295, 30
      %v1297 = vsub.s32 %v1293, %v1296
      %vm1298 = vcmp.lt.s32.totalorder %v1297, 0
      %v1299 = vsub.s32 0, %v1297
      %v1300 = vsel %vm1298, %v1299, %v1297
      %v1301 = vclz %v1300
      %v1302 = vsub.s32 %v1301, 2
      %vm1303 = vcmp.gt.s32.totalorder 0, %v1302
      %v1304 = vsel %vm1303, 0, %v1302
      %v1305 = vsub.s32 32, %v1304
      %v1306 = vshll.u32 %v1297, %v1304
      %v1307 = vshrl.u32 %v1289, %v1305
      %v1308 = vor.u32 %v1306, %v1307
      %v1309 = vsub.s32 4294967266, %v1304
      %v1310 = vadd.s32 %v1309, 127
      %v1311 = vshll.u32 %v1310, 23
      %v1312 = vor.u32 4788187, %v1311
      %v1313 = vand.u32 2147483647, %v1312
      %v1315 = vcvt.s32.f32 %v1308
      %v1316 = vmul.f32 %v1315, %v1313
      %v1317 = vxor.u32 %v1316, 2147483648
      %v1318 = vsel %vm1235, %v1317, %v1316
      %v1319 = vsub.s32 4, %v1295
      %v1320 = vsel %vm1235, %v1319, %v1295
      %v1321 = vsel %vm1234, %v771, %v1318
      %v1322 = vsel %vm1234, 0, %v1320
      %v1323 = vcosq.f32.pop %v1321
      %v1324 = vsinq.f32.pop %v1321
      %vm1325 = vweird.f32 %v771
      %v1326 = vadd.s32 %v1322, 3
      %v1327 = vand.u32 %v1326, 3
      %vm1328 = vcmp.lt.s32.totalorder %v1327, 2
      %vm1329 = vcmp.eq.s32.totalorder %v1327, 0
      %v1330 = vxor.u32 %v1324, 2147483648
      %v1331 = vsel %vm1329, %v1323, %v1330
      %vm1332 = vcmp.eq.s32.totalorder %v1327, 2
      %v1333 = vxor.u32 %v1323, 2147483648
      %v1334 = vsel %vm1332, %v1333, %v1324
      %v1335 = vsel %vm1328, %v1331, %v1334
      %v1336 = vsel %vm1325, nan, %v1335
      %v1337 = vand.u32 2147483647, %v774
      %vm1338 = vcmp.le.f32.partialorder %v1337, 0.7853982
      %vm1339 = vcmp.lt.s32.totalorder %v774, 0
      %v1340 = vand.u32 %v774, 2139095040
      %v1341 = vshrl.u32 %v1340, 23
      %v1342 = vsub.s32 %v1341, 127
      %v1343 = vand.u32 2147483647, %v774
      %v1344 = vand.u32 %v1343, 8388607
      %v1345 = vor.u32 %v1344, 8388608
      %v1346 = vsub.s32 0, %v1345
      %v1347 = vadd.s32 %v1342, 1
      %vm1348 = vcmp.gt.s32.totalorder %v1347, 0
      %v1349 = vsel %vm1348, %v1347, 0
      %v1350 = vshrl.u32 %v1349, 5
      %v1351 = vand.u32 %v1349, 31
      %v1352 = vsub.s32 32, %v1351
      %v1353 = vshrl.u32 683565275, %v1352
      %v1354 = vshll.u32 683565275, %v1351
      %v1355 = vshrl.u32 2475754826, %v1352
      %v1356 = vor.u32 %v1354, %v1355
      %v1357 = vshll.u32 2475754826, %v1351
      %v1358 = vshrl.u32 2131351028, %v1352
      %v1359 = vor.u32 %v1357, %v1358
      %v1360 = vshll.u32 2131351028, %v1351
      %v1361 = vshrl.u32 2102212464, %v1352
      %v1362 = vor.u32 %v1360, %v1361
      %v1363 = vshll.u32 2102212464, %v1351
      %v1364 = vshrl.u32 920167782, %v1352
      %v1365 = vor.u32 %v1363, %v1364
      %v1366 = vshll.u32 920167782, %v1351
      %v1367 = vshrl.u32 1326507024, %v1352
      %v1368 = vor.u32 %v1366, %v1367
      %vm1369 = vcmp.lt.s32.totalorder %v1350, 1
      %vm1370 = vcmp.lt.s32.totalorder %v1350, 2
      %vm1371 = vcmp.lt.s32.totalorder %v1350, 3
      %vm1372 = vcmp.lt.s32.totalorder %v1350, 4
      %v1373 = vsel %vm1369, %v1353, %v1356
      %v1374 = vsel %vm1372, %v1362, 2102212464
      %v1375 = vsel %vm1371, %v1359, %v1374
      %v1376 = vsel %vm1370, %v1373, %v1375
      %v1377 = vsel %vm1369, %v1356, %v1359
      %v1378 = vsel %vm1372, %v1365, 920167782
      %v1379 = vsel %vm1371, %v1362, %v1378
      %v1380 = vsel %vm1370, %v1377, %v1379
      %v1381 = vsel %vm1369, %v1359, %v1362
      %v1382 = vsel %vm1372, %v1368, 1326507024
      %v1383 = vsel %vm1371, %v1365, %v1382
      %v1384 = vsel %vm1370, %v1381, %v1383
      %v1385 = vshll.u32 %v1345, 8
      %v1386 = vmul.u32.u64.compose %v1385, %v1384
      %v1387 = vextract.low.u32 %v1386
      %v1388 = vextract.high.u32 %v1386
      %v1389 = vmul.u32.u64.compose %v1385, %v1380
      %v1390 = vextract.low.u32 %v1389
      %v1391 = vextract.high.u32 %v1389
      %v1392 = vmul.u32 %v1385, %v1376
      %v1393 = vadd.s32 %v1388, %v1390
      %vm1394 = vc.u32 %v1388, %v1390
      %v1395 = vadd.s32 %v1391, 1
      %v1396 = vsel %vm1394, %v1395, %v1391
      %v1397 = vadd.s32 %v1392, %v1396
      %v1398 = vadd.s32 %v1397, 536870912
      %v1399 = vshrl.u32 %v1398, 30
      %v1400 = vshll.u32 %v1399, 30
      %v1401 = vsub.s32 %v1397, %v1400
      %vm1402 = vcmp.lt.s32.totalorder %v1401, 0
      %v1403 = vsub.s32 0, %v1401
      %v1404 = vsel %vm1402, %v1403, %v1401
      %v1405 = vclz %v1404
      %v1406 = vsub.s32 %v1405, 2
      %vm1407 = vcmp.gt.s32.totalorder 0, %v1406
      %v1408 = vsel %vm1407, 0, %v1406
      %v1409 = vsub.s32 32, %v1408
      %v1410 = vshll.u32 %v1401, %v1408
      %v1411 = vshrl.u32 %v1393, %v1409
      %v1412 = vor.u32 %v1410, %v1411
      %v1413 = vsub.s32 4294967266, %v1408
      %v1414 = vadd.s32 %v1413, 127
      %v1415 = vshll.u32 %v1414, 23
      %v1416 = vor.u32 4788187, %v1415
      %v1417 = vand.u32 2147483647, %v1416
      %v1419 = vcvt.s32.f32 %v1412
      %v1420 = vmul.f32 %v1419, %v1417
      %v1421 = vxor.u32 %v1420, 2147483648
      %v1422 = vsel %vm1339, %v1421, %v1420
      %v1423 = vsub.s32 4, %v1399
      %v1424 = vsel %vm1339, %v1423, %v1399
      %v1425 = vsel %vm1338, %v774, %v1422
      %v1426 = vsel %vm1338, 0, %v1424
      %v1427 = vcosq.f32.pop %v1425
      %v1428 = vsinq.f32.pop %v1425
      %vm1429 = vweird.f32 %v774
      %v1430 = vadd.s32 %v1426, 3
      %v1431 = vand.u32 %v1430, 3
      %vm1432 = vcmp.lt.s32.totalorder %v1431, 2
      %vm1433 = vcmp.eq.s32.totalorder %v1431, 0
      %v1434 = vxor.u32 %v1428, 2147483648
      %v1435 = vsel %vm1433, %v1427, %v1434
      %vm1436 = vcmp.eq.s32.totalorder %v1431, 2
      %v1437 = vxor.u32 %v1427, 2147483648
      %v1438 = vsel %vm1436, %v1437, %v1428
      %v1439 = vsel %vm1432, %v1435, %v1438
      %v1440 = vsel %vm1429, nan, %v1439
      %v1441 = vand.u32 2147483647, %v779
      %vm1442 = vcmp.le.f32.partialorder %v1441, 0.7853982
      %vm1443 = vcmp.lt.s32.totalorder %v779, 0
      %v1444 = vand.u32 %v779, 2139095040
      %v1445 = vshrl.u32 %v1444, 23
      %v1446 = vsub.s32 %v1445, 127
      %v1447 = vand.u32 2147483647, %v779
      %v1448 = vand.u32 %v1447, 8388607
      %v1449 = vor.u32 %v1448, 8388608
      %v1450 = vsub.s32 0, %v1449
      %v1451 = vadd.s32 %v1446, 1
      %vm1452 = vcmp.gt.s32.totalorder %v1451, 0
      %v1453 = vsel %vm1452, %v1451, 0
      %v1454 = vshrl.u32 %v1453, 5
      %v1455 = vand.u32 %v1453, 31
      %v1456 = vsub.s32 32, %v1455
      %v1457 = vshrl.u32 683565275, %v1456
      %v1458 = vshll.u32 683565275, %v1455
      %v1459 = vshrl.u32 2475754826, %v1456
      %v1460 = vor.u32 %v1458, %v1459
      %v1461 = vshll.u32 2475754826, %v1455
      %v1462 = vshrl.u32 2131351028, %v1456
      %v1463 = vor.u32 %v1461, %v1462
      %v1464 = vshll.u32 2131351028, %v1455
      %v1465 = vshrl.u32 2102212464, %v1456
      %v1466 = vor.u32 %v1464, %v1465
      %v1467 = vshll.u32 2102212464, %v1455
      %v1468 = vshrl.u32 920167782, %v1456
      %v1469 = vor.u32 %v1467, %v1468
      %v1470 = vshll.u32 920167782, %v1455
      %v1471 = vshrl.u32 1326507024, %v1456
      %v1472 = vor.u32 %v1470, %v1471
      %vm1473 = vcmp.lt.s32.totalorder %v1454, 1
      %vm1474 = vcmp.lt.s32.totalorder %v1454, 2
      %vm1475 = vcmp.lt.s32.totalorder %v1454, 3
      %vm1476 = vcmp.lt.s32.totalorder %v1454, 4
      %v1477 = vsel %vm1473, %v1457, %v1460
      %v1478 = vsel %vm1476, %v1466, 2102212464
      %v1479 = vsel %vm1475, %v1463, %v1478
      %v1480 = vsel %vm1474, %v1477, %v1479
      %v1481 = vsel %vm1473, %v1460, %v1463
      %v1482 = vsel %vm1476, %v1469, 920167782
      %v1483 = vsel %vm1475, %v1466, %v1482
      %v1484 = vsel %vm1474, %v1481, %v1483
      %v1485 = vsel %vm1473, %v1463, %v1466
      %v1486 = vsel %vm1476, %v1472, 1326507024
      %v1487 = vsel %vm1475, %v1469, %v1486
      %v1488 = vsel %vm1474, %v1485, %v1487
      %v1489 = vshll.u32 %v1449, 8
      %v1490 = vmul.u32.u64.compose %v1489, %v1488
      %v1491 = vextract.low.u32 %v1490
      %v1492 = vextract.high.u32 %v1490
      %v1493 = vmul.u32.u64.compose %v1489, %v1484
      %v1494 = vextract.low.u32 %v1493
      %v1495 = vextract.high.u32 %v1493
      %v1496 = vmul.u32 %v1489, %v1480
      %v1497 = vadd.s32 %v1492, %v1494
      %vm1498 = vc.u32 %v1492, %v1494
      %v1499 = vadd.s32 %v1495, 1
      %v1500 = vsel %vm1498, %v1499, %v1495
      %v1501 = vadd.s32 %v1496, %v1500
      %v1502 = vadd.s32 %v1501, 536870912
      %v1503 = vshrl.u32 %v1502, 30
      %v1504 = vshll.u32 %v1503, 30
      %v1505 = vsub.s32 %v1501, %v1504
      %vm1506 = vcmp.lt.s32.totalorder %v1505, 0
      %v1507 = vsub.s32 0, %v1505
      %v1508 = vsel %vm1506, %v1507, %v1505
      %v1509 = vclz %v1508
      %v1510 = vsub.s32 %v1509, 2
      %vm1511 = vcmp.gt.s32.totalorder 0, %v1510
      %v1512 = vsel %vm1511, 0, %v1510
      %v1513 = vsub.s32 32, %v1512
      %v1514 = vshll.u32 %v1505, %v1512
      %v1515 = vshrl.u32 %v1497, %v1513
      %v1516 = vor.u32 %v1514, %v1515
      %v1517 = vsub.s32 4294967266, %v1512
      %v1518 = vadd.s32 %v1517, 127
      %v1519 = vshll.u32 %v1518, 23
      %v1520 = vor.u32 4788187, %v1519
      %v1521 = vand.u32 2147483647, %v1520
      %v1523 = vcvt.s32.f32 %v1516
      %v1524 = vmul.f32 %v1523, %v1521
      %v1525 = vxor.u32 %v1524, 2147483648
      %v1526 = vsel %vm1443, %v1525, %v1524
      %v1527 = vsub.s32 4, %v1503
      %v1528 = vsel %vm1443, %v1527, %v1503
      %v1529 = vsel %vm1442, %v779, %v1526
      %v1530 = vsel %vm1442, 0, %v1528
      %v1531 = vcosq.f32.pop %v1529
      %v1532 = vsinq.f32.pop %v1529
      %vm1533 = vweird.f32 %v779
      %v1534 = vadd.s32 %v1530, 3
      %v1535 = vand.u32 %v1534, 3
      %vm1536 = vcmp.lt.s32.totalorder %v1535, 2
      %vm1537 = vcmp.eq.s32.totalorder %v1535, 0
      %v1538 = vxor.u32 %v1532, 2147483648
      %v1539 = vsel %vm1537, %v1531, %v1538
      %vm1540 = vcmp.eq.s32.totalorder %v1535, 2
      %v1541 = vxor.u32 %v1531, 2147483648
      %v1542 = vsel %vm1540, %v1541, %v1532
      %v1543 = vsel %vm1536, %v1539, %v1542
      %v1544 = vsel %vm1533, nan, %v1543
      %v1545 = vand.u32 2147483647, %v782
      %vm1546 = vcmp.le.f32.partialorder %v1545, 0.7853982
      %vm1547 = vcmp.lt.s32.totalorder %v782, 0
      %v1548 = vand.u32 %v782, 2139095040
      %v1549 = vshrl.u32 %v1548, 23
      %v1550 = vsub.s32 %v1549, 127
      %v1551 = vand.u32 2147483647, %v782
      %v1552 = vand.u32 %v1551, 8388607
      %v1553 = vor.u32 %v1552, 8388608
      %v1554 = vsub.s32 0, %v1553
      %v1555 = vadd.s32 %v1550, 1
      %vm1556 = vcmp.gt.s32.totalorder %v1555, 0
      %v1557 = vsel %vm1556, %v1555, 0
      %v1558 = vshrl.u32 %v1557, 5
      %v1559 = vand.u32 %v1557, 31
      %v1560 = vsub.s32 32, %v1559
      %v1561 = vshrl.u32 683565275, %v1560
      %v1562 = vshll.u32 683565275, %v1559
      %v1563 = vshrl.u32 2475754826, %v1560
      %v1564 = vor.u32 %v1562, %v1563
      %v1565 = vshll.u32 2475754826, %v1559
      %v1566 = vshrl.u32 2131351028, %v1560
      %v1567 = vor.u32 %v1565, %v1566
      %v1568 = vshll.u32 2131351028, %v1559
      %v1569 = vshrl.u32 2102212464, %v1560
      %v1570 = vor.u32 %v1568, %v1569
      %v1571 = vshll.u32 2102212464, %v1559
      %v1572 = vshrl.u32 920167782, %v1560
      %v1573 = vor.u32 %v1571, %v1572
      %v1574 = vshll.u32 920167782, %v1559
      %v1575 = vshrl.u32 1326507024, %v1560
      %v1576 = vor.u32 %v1574, %v1575
      %vm1577 = vcmp.lt.s32.totalorder %v1558, 1
      %vm1578 = vcmp.lt.s32.totalorder %v1558, 2
      %vm1579 = vcmp.lt.s32.totalorder %v1558, 3
      %vm1580 = vcmp.lt.s32.totalorder %v1558, 4
      %v1581 = vsel %vm1577, %v1561, %v1564
      %v1582 = vsel %vm1580, %v1570, 2102212464
      %v1583 = vsel %vm1579, %v1567, %v1582
      %v1584 = vsel %vm1578, %v1581, %v1583
      %v1585 = vsel %vm1577, %v1564, %v1567
      %v1586 = vsel %vm1580, %v1573, 920167782
      %v1587 = vsel %vm1579, %v1570, %v1586
      %v1588 = vsel %vm1578, %v1585, %v1587
      %v1589 = vsel %vm1577, %v1567, %v1570
      %v1590 = vsel %vm1580, %v1576, 1326507024
      %v1591 = vsel %vm1579, %v1573, %v1590
      %v1592 = vsel %vm1578, %v1589, %v1591
      %v1593 = vshll.u32 %v1553, 8
      %v1594 = vmul.u32.u64.compose %v1593, %v1592
      %v1595 = vextract.low.u32 %v1594
      %v1596 = vextract.high.u32 %v1594
      %v1597 = vmul.u32.u64.compose %v1593, %v1588
      %v1598 = vextract.low.u32 %v1597
      %v1599 = vextract.high.u32 %v1597
      %v1600 = vmul.u32 %v1593, %v1584
      %v1601 = vadd.s32 %v1596, %v1598
      %vm1602 = vc.u32 %v1596, %v1598
      %v1603 = vadd.s32 %v1599, 1
      %v1604 = vsel %vm1602, %v1603, %v1599
      %v1605 = vadd.s32 %v1600, %v1604
      %v1606 = vadd.s32 %v1605, 536870912
      %v1607 = vshrl.u32 %v1606, 30
      %v1608 = vshll.u32 %v1607, 30
      %v1609 = vsub.s32 %v1605, %v1608
      %vm1610 = vcmp.lt.s32.totalorder %v1609, 0
      %v1611 = vsub.s32 0, %v1609
      %v1612 = vsel %vm1610, %v1611, %v1609
      %v1613 = vclz %v1612
      %v1614 = vsub.s32 %v1613, 2
      %vm1615 = vcmp.gt.s32.totalorder 0, %v1614
      %v1616 = vsel %vm1615, 0, %v1614
      %v1617 = vsub.s32 32, %v1616
      %v1618 = vshll.u32 %v1609, %v1616
      %v1619 = vshrl.u32 %v1601, %v1617
      %v1620 = vor.u32 %v1618, %v1619
      %v1621 = vsub.s32 4294967266, %v1616
      %v1622 = vadd.s32 %v1621, 127
      %v1623 = vshll.u32 %v1622, 23
      %v1624 = vor.u32 4788187, %v1623
      %v1625 = vand.u32 2147483647, %v1624
      %v1627 = vcvt.s32.f32 %v1620
      %v1628 = vmul.f32 %v1627, %v1625
      %v1629 = vxor.u32 %v1628, 2147483648
      %v1630 = vsel %vm1547, %v1629, %v1628
      %v1631 = vsub.s32 4, %v1607
      %v1632 = vsel %vm1547, %v1631, %v1607
      %v1633 = vsel %vm1546, %v782, %v1630
      %v1634 = vsel %vm1546, 0, %v1632
      %v1635 = vcosq.f32.pop %v1633
      %v1636 = vsinq.f32.pop %v1633
      %vm1637 = vweird.f32 %v782
      %v1638 = vadd.s32 %v1634, 3
      %v1639 = vand.u32 %v1638, 3
      %vm1640 = vcmp.lt.s32.totalorder %v1639, 2
      %vm1641 = vcmp.eq.s32.totalorder %v1639, 0
      %v1642 = vxor.u32 %v1636, 2147483648
      %v1643 = vsel %vm1641, %v1635, %v1642
      %vm1644 = vcmp.eq.s32.totalorder %v1639, 2
      %v1645 = vxor.u32 %v1635, 2147483648
      %v1646 = vsel %vm1644, %v1645, %v1636
      %v1647 = vsel %vm1640, %v1643, %v1646
      %v1648 = vsel %vm1637, nan, %v1647
      %v1649 = vand.u32 2147483647, %v787
      %vm1650 = vcmp.le.f32.partialorder %v1649, 0.7853982
      %vm1651 = vcmp.lt.s32.totalorder %v787, 0
      %v1652 = vand.u32 %v787, 2139095040
      %v1653 = vshrl.u32 %v1652, 23
      %v1654 = vsub.s32 %v1653, 127
      %v1655 = vand.u32 2147483647, %v787
      %v1656 = vand.u32 %v1655, 8388607
      %v1657 = vor.u32 %v1656, 8388608
      %v1658 = vsub.s32 0, %v1657
      %v1659 = vadd.s32 %v1654, 1
      %vm1660 = vcmp.gt.s32.totalorder %v1659, 0
      %v1661 = vsel %vm1660, %v1659, 0
      %v1662 = vshrl.u32 %v1661, 5
      %v1663 = vand.u32 %v1661, 31
      %v1664 = vsub.s32 32, %v1663
      %v1665 = vshrl.u32 683565275, %v1664
      %v1666 = vshll.u32 683565275, %v1663
      %v1667 = vshrl.u32 2475754826, %v1664
      %v1668 = vor.u32 %v1666, %v1667
      %v1669 = vshll.u32 2475754826, %v1663
      %v1670 = vshrl.u32 2131351028, %v1664
      %v1671 = vor.u32 %v1669, %v1670
      %v1672 = vshll.u32 2131351028, %v1663
      %v1673 = vshrl.u32 2102212464, %v1664
      %v1674 = vor.u32 %v1672, %v1673
      %v1675 = vshll.u32 2102212464, %v1663
      %v1676 = vshrl.u32 920167782, %v1664
      %v1677 = vor.u32 %v1675, %v1676
      %v1678 = vshll.u32 920167782, %v1663
      %v1679 = vshrl.u32 1326507024, %v1664
      %v1680 = vor.u32 %v1678, %v1679
      %vm1681 = vcmp.lt.s32.totalorder %v1662, 1
      %vm1682 = vcmp.lt.s32.totalorder %v1662, 2
      %vm1683 = vcmp.lt.s32.totalorder %v1662, 3
      %vm1684 = vcmp.lt.s32.totalorder %v1662, 4
      %v1685 = vsel %vm1681, %v1665, %v1668
      %v1686 = vsel %vm1684, %v1674, 2102212464
      %v1687 = vsel %vm1683, %v1671, %v1686
      %v1688 = vsel %vm1682, %v1685, %v1687
      %v1689 = vsel %vm1681, %v1668, %v1671
      %v1690 = vsel %vm1684, %v1677, 920167782
      %v1691 = vsel %vm1683, %v1674, %v1690
      %v1692 = vsel %vm1682, %v1689, %v1691
      %v1693 = vsel %vm1681, %v1671, %v1674
      %v1694 = vsel %vm1684, %v1680, 1326507024
      %v1695 = vsel %vm1683, %v1677, %v1694
      %v1696 = vsel %vm1682, %v1693, %v1695
      %v1697 = vshll.u32 %v1657, 8
      %v1698 = vmul.u32.u64.compose %v1697, %v1696
      %v1699 = vextract.low.u32 %v1698
      %v1700 = vextract.high.u32 %v1698
      %v1701 = vmul.u32.u64.compose %v1697, %v1692
      %v1702 = vextract.low.u32 %v1701
      %v1703 = vextract.high.u32 %v1701
      %v1704 = vmul.u32 %v1697, %v1688
      %v1705 = vadd.s32 %v1700, %v1702
      %vm1706 = vc.u32 %v1700, %v1702
      %v1707 = vadd.s32 %v1703, 1
      %v1708 = vsel %vm1706, %v1707, %v1703
      %v1709 = vadd.s32 %v1704, %v1708
      %v1710 = vadd.s32 %v1709, 536870912
      %v1711 = vshrl.u32 %v1710, 30
      %v1712 = vshll.u32 %v1711, 30
      %v1713 = vsub.s32 %v1709, %v1712
      %vm1714 = vcmp.lt.s32.totalorder %v1713, 0
      %v1715 = vsub.s32 0, %v1713
      %v1716 = vsel %vm1714, %v1715, %v1713
      %v1717 = vclz %v1716
      %v1718 = vsub.s32 %v1717, 2
      %vm1719 = vcmp.gt.s32.totalorder 0, %v1718
      %v1720 = vsel %vm1719, 0, %v1718
      %v1721 = vsub.s32 32, %v1720
      %v1722 = vshll.u32 %v1713, %v1720
      %v1723 = vshrl.u32 %v1705, %v1721
      %v1724 = vor.u32 %v1722, %v1723
      %v1725 = vsub.s32 4294967266, %v1720
      %v1726 = vadd.s32 %v1725, 127
      %v1727 = vshll.u32 %v1726, 23
      %v1728 = vor.u32 4788187, %v1727
      %v1729 = vand.u32 2147483647, %v1728
      %v1731 = vcvt.s32.f32 %v1724
      %v1732 = vmul.f32 %v1731, %v1729
      %v1733 = vxor.u32 %v1732, 2147483648
      %v1734 = vsel %vm1651, %v1733, %v1732
      %v1735 = vsub.s32 4, %v1711
      %v1736 = vsel %vm1651, %v1735, %v1711
      %v1737 = vsel %vm1650, %v787, %v1734
      %v1738 = vsel %vm1650, 0, %v1736
      %v1739 = vcosq.f32.pop %v1737
      %v1740 = vsinq.f32.pop %v1737
      %vm1741 = vweird.f32 %v787
      %v1742 = vadd.s32 %v1738, 3
      %v1743 = vand.u32 %v1742, 3
      %vm1744 = vcmp.lt.s32.totalorder %v1743, 2
      %vm1745 = vcmp.eq.s32.totalorder %v1743, 0
      %v1746 = vxor.u32 %v1740, 2147483648
      %v1747 = vsel %vm1745, %v1739, %v1746
      %vm1748 = vcmp.eq.s32.totalorder %v1743, 2
      %v1749 = vxor.u32 %v1739, 2147483648
      %v1750 = vsel %vm1748, %v1749, %v1740
      %v1751 = vsel %vm1744, %v1747, %v1750
      %v1752 = vsel %vm1741, nan, %v1751
      %v1753 = vand.u32 2147483647, %v790
      %vm1754 = vcmp.le.f32.partialorder %v1753, 0.7853982
      %vm1755 = vcmp.lt.s32.totalorder %v790, 0
      %v1756 = vand.u32 %v790, 2139095040
      %v1757 = vshrl.u32 %v1756, 23
      %v1758 = vsub.s32 %v1757, 127
      %v1759 = vand.u32 2147483647, %v790
      %v1760 = vand.u32 %v1759, 8388607
      %v1761 = vor.u32 %v1760, 8388608
      %v1762 = vsub.s32 0, %v1761
      %v1763 = vadd.s32 %v1758, 1
      %vm1764 = vcmp.gt.s32.totalorder %v1763, 0
      %v1765 = vsel %vm1764, %v1763, 0
      %v1766 = vshrl.u32 %v1765, 5
      %v1767 = vand.u32 %v1765, 31
      %v1768 = vsub.s32 32, %v1767
      %v1769 = vshrl.u32 683565275, %v1768
      %v1770 = vshll.u32 683565275, %v1767
      %v1771 = vshrl.u32 2475754826, %v1768
      %v1772 = vor.u32 %v1770, %v1771
      %v1773 = vshll.u32 2475754826, %v1767
      %v1774 = vshrl.u32 2131351028, %v1768
      %v1775 = vor.u32 %v1773, %v1774
      %v1776 = vshll.u32 2131351028, %v1767
      %v1777 = vshrl.u32 2102212464, %v1768
      %v1778 = vor.u32 %v1776, %v1777
      %v1779 = vshll.u32 2102212464, %v1767
      %v1780 = vshrl.u32 920167782, %v1768
      %v1781 = vor.u32 %v1779, %v1780
      %v1782 = vshll.u32 920167782, %v1767
      %v1783 = vshrl.u32 1326507024, %v1768
      %v1784 = vor.u32 %v1782, %v1783
      %vm1785 = vcmp.lt.s32.totalorder %v1766, 1
      %vm1786 = vcmp.lt.s32.totalorder %v1766, 2
      %vm1787 = vcmp.lt.s32.totalorder %v1766, 3
      %vm1788 = vcmp.lt.s32.totalorder %v1766, 4
      %v1789 = vsel %vm1785, %v1769, %v1772
      %v1790 = vsel %vm1788, %v1778, 2102212464
      %v1791 = vsel %vm1787, %v1775, %v1790
      %v1792 = vsel %vm1786, %v1789, %v1791
      %v1793 = vsel %vm1785, %v1772, %v1775
      %v1794 = vsel %vm1788, %v1781, 920167782
      %v1795 = vsel %vm1787, %v1778, %v1794
      %v1796 = vsel %vm1786, %v1793, %v1795
      %v1797 = vsel %vm1785, %v1775, %v1778
      %v1798 = vsel %vm1788, %v1784, 1326507024
      %v1799 = vsel %vm1787, %v1781, %v1798
      %v1800 = vsel %vm1786, %v1797, %v1799
      %v1801 = vshll.u32 %v1761, 8
      %v1802 = vmul.u32.u64.compose %v1801, %v1800
      %v1803 = vextract.low.u32 %v1802
      %v1804 = vextract.high.u32 %v1802
      %v1805 = vmul.u32.u64.compose %v1801, %v1796
      %v1806 = vextract.low.u32 %v1805
      %v1807 = vextract.high.u32 %v1805
      %v1808 = vmul.u32 %v1801, %v1792
      %v1809 = vadd.s32 %v1804, %v1806
      %vm1810 = vc.u32 %v1804, %v1806
      %v1811 = vadd.s32 %v1807, 1
      %v1812 = vsel %vm1810, %v1811, %v1807
      %v1813 = vadd.s32 %v1808, %v1812
      %v1814 = vadd.s32 %v1813, 536870912
      %v1815 = vshrl.u32 %v1814, 30
      %v1816 = vshll.u32 %v1815, 30
      %v1817 = vsub.s32 %v1813, %v1816
      %vm1818 = vcmp.lt.s32.totalorder %v1817, 0
      %v1819 = vsub.s32 0, %v1817
      %v1820 = vsel %vm1818, %v1819, %v1817
      %v1821 = vclz %v1820
      %v1822 = vsub.s32 %v1821, 2
      %vm1823 = vcmp.gt.s32.totalorder 0, %v1822
      %v1824 = vsel %vm1823, 0, %v1822
      %v1825 = vsub.s32 32, %v1824
      %v1826 = vshll.u32 %v1817, %v1824
      %v1827 = vshrl.u32 %v1809, %v1825
      %v1828 = vor.u32 %v1826, %v1827
      %v1829 = vsub.s32 4294967266, %v1824
      %v1830 = vadd.s32 %v1829, 127
      %v1831 = vshll.u32 %v1830, 23
      %v1832 = vor.u32 4788187, %v1831
      %v1833 = vand.u32 2147483647, %v1832
      %v1835 = vcvt.s32.f32 %v1828
      %v1836 = vmul.f32 %v1835, %v1833
      %v1837 = vxor.u32 %v1836, 2147483648
      %v1838 = vsel %vm1755, %v1837, %v1836
      %v1839 = vsub.s32 4, %v1815
      %v1840 = vsel %vm1755, %v1839, %v1815
      %v1841 = vsel %vm1754, %v790, %v1838
      %v1842 = vsel %vm1754, 0, %v1840
      %v1843 = vcosq.f32.pop %v1841
      %v1844 = vsinq.f32.pop %v1841
      %vm1845 = vweird.f32 %v790
      %v1846 = vadd.s32 %v1842, 3
      %v1847 = vand.u32 %v1846, 3
      %vm1848 = vcmp.lt.s32.totalorder %v1847, 2
      %vm1849 = vcmp.eq.s32.totalorder %v1847, 0
      %v1850 = vxor.u32 %v1844, 2147483648
      %v1851 = vsel %vm1849, %v1843, %v1850
      %vm1852 = vcmp.eq.s32.totalorder %v1847, 2
      %v1853 = vxor.u32 %v1843, 2147483648
      %v1854 = vsel %vm1852, %v1853, %v1844
      %v1855 = vsel %vm1848, %v1851, %v1854
      %v1856 = vsel %vm1845, nan, %v1855
      %v1857 = vand.u32 2147483647, %v795
      %vm1858 = vcmp.le.f32.partialorder %v1857, 0.7853982
      %vm1859 = vcmp.lt.s32.totalorder %v795, 0
      %v1860 = vand.u32 %v795, 2139095040
      %v1861 = vshrl.u32 %v1860, 23
      %v1862 = vsub.s32 %v1861, 127
      %v1863 = vand.u32 2147483647, %v795
      %v1864 = vand.u32 %v1863, 8388607
      %v1865 = vor.u32 %v1864, 8388608
      %v1866 = vsub.s32 0, %v1865
      %v1867 = vadd.s32 %v1862, 1
      %vm1868 = vcmp.gt.s32.totalorder %v1867, 0
      %v1869 = vsel %vm1868, %v1867, 0
      %v1870 = vshrl.u32 %v1869, 5
      %v1871 = vand.u32 %v1869, 31
      %v1872 = vsub.s32 32, %v1871
      %v1873 = vshrl.u32 683565275, %v1872
      %v1874 = vshll.u32 683565275, %v1871
      %v1875 = vshrl.u32 2475754826, %v1872
      %v1876 = vor.u32 %v1874, %v1875
      %v1877 = vshll.u32 2475754826, %v1871
      %v1878 = vshrl.u32 2131351028, %v1872
      %v1879 = vor.u32 %v1877, %v1878
      %v1880 = vshll.u32 2131351028, %v1871
      %v1881 = vshrl.u32 2102212464, %v1872
      %v1882 = vor.u32 %v1880, %v1881
      %v1883 = vshll.u32 2102212464, %v1871
      %v1884 = vshrl.u32 920167782, %v1872
      %v1885 = vor.u32 %v1883, %v1884
      %v1886 = vshll.u32 920167782, %v1871
      %v1887 = vshrl.u32 1326507024, %v1872
      %v1888 = vor.u32 %v1886, %v1887
      %vm1889 = vcmp.lt.s32.totalorder %v1870, 1
      %vm1890 = vcmp.lt.s32.totalorder %v1870, 2
      %vm1891 = vcmp.lt.s32.totalorder %v1870, 3
      %vm1892 = vcmp.lt.s32.totalorder %v1870, 4
      %v1893 = vsel %vm1889, %v1873, %v1876
      %v1894 = vsel %vm1892, %v1882, 2102212464
      %v1895 = vsel %vm1891, %v1879, %v1894
      %v1896 = vsel %vm1890, %v1893, %v1895
      %v1897 = vsel %vm1889, %v1876, %v1879
      %v1898 = vsel %vm1892, %v1885, 920167782
      %v1899 = vsel %vm1891, %v1882, %v1898
      %v1900 = vsel %vm1890, %v1897, %v1899
      %v1901 = vsel %vm1889, %v1879, %v1882
      %v1902 = vsel %vm1892, %v1888, 1326507024
      %v1903 = vsel %vm1891, %v1885, %v1902
      %v1904 = vsel %vm1890, %v1901, %v1903
      %v1905 = vshll.u32 %v1865, 8
      %v1906 = vmul.u32.u64.compose %v1905, %v1904
      %v1907 = vextract.low.u32 %v1906
      %v1908 = vextract.high.u32 %v1906
      %v1909 = vmul.u32.u64.compose %v1905, %v1900
      %v1910 = vextract.low.u32 %v1909
      %v1911 = vextract.high.u32 %v1909
      %v1912 = vmul.u32 %v1905, %v1896
      %v1913 = vadd.s32 %v1908, %v1910
      %vm1914 = vc.u32 %v1908, %v1910
      %v1915 = vadd.s32 %v1911, 1
      %v1916 = vsel %vm1914, %v1915, %v1911
      %v1917 = vadd.s32 %v1912, %v1916
      %v1918 = vadd.s32 %v1917, 536870912
      %v1919 = vshrl.u32 %v1918, 30
      %v1920 = vshll.u32 %v1919, 30
      %v1921 = vsub.s32 %v1917, %v1920
      %vm1922 = vcmp.lt.s32.totalorder %v1921, 0
      %v1923 = vsub.s32 0, %v1921
      %v1924 = vsel %vm1922, %v1923, %v1921
      %v1925 = vclz %v1924
      %v1926 = vsub.s32 %v1925, 2
      %vm1927 = vcmp.gt.s32.totalorder 0, %v1926
      %v1928 = vsel %vm1927, 0, %v1926
      %v1929 = vsub.s32 32, %v1928
      %v1930 = vshll.u32 %v1921, %v1928
      %v1931 = vshrl.u32 %v1913, %v1929
      %v1932 = vor.u32 %v1930, %v1931
      %v1933 = vsub.s32 4294967266, %v1928
      %v1934 = vadd.s32 %v1933, 127
      %v1935 = vshll.u32 %v1934, 23
      %v1936 = vor.u32 4788187, %v1935
      %v1937 = vand.u32 2147483647, %v1936
      %v1939 = vcvt.s32.f32 %v1932
      %v1940 = vmul.f32 %v1939, %v1937
      %v1941 = vxor.u32 %v1940, 2147483648
      %v1942 = vsel %vm1859, %v1941, %v1940
      %v1943 = vsub.s32 4, %v1919
      %v1944 = vsel %vm1859, %v1943, %v1919
      %v1945 = vsel %vm1858, %v795, %v1942
      %v1946 = vsel %vm1858, 0, %v1944
      %v1947 = vcosq.f32.pop %v1945
      %v1948 = vsinq.f32.pop %v1945
      %vm1949 = vweird.f32 %v795
      %v1950 = vadd.s32 %v1946, 3
      %v1951 = vand.u32 %v1950, 3
      %vm1952 = vcmp.lt.s32.totalorder %v1951, 2
      %vm1953 = vcmp.eq.s32.totalorder %v1951, 0
      %v1954 = vxor.u32 %v1948, 2147483648
      %v1955 = vsel %vm1953, %v1947, %v1954
      %vm1956 = vcmp.eq.s32.totalorder %v1951, 2
      %v1957 = vxor.u32 %v1947, 2147483648
      %v1958 = vsel %vm1956, %v1957, %v1948
      %v1959 = vsel %vm1952, %v1955, %v1958
      %v1960 = vsel %vm1949, nan, %v1959
      %v1961 = vand.u32 2147483647, %v798
      %vm1962 = vcmp.le.f32.partialorder %v1961, 0.7853982
      %vm1963 = vcmp.lt.s32.totalorder %v798, 0
      %v1964 = vand.u32 %v798, 2139095040
      %v1965 = vshrl.u32 %v1964, 23
      %v1966 = vsub.s32 %v1965, 127
      %v1967 = vand.u32 2147483647, %v798
      %v1968 = vand.u32 %v1967, 8388607
      %v1969 = vor.u32 %v1968, 8388608
      %v1970 = vsub.s32 0, %v1969
      %v1971 = vadd.s32 %v1966, 1
      %vm1972 = vcmp.gt.s32.totalorder %v1971, 0
      %v1973 = vsel %vm1972, %v1971, 0
      %v1974 = vshrl.u32 %v1973, 5
      %v1975 = vand.u32 %v1973, 31
      %v1976 = vsub.s32 32, %v1975
      %v1977 = vshrl.u32 683565275, %v1976
      %v1978 = vshll.u32 683565275, %v1975
      %v1979 = vshrl.u32 2475754826, %v1976
      %v1980 = vor.u32 %v1978, %v1979
      %v1981 = vshll.u32 2475754826, %v1975
      %v1982 = vshrl.u32 2131351028, %v1976
      %v1983 = vor.u32 %v1981, %v1982
      %v1984 = vshll.u32 2131351028, %v1975
      %v1985 = vshrl.u32 2102212464, %v1976
      %v1986 = vor.u32 %v1984, %v1985
      %v1987 = vshll.u32 2102212464, %v1975
      %v1988 = vshrl.u32 920167782, %v1976
      %v1989 = vor.u32 %v1987, %v1988
      %v1990 = vshll.u32 920167782, %v1975
      %v1991 = vshrl.u32 1326507024, %v1976
      %v1992 = vor.u32 %v1990, %v1991
      %vm1993 = vcmp.lt.s32.totalorder %v1974, 1
      %vm1994 = vcmp.lt.s32.totalorder %v1974, 2
      %vm1995 = vcmp.lt.s32.totalorder %v1974, 3
      %vm1996 = vcmp.lt.s32.totalorder %v1974, 4
      %v1997 = vsel %vm1993, %v1977, %v1980
      %v1998 = vsel %vm1996, %v1986, 2102212464
      %v1999 = vsel %vm1995, %v1983, %v1998
      %v2000 = vsel %vm1994, %v1997, %v1999
      %v2001 = vsel %vm1993, %v1980, %v1983
      %v2002 = vsel %vm1996, %v1989, 920167782
      %v2003 = vsel %vm1995, %v1986, %v2002
      %v2004 = vsel %vm1994, %v2001, %v2003
      %v2005 = vsel %vm1993, %v1983, %v1986
      %v2006 = vsel %vm1996, %v1992, 1326507024
      %v2007 = vsel %vm1995, %v1989, %v2006
      %v2008 = vsel %vm1994, %v2005, %v2007
      %v2009 = vshll.u32 %v1969, 8
      %v2010 = vmul.u32.u64.compose %v2009, %v2008
      %v2011 = vextract.low.u32 %v2010
      %v2012 = vextract.high.u32 %v2010
      %v2013 = vmul.u32.u64.compose %v2009, %v2004
      %v2014 = vextract.low.u32 %v2013
      %v2015 = vextract.high.u32 %v2013
      %v2016 = vmul.u32 %v2009, %v2000
      %v2017 = vadd.s32 %v2012, %v2014
      %vm2018 = vc.u32 %v2012, %v2014
      %v2019 = vadd.s32 %v2015, 1
      %v2020 = vsel %vm2018, %v2019, %v2015
      %v2021 = vadd.s32 %v2016, %v2020
      %v2022 = vadd.s32 %v2021, 536870912
      %v2023 = vshrl.u32 %v2022, 30
      %v2024 = vshll.u32 %v2023, 30
      %v2025 = vsub.s32 %v2021, %v2024
      %vm2026 = vcmp.lt.s32.totalorder %v2025, 0
      %v2027 = vsub.s32 0, %v2025
      %v2028 = vsel %vm2026, %v2027, %v2025
      %v2029 = vclz %v2028
      %v2030 = vsub.s32 %v2029, 2
      %vm2031 = vcmp.gt.s32.totalorder 0, %v2030
      %v2032 = vsel %vm2031, 0, %v2030
      %v2033 = vsub.s32 32, %v2032
      %v2034 = vshll.u32 %v2025, %v2032
      %v2035 = vshrl.u32 %v2017, %v2033
      %v2036 = vor.u32 %v2034, %v2035
      %v2037 = vsub.s32 4294967266, %v2032
      %v2038 = vadd.s32 %v2037, 127
      %v2039 = vshll.u32 %v2038, 23
      %v2040 = vor.u32 4788187, %v2039
      %v2041 = vand.u32 2147483647, %v2040
      %v2043 = vcvt.s32.f32 %v2036
      %v2044 = vmul.f32 %v2043, %v2041
      %v2045 = vxor.u32 %v2044, 2147483648
      %v2046 = vsel %vm1963, %v2045, %v2044
      %v2047 = vsub.s32 4, %v2023
      %v2048 = vsel %vm1963, %v2047, %v2023
      %v2049 = vsel %vm1962, %v798, %v2046
      %v2050 = vsel %vm1962, 0, %v2048
      %v2051 = vcosq.f32.pop %v2049
      %v2052 = vsinq.f32.pop %v2049
      %vm2053 = vweird.f32 %v798
      %v2054 = vadd.s32 %v2050, 3
      %v2055 = vand.u32 %v2054, 3
      %vm2056 = vcmp.lt.s32.totalorder %v2055, 2
      %vm2057 = vcmp.eq.s32.totalorder %v2055, 0
      %v2058 = vxor.u32 %v2052, 2147483648
      %v2059 = vsel %vm2057, %v2051, %v2058
      %vm2060 = vcmp.eq.s32.totalorder %v2055, 2
      %v2061 = vxor.u32 %v2051, 2147483648
      %v2062 = vsel %vm2060, %v2061, %v2052
      %v2063 = vsel %vm2056, %v2059, %v2062
      %v2064 = vsel %vm2053, nan, %v2063
      %v2065 = vand.u32 2147483647, %v803
      %vm2066 = vcmp.le.f32.partialorder %v2065, 0.7853982
      %vm2067 = vcmp.lt.s32.totalorder %v803, 0
      %v2068 = vand.u32 %v803, 2139095040
      %v2069 = vshrl.u32 %v2068, 23
      %v2070 = vsub.s32 %v2069, 127
      %v2071 = vand.u32 2147483647, %v803
      %v2072 = vand.u32 %v2071, 8388607
      %v2073 = vor.u32 %v2072, 8388608
      %v2074 = vsub.s32 0, %v2073
      %v2075 = vadd.s32 %v2070, 1
      %vm2076 = vcmp.gt.s32.totalorder %v2075, 0
      %v2077 = vsel %vm2076, %v2075, 0
      %v2078 = vshrl.u32 %v2077, 5
      %v2079 = vand.u32 %v2077, 31
      %v2080 = vsub.s32 32, %v2079
      %v2081 = vshrl.u32 683565275, %v2080
      %v2082 = vshll.u32 683565275, %v2079
      %v2083 = vshrl.u32 2475754826, %v2080
      %v2084 = vor.u32 %v2082, %v2083
      %v2085 = vshll.u32 2475754826, %v2079
      %v2086 = vshrl.u32 2131351028, %v2080
      %v2087 = vor.u32 %v2085, %v2086
      %v2088 = vshll.u32 2131351028, %v2079
      %v2089 = vshrl.u32 2102212464, %v2080
      %v2090 = vor.u32 %v2088, %v2089
      %v2091 = vshll.u32 2102212464, %v2079
      %v2092 = vshrl.u32 920167782, %v2080
      %v2093 = vor.u32 %v2091, %v2092
      %v2094 = vshll.u32 920167782, %v2079
      %v2095 = vshrl.u32 1326507024, %v2080
      %v2096 = vor.u32 %v2094, %v2095
      %vm2097 = vcmp.lt.s32.totalorder %v2078, 1
      %vm2098 = vcmp.lt.s32.totalorder %v2078, 2
      %vm2099 = vcmp.lt.s32.totalorder %v2078, 3
      %vm2100 = vcmp.lt.s32.totalorder %v2078, 4
      %v2101 = vsel %vm2097, %v2081, %v2084
      %v2102 = vsel %vm2100, %v2090, 2102212464
      %v2103 = vsel %vm2099, %v2087, %v2102
      %v2104 = vsel %vm2098, %v2101, %v2103
      %v2105 = vsel %vm2097, %v2084, %v2087
      %v2106 = vsel %vm2100, %v2093, 920167782
      %v2107 = vsel %vm2099, %v2090, %v2106
      %v2108 = vsel %vm2098, %v2105, %v2107
      %v2109 = vsel %vm2097, %v2087, %v2090
      %v2110 = vsel %vm2100, %v2096, 1326507024
      %v2111 = vsel %vm2099, %v2093, %v2110
      %v2112 = vsel %vm2098, %v2109, %v2111
      %v2113 = vshll.u32 %v2073, 8
      %v2114 = vmul.u32.u64.compose %v2113, %v2112
      %v2115 = vextract.low.u32 %v2114
      %v2116 = vextract.high.u32 %v2114
      %v2117 = vmul.u32.u64.compose %v2113, %v2108
      %v2118 = vextract.low.u32 %v2117
      %v2119 = vextract.high.u32 %v2117
      %v2120 = vmul.u32 %v2113, %v2104
      %v2121 = vadd.s32 %v2116, %v2118
      %vm2122 = vc.u32 %v2116, %v2118
      %v2123 = vadd.s32 %v2119, 1
      %v2124 = vsel %vm2122, %v2123, %v2119
      %v2125 = vadd.s32 %v2120, %v2124
      %v2126 = vadd.s32 %v2125, 536870912
      %v2127 = vshrl.u32 %v2126, 30
      %v2128 = vshll.u32 %v2127, 30
      %v2129 = vsub.s32 %v2125, %v2128
      %vm2130 = vcmp.lt.s32.totalorder %v2129, 0
      %v2131 = vsub.s32 0, %v2129
      %v2132 = vsel %vm2130, %v2131, %v2129
      %v2133 = vclz %v2132
      %v2134 = vsub.s32 %v2133, 2
      %vm2135 = vcmp.gt.s32.totalorder 0, %v2134
      %v2136 = vsel %vm2135, 0, %v2134
      %v2137 = vsub.s32 32, %v2136
      %v2138 = vshll.u32 %v2129, %v2136
      %v2139 = vshrl.u32 %v2121, %v2137
      %v2140 = vor.u32 %v2138, %v2139
      %v2141 = vsub.s32 4294967266, %v2136
      %v2142 = vadd.s32 %v2141, 127
      %v2143 = vshll.u32 %v2142, 23
      %v2144 = vor.u32 4788187, %v2143
      %v2145 = vand.u32 2147483647, %v2144
      %v2147 = vcvt.s32.f32 %v2140
      %v2148 = vmul.f32 %v2147, %v2145
      %v2149 = vxor.u32 %v2148, 2147483648
      %v2150 = vsel %vm2067, %v2149, %v2148
      %v2151 = vsub.s32 4, %v2127
      %v2152 = vsel %vm2067, %v2151, %v2127
      %v2153 = vsel %vm2066, %v803, %v2150
      %v2154 = vsel %vm2066, 0, %v2152
      %v2155 = vcosq.f32.pop %v2153
      %v2156 = vsinq.f32.pop %v2153
      %vm2157 = vweird.f32 %v803
      %v2158 = vadd.s32 %v2154, 3
      %v2159 = vand.u32 %v2158, 3
      %vm2160 = vcmp.lt.s32.totalorder %v2159, 2
      %vm2161 = vcmp.eq.s32.totalorder %v2159, 0
      %v2162 = vxor.u32 %v2156, 2147483648
      %v2163 = vsel %vm2161, %v2155, %v2162
      %vm2164 = vcmp.eq.s32.totalorder %v2159, 2
      %v2165 = vxor.u32 %v2155, 2147483648
      %v2166 = vsel %vm2164, %v2165, %v2156
      %v2167 = vsel %vm2160, %v2163, %v2166
      %v2168 = vsel %vm2157, nan, %v2167
      %v2169 = vand.u32 2147483647, %v806
      %vm2170 = vcmp.le.f32.partialorder %v2169, 0.7853982
      %vm2171 = vcmp.lt.s32.totalorder %v806, 0
      %v2172 = vand.u32 %v806, 2139095040
      %v2173 = vshrl.u32 %v2172, 23
      %v2174 = vsub.s32 %v2173, 127
      %v2175 = vand.u32 2147483647, %v806
      %v2176 = vand.u32 %v2175, 8388607
      %v2177 = vor.u32 %v2176, 8388608
      %v2178 = vsub.s32 0, %v2177
      %v2179 = vadd.s32 %v2174, 1
      %vm2180 = vcmp.gt.s32.totalorder %v2179, 0
      %v2181 = vsel %vm2180, %v2179, 0
      %v2182 = vshrl.u32 %v2181, 5
      %v2183 = vand.u32 %v2181, 31
      %v2184 = vsub.s32 32, %v2183
      %v2185 = vshrl.u32 683565275, %v2184
      %v2186 = vshll.u32 683565275, %v2183
      %v2187 = vshrl.u32 2475754826, %v2184
      %v2188 = vor.u32 %v2186, %v2187
      %v2189 = vshll.u32 2475754826, %v2183
      %v2190 = vshrl.u32 2131351028, %v2184
      %v2191 = vor.u32 %v2189, %v2190
      %v2192 = vshll.u32 2131351028, %v2183
      %v2193 = vshrl.u32 2102212464, %v2184
      %v2194 = vor.u32 %v2192, %v2193
      %v2195 = vshll.u32 2102212464, %v2183
      %v2196 = vshrl.u32 920167782, %v2184
      %v2197 = vor.u32 %v2195, %v2196
      %v2198 = vshll.u32 920167782, %v2183
      %v2199 = vshrl.u32 1326507024, %v2184
      %v2200 = vor.u32 %v2198, %v2199
      %vm2201 = vcmp.lt.s32.totalorder %v2182, 1
      %vm2202 = vcmp.lt.s32.totalorder %v2182, 2
      %vm2203 = vcmp.lt.s32.totalorder %v2182, 3
      %vm2204 = vcmp.lt.s32.totalorder %v2182, 4
      %v2205 = vsel %vm2201, %v2185, %v2188
      %v2206 = vsel %vm2204, %v2194, 2102212464
      %v2207 = vsel %vm2203, %v2191, %v2206
      %v2208 = vsel %vm2202, %v2205, %v2207
      %v2209 = vsel %vm2201, %v2188, %v2191
      %v2210 = vsel %vm2204, %v2197, 920167782
      %v2211 = vsel %vm2203, %v2194, %v2210
      %v2212 = vsel %vm2202, %v2209, %v2211
      %v2213 = vsel %vm2201, %v2191, %v2194
      %v2214 = vsel %vm2204, %v2200, 1326507024
      %v2215 = vsel %vm2203, %v2197, %v2214
      %v2216 = vsel %vm2202, %v2213, %v2215
      %v2217 = vshll.u32 %v2177, 8
      %v2218 = vmul.u32.u64.compose %v2217, %v2216
      %v2219 = vextract.low.u32 %v2218
      %v2220 = vextract.high.u32 %v2218
      %v2221 = vmul.u32.u64.compose %v2217, %v2212
      %v2222 = vextract.low.u32 %v2221
      %v2223 = vextract.high.u32 %v2221
      %v2224 = vmul.u32 %v2217, %v2208
      %v2225 = vadd.s32 %v2220, %v2222
      %vm2226 = vc.u32 %v2220, %v2222
      %v2227 = vadd.s32 %v2223, 1
      %v2228 = vsel %vm2226, %v2227, %v2223
      %v2229 = vadd.s32 %v2224, %v2228
      %v2230 = vadd.s32 %v2229, 536870912
      %v2231 = vshrl.u32 %v2230, 30
      %v2232 = vshll.u32 %v2231, 30
      %v2233 = vsub.s32 %v2229, %v2232
      %vm2234 = vcmp.lt.s32.totalorder %v2233, 0
      %v2235 = vsub.s32 0, %v2233
      %v2236 = vsel %vm2234, %v2235, %v2233
      %v2237 = vclz %v2236
      %v2238 = vsub.s32 %v2237, 2
      %vm2239 = vcmp.gt.s32.totalorder 0, %v2238
      %v2240 = vsel %vm2239, 0, %v2238
      %v2241 = vsub.s32 32, %v2240
      %v2242 = vshll.u32 %v2233, %v2240
      %v2243 = vshrl.u32 %v2225, %v2241
      %v2244 = vor.u32 %v2242, %v2243
      %v2245 = vsub.s32 4294967266, %v2240
      %v2246 = vadd.s32 %v2245, 127
      %v2247 = vshll.u32 %v2246, 23
      %v2248 = vor.u32 4788187, %v2247
      %v2249 = vand.u32 2147483647, %v2248
      %v2251 = vcvt.s32.f32 %v2244
      %v2252 = vmul.f32 %v2251, %v2249
      %v2253 = vxor.u32 %v2252, 2147483648
      %v2254 = vsel %vm2171, %v2253, %v2252
      %v2255 = vsub.s32 4, %v2231
      %v2256 = vsel %vm2171, %v2255, %v2231
      %v2257 = vsel %vm2170, %v806, %v2254
      %v2258 = vsel %vm2170, 0, %v2256
      %v2259 = vcosq.f32.pop %v2257
      %v2260 = vsinq.f32.pop %v2257
      %vm2261 = vweird.f32 %v806
      %v2262 = vadd.s32 %v2258, 3
      %v2263 = vand.u32 %v2262, 3
      %vm2264 = vcmp.lt.s32.totalorder %v2263, 2
      %vm2265 = vcmp.eq.s32.totalorder %v2263, 0
      %v2266 = vxor.u32 %v2260, 2147483648
      %v2267 = vsel %vm2265, %v2259, %v2266
      %vm2268 = vcmp.eq.s32.totalorder %v2263, 2
      %v2269 = vxor.u32 %v2259, 2147483648
      %v2270 = vsel %vm2268, %v2269, %v2260
      %v2271 = vsel %vm2264, %v2267, %v2270
      %v2272 = vsel %vm2261, nan, %v2271
      %v2273 = vand.u32 2147483647, %v811
      %vm2274 = vcmp.le.f32.partialorder %v2273, 0.7853982
      %vm2275 = vcmp.lt.s32.totalorder %v811, 0
      %v2276 = vand.u32 %v811, 2139095040
      %v2277 = vshrl.u32 %v2276, 23
      %v2278 = vsub.s32 %v2277, 127
      %v2279 = vand.u32 2147483647, %v811
      %v2280 = vand.u32 %v2279, 8388607
      %v2281 = vor.u32 %v2280, 8388608
      %v2282 = vsub.s32 0, %v2281
      %v2283 = vadd.s32 %v2278, 1
      %vm2284 = vcmp.gt.s32.totalorder %v2283, 0
      %v2285 = vsel %vm2284, %v2283, 0
      %v2286 = vshrl.u32 %v2285, 5
      %v2287 = vand.u32 %v2285, 31
      %v2288 = vsub.s32 32, %v2287
      %v2289 = vshrl.u32 683565275, %v2288
      %v2290 = vshll.u32 683565275, %v2287
      %v2291 = vshrl.u32 2475754826, %v2288
      %v2292 = vor.u32 %v2290, %v2291
      %v2293 = vshll.u32 2475754826, %v2287
      %v2294 = vshrl.u32 2131351028, %v2288
      %v2295 = vor.u32 %v2293, %v2294
      %v2296 = vshll.u32 2131351028, %v2287
      %v2297 = vshrl.u32 2102212464, %v2288
      %v2298 = vor.u32 %v2296, %v2297
      %v2299 = vshll.u32 2102212464, %v2287
      %v2300 = vshrl.u32 920167782, %v2288
      %v2301 = vor.u32 %v2299, %v2300
      %v2302 = vshll.u32 920167782, %v2287
      %v2303 = vshrl.u32 1326507024, %v2288
      %v2304 = vor.u32 %v2302, %v2303
      %vm2305 = vcmp.lt.s32.totalorder %v2286, 1
      %vm2306 = vcmp.lt.s32.totalorder %v2286, 2
      %vm2307 = vcmp.lt.s32.totalorder %v2286, 3
      %vm2308 = vcmp.lt.s32.totalorder %v2286, 4
      %v2309 = vsel %vm2305, %v2289, %v2292
      %v2310 = vsel %vm2308, %v2298, 2102212464
      %v2311 = vsel %vm2307, %v2295, %v2310
      %v2312 = vsel %vm2306, %v2309, %v2311
      %v2313 = vsel %vm2305, %v2292, %v2295
      %v2314 = vsel %vm2308, %v2301, 920167782
      %v2315 = vsel %vm2307, %v2298, %v2314
      %v2316 = vsel %vm2306, %v2313, %v2315
      %v2317 = vsel %vm2305, %v2295, %v2298
      %v2318 = vsel %vm2308, %v2304, 1326507024
      %v2319 = vsel %vm2307, %v2301, %v2318
      %v2320 = vsel %vm2306, %v2317, %v2319
      %v2321 = vshll.u32 %v2281, 8
      %v2322 = vmul.u32.u64.compose %v2321, %v2320
      %v2323 = vextract.low.u32 %v2322
      %v2324 = vextract.high.u32 %v2322
      %v2325 = vmul.u32.u64.compose %v2321, %v2316
      %v2326 = vextract.low.u32 %v2325
      %v2327 = vextract.high.u32 %v2325
      %v2328 = vmul.u32 %v2321, %v2312
      %v2329 = vadd.s32 %v2324, %v2326
      %vm2330 = vc.u32 %v2324, %v2326
      %v2331 = vadd.s32 %v2327, 1
      %v2332 = vsel %vm2330, %v2331, %v2327
      %v2333 = vadd.s32 %v2328, %v2332
      %v2334 = vadd.s32 %v2333, 536870912
      %v2335 = vshrl.u32 %v2334, 30
      %v2336 = vshll.u32 %v2335, 30
      %v2337 = vsub.s32 %v2333, %v2336
      %vm2338 = vcmp.lt.s32.totalorder %v2337, 0
      %v2339 = vsub.s32 0, %v2337
      %v2340 = vsel %vm2338, %v2339, %v2337
      %v2341 = vclz %v2340
      %v2342 = vsub.s32 %v2341, 2
      %vm2343 = vcmp.gt.s32.totalorder 0, %v2342
      %v2344 = vsel %vm2343, 0, %v2342
      %v2345 = vsub.s32 32, %v2344
      %v2346 = vshll.u32 %v2337, %v2344
      %v2347 = vshrl.u32 %v2329, %v2345
      %v2348 = vor.u32 %v2346, %v2347
      %v2349 = vsub.s32 4294967266, %v2344
      %v2350 = vadd.s32 %v2349, 127
      %v2351 = vshll.u32 %v2350, 23
      %v2352 = vor.u32 4788187, %v2351
      %v2353 = vand.u32 2147483647, %v2352
      %v2355 = vcvt.s32.f32 %v2348
      %v2356 = vmul.f32 %v2355, %v2353
      %v2357 = vxor.u32 %v2356, 2147483648
      %v2358 = vsel %vm2275, %v2357, %v2356
      %v2359 = vsub.s32 4, %v2335
      %v2360 = vsel %vm2275, %v2359, %v2335
      %v2361 = vsel %vm2274, %v811, %v2358
      %v2362 = vsel %vm2274, 0, %v2360
      %v2363 = vcosq.f32.pop %v2361
      %v2364 = vsinq.f32.pop %v2361
      %vm2365 = vweird.f32 %v811
      %v2366 = vadd.s32 %v2362, 3
      %v2367 = vand.u32 %v2366, 3
      %vm2368 = vcmp.lt.s32.totalorder %v2367, 2
      %vm2369 = vcmp.eq.s32.totalorder %v2367, 0
      %v2370 = vxor.u32 %v2364, 2147483648
      %v2371 = vsel %vm2369, %v2363, %v2370
      %vm2372 = vcmp.eq.s32.totalorder %v2367, 2
      %v2373 = vxor.u32 %v2363, 2147483648
      %v2374 = vsel %vm2372, %v2373, %v2364
      %v2375 = vsel %vm2368, %v2371, %v2374
      %v2376 = vsel %vm2365, nan, %v2375
      %v2377 = vand.u32 2147483647, %v814
      %vm2378 = vcmp.le.f32.partialorder %v2377, 0.7853982
      %vm2379 = vcmp.lt.s32.totalorder %v814, 0
      %v2380 = vand.u32 %v814, 2139095040
      %v2381 = vshrl.u32 %v2380, 23
      %v2382 = vsub.s32 %v2381, 127
      %v2383 = vand.u32 2147483647, %v814
      %v2384 = vand.u32 %v2383, 8388607
      %v2385 = vor.u32 %v2384, 8388608
      %v2386 = vsub.s32 0, %v2385
      %v2387 = vadd.s32 %v2382, 1
      %vm2388 = vcmp.gt.s32.totalorder %v2387, 0
      %v2389 = vsel %vm2388, %v2387, 0
      %v2390 = vshrl.u32 %v2389, 5
      %v2391 = vand.u32 %v2389, 31
      %v2392 = vsub.s32 32, %v2391
      %v2393 = vshrl.u32 683565275, %v2392
      %v2394 = vshll.u32 683565275, %v2391
      %v2395 = vshrl.u32 2475754826, %v2392
      %v2396 = vor.u32 %v2394, %v2395
      %v2397 = vshll.u32 2475754826, %v2391
      %v2398 = vshrl.u32 2131351028, %v2392
      %v2399 = vor.u32 %v2397, %v2398
      %v2400 = vshll.u32 2131351028, %v2391
      %v2401 = vshrl.u32 2102212464, %v2392
      %v2402 = vor.u32 %v2400, %v2401
      %v2403 = vshll.u32 2102212464, %v2391
      %v2404 = vshrl.u32 920167782, %v2392
      %v2405 = vor.u32 %v2403, %v2404
      %v2406 = vshll.u32 920167782, %v2391
      %v2407 = vshrl.u32 1326507024, %v2392
      %v2408 = vor.u32 %v2406, %v2407
      %vm2409 = vcmp.lt.s32.totalorder %v2390, 1
      %vm2410 = vcmp.lt.s32.totalorder %v2390, 2
      %vm2411 = vcmp.lt.s32.totalorder %v2390, 3
      %vm2412 = vcmp.lt.s32.totalorder %v2390, 4
      %v2413 = vsel %vm2409, %v2393, %v2396
      %v2414 = vsel %vm2412, %v2402, 2102212464
      %v2415 = vsel %vm2411, %v2399, %v2414
      %v2416 = vsel %vm2410, %v2413, %v2415
      %v2417 = vsel %vm2409, %v2396, %v2399
      %v2418 = vsel %vm2412, %v2405, 920167782
      %v2419 = vsel %vm2411, %v2402, %v2418
      %v2420 = vsel %vm2410, %v2417, %v2419
      %v2421 = vsel %vm2409, %v2399, %v2402
      %v2422 = vsel %vm2412, %v2408, 1326507024
      %v2423 = vsel %vm2411, %v2405, %v2422
      %v2424 = vsel %vm2410, %v2421, %v2423
      %v2425 = vshll.u32 %v2385, 8
      %v2426 = vmul.u32.u64.compose %v2425, %v2424
      %v2427 = vextract.low.u32 %v2426
      %v2428 = vextract.high.u32 %v2426
      %v2429 = vmul.u32.u64.compose %v2425, %v2420
      %v2430 = vextract.low.u32 %v2429
      %v2431 = vextract.high.u32 %v2429
      %v2432 = vmul.u32 %v2425, %v2416
      %v2433 = vadd.s32 %v2428, %v2430
      %vm2434 = vc.u32 %v2428, %v2430
      %v2435 = vadd.s32 %v2431, 1
      %v2436 = vsel %vm2434, %v2435, %v2431
      %v2437 = vadd.s32 %v2432, %v2436
      %v2438 = vadd.s32 %v2437, 536870912
      %v2439 = vshrl.u32 %v2438, 30
      %v2440 = vshll.u32 %v2439, 30
      %v2441 = vsub.s32 %v2437, %v2440
      %vm2442 = vcmp.lt.s32.totalorder %v2441, 0
      %v2443 = vsub.s32 0, %v2441
      %v2444 = vsel %vm2442, %v2443, %v2441
      %v2445 = vclz %v2444
      %v2446 = vsub.s32 %v2445, 2
      %vm2447 = vcmp.gt.s32.totalorder 0, %v2446
      %v2448 = vsel %vm2447, 0, %v2446
      %v2449 = vsub.s32 32, %v2448
      %v2450 = vshll.u32 %v2441, %v2448
      %v2451 = vshrl.u32 %v2433, %v2449
      %v2452 = vor.u32 %v2450, %v2451
      %v2453 = vsub.s32 4294967266, %v2448
      %v2454 = vadd.s32 %v2453, 127
      %v2455 = vshll.u32 %v2454, 23
      %v2456 = vor.u32 4788187, %v2455
      %v2457 = vand.u32 2147483647, %v2456
      %v2459 = vcvt.s32.f32 %v2452
      %v2460 = vmul.f32 %v2459, %v2457
      %v2461 = vxor.u32 %v2460, 2147483648
      %v2462 = vsel %vm2379, %v2461, %v2460
      %v2463 = vsub.s32 4, %v2439
      %v2464 = vsel %vm2379, %v2463, %v2439
      %v2465 = vsel %vm2378, %v814, %v2462
      %v2466 = vsel %vm2378, 0, %v2464
      %v2467 = vcosq.f32.pop %v2465
      %v2468 = vsinq.f32.pop %v2465
      %vm2469 = vweird.f32 %v814
      %v2470 = vadd.s32 %v2466, 3
      %v2471 = vand.u32 %v2470, 3
      %vm2472 = vcmp.lt.s32.totalorder %v2471, 2
      %vm2473 = vcmp.eq.s32.totalorder %v2471, 0
      %v2474 = vxor.u32 %v2468, 2147483648
      %v2475 = vsel %vm2473, %v2467, %v2474
      %vm2476 = vcmp.eq.s32.totalorder %v2471, 2
      %v2477 = vxor.u32 %v2467, 2147483648
      %v2478 = vsel %vm2476, %v2477, %v2468
      %v2479 = vsel %vm2472, %v2475, %v2478
      %v2480 = vsel %vm2469, nan, %v2479
      %v2481 = vpack.c.bf16 %v1024, %v920
      %v2482 = vpack.c.bf16 %v1232, %v1128
      %v2483 = vpack.c.bf16 %v1440, %v1336
      %v2484 = vpack.c.bf16 %v1648, %v1544
      %v2485 = vpack.c.bf16 %v1856, %v1752
      %v2486 = vpack.c.bf16 %v2064, %v1960
      %v2487 = vpack.c.bf16 %v2272, %v2168
      %v2488 = vpack.c.bf16 %v2480, %v2376
      %v2489 = vand.u32 2147483647, %v755
      %vm2490 = vcmp.le.f32.partialorder %v2489, 0.7853982
      %vm2491 = vcmp.lt.s32.totalorder %v755, 0
      %v2492 = vand.u32 %v755, 2139095040
      %v2493 = vshrl.u32 %v2492, 23
      %v2494 = vsub.s32 %v2493, 127
      %v2495 = vand.u32 2147483647, %v755
      %v2496 = vand.u32 %v2495, 8388607
      %v2497 = vor.u32 %v2496, 8388608
      %v2498 = vsub.s32 0, %v2497
      %v2499 = vadd.s32 %v2494, 1
      %vm2500 = vcmp.gt.s32.totalorder %v2499, 0
      %v2501 = vsel %vm2500, %v2499, 0
      %v2502 = vshrl.u32 %v2501, 5
      %v2503 = vand.u32 %v2501, 31
      %v2504 = vsub.s32 32, %v2503
      %v2505 = vshrl.u32 683565275, %v2504
      %v2506 = vshll.u32 683565275, %v2503
      %v2507 = vshrl.u32 2475754826, %v2504
      %v2508 = vor.u32 %v2506, %v2507
      %v2509 = vshll.u32 2475754826, %v2503
      %v2510 = vshrl.u32 2131351028, %v2504
      %v2511 = vor.u32 %v2509, %v2510
      %v2512 = vshll.u32 2131351028, %v2503
      %v2513 = vshrl.u32 2102212464, %v2504
      %v2514 = vor.u32 %v2512, %v2513
      %v2515 = vshll.u32 2102212464, %v2503
      %v2516 = vshrl.u32 920167782, %v2504
      %v2517 = vor.u32 %v2515, %v2516
      %v2518 = vshll.u32 920167782, %v2503
      %v2519 = vshrl.u32 1326507024, %v2504
      %v2520 = vor.u32 %v2518, %v2519
      %vm2521 = vcmp.lt.s32.totalorder %v2502, 1
      %vm2522 = vcmp.lt.s32.totalorder %v2502, 2
      %vm2523 = vcmp.lt.s32.totalorder %v2502, 3
      %vm2524 = vcmp.lt.s32.totalorder %v2502, 4
      %v2525 = vsel %vm2521, %v2505, %v2508
      %v2526 = vsel %vm2524, %v2514, 2102212464
      %v2527 = vsel %vm2523, %v2511, %v2526
      %v2528 = vsel %vm2522, %v2525, %v2527
      %v2529 = vsel %vm2521, %v2508, %v2511
      %v2530 = vsel %vm2524, %v2517, 920167782
      %v2531 = vsel %vm2523, %v2514, %v2530
      %v2532 = vsel %vm2522, %v2529, %v2531
      %v2533 = vsel %vm2521, %v2511, %v2514
      %v2534 = vsel %vm2524, %v2520, 1326507024
      %v2535 = vsel %vm2523, %v2517, %v2534
      %v2536 = vsel %vm2522, %v2533, %v2535
      %v2537 = vshll.u32 %v2497, 8
      %v2538 = vmul.u32.u64.compose %v2537, %v2536
      %v2539 = vextract.low.u32 %v2538
      %v2540 = vextract.high.u32 %v2538
      %v2541 = vmul.u32.u64.compose %v2537, %v2532
      %v2542 = vextract.low.u32 %v2541
      %v2543 = vextract.high.u32 %v2541
      %v2544 = vmul.u32 %v2537, %v2528
      %v2545 = vadd.s32 %v2540, %v2542
      %vm2546 = vc.u32 %v2540, %v2542
      %v2547 = vadd.s32 %v2543, 1
      %v2548 = vsel %vm2546, %v2547, %v2543
      %v2549 = vadd.s32 %v2544, %v2548
      %v2550 = vadd.s32 %v2549, 536870912
      %v2551 = vshrl.u32 %v2550, 30
      %v2552 = vshll.u32 %v2551, 30
      %v2553 = vsub.s32 %v2549, %v2552
      %vm2554 = vcmp.lt.s32.totalorder %v2553, 0
      %v2555 = vsub.s32 0, %v2553
      %v2556 = vsel %vm2554, %v2555, %v2553
      %v2557 = vclz %v2556
      %v2558 = vsub.s32 %v2557, 2
      %vm2559 = vcmp.gt.s32.totalorder 0, %v2558
      %v2560 = vsel %vm2559, 0, %v2558
      %v2561 = vsub.s32 32, %v2560
      %v2562 = vshll.u32 %v2553, %v2560
      %v2563 = vshrl.u32 %v2545, %v2561
      %v2564 = vor.u32 %v2562, %v2563
      %v2565 = vsub.s32 4294967266, %v2560
      %v2566 = vadd.s32 %v2565, 127
      %v2567 = vshll.u32 %v2566, 23
      %v2568 = vor.u32 4788187, %v2567
      %v2569 = vand.u32 2147483647, %v2568
      %v2571 = vcvt.s32.f32 %v2564
      %v2572 = vmul.f32 %v2571, %v2569
      %v2573 = vxor.u32 %v2572, 2147483648
      %v2574 = vsel %vm2491, %v2573, %v2572
      %v2575 = vsub.s32 4, %v2551
      %v2576 = vsel %vm2491, %v2575, %v2551
      %v2577 = vsel %vm2490, %v755, %v2574
      %v2578 = vsel %vm2490, 0, %v2576
      %v2579 = vcosq.f32.pop %v2577
      %v2580 = vsinq.f32.pop %v2577
      %vm2581 = vweird.f32 %v755
      %v2582 = vand.u32 %v2578, 3
      %vm2583 = vcmp.lt.s32.totalorder %v2582, 2
      %vm2584 = vcmp.eq.s32.totalorder %v2582, 0
      %v2585 = vxor.u32 %v2580, 2147483648
      %v2586 = vsel %vm2584, %v2579, %v2585
      %vm2587 = vcmp.eq.s32.totalorder %v2582, 2
      %v2588 = vxor.u32 %v2579, 2147483648
      %v2589 = vsel %vm2587, %v2588, %v2580
      %v2590 = vsel %vm2583, %v2586, %v2589
      %v2591 = vsel %vm2581, nan, %v2590
      %v2592 = vand.u32 2147483647, %v758
      %vm2593 = vcmp.le.f32.partialorder %v2592, 0.7853982
      %vm2594 = vcmp.lt.s32.totalorder %v758, 0
      %v2595 = vand.u32 %v758, 2139095040
      %v2596 = vshrl.u32 %v2595, 23
      %v2597 = vsub.s32 %v2596, 127
      %v2598 = vand.u32 2147483647, %v758
      %v2599 = vand.u32 %v2598, 8388607
      %v2600 = vor.u32 %v2599, 8388608
      %v2601 = vsub.s32 0, %v2600
      %v2602 = vadd.s32 %v2597, 1
      %vm2603 = vcmp.gt.s32.totalorder %v2602, 0
      %v2604 = vsel %vm2603, %v2602, 0
      %v2605 = vshrl.u32 %v2604, 5
      %v2606 = vand.u32 %v2604, 31
      %v2607 = vsub.s32 32, %v2606
      %v2608 = vshrl.u32 683565275, %v2607
      %v2609 = vshll.u32 683565275, %v2606
      %v2610 = vshrl.u32 2475754826, %v2607
      %v2611 = vor.u32 %v2609, %v2610
      %v2612 = vshll.u32 2475754826, %v2606
      %v2613 = vshrl.u32 2131351028, %v2607
      %v2614 = vor.u32 %v2612, %v2613
      %v2615 = vshll.u32 2131351028, %v2606
      %v2616 = vshrl.u32 2102212464, %v2607
      %v2617 = vor.u32 %v2615, %v2616
      %v2618 = vshll.u32 2102212464, %v2606
      %v2619 = vshrl.u32 920167782, %v2607
      %v2620 = vor.u32 %v2618, %v2619
      %v2621 = vshll.u32 920167782, %v2606
      %v2622 = vshrl.u32 1326507024, %v2607
      %v2623 = vor.u32 %v2621, %v2622
      %vm2624 = vcmp.lt.s32.totalorder %v2605, 1
      %vm2625 = vcmp.lt.s32.totalorder %v2605, 2
      %vm2626 = vcmp.lt.s32.totalorder %v2605, 3
      %vm2627 = vcmp.lt.s32.totalorder %v2605, 4
      %v2628 = vsel %vm2624, %v2608, %v2611
      %v2629 = vsel %vm2627, %v2617, 2102212464
      %v2630 = vsel %vm2626, %v2614, %v2629
      %v2631 = vsel %vm2625, %v2628, %v2630
      %v2632 = vsel %vm2624, %v2611, %v2614
      %v2633 = vsel %vm2627, %v2620, 920167782
      %v2634 = vsel %vm2626, %v2617, %v2633
      %v2635 = vsel %vm2625, %v2632, %v2634
      %v2636 = vsel %vm2624, %v2614, %v2617
      %v2637 = vsel %vm2627, %v2623, 1326507024
      %v2638 = vsel %vm2626, %v2620, %v2637
      %v2639 = vsel %vm2625, %v2636, %v2638
      %v2640 = vshll.u32 %v2600, 8
      %v2641 = vmul.u32.u64.compose %v2640, %v2639
      %v2642 = vextract.low.u32 %v2641
      %v2643 = vextract.high.u32 %v2641
      %v2644 = vmul.u32.u64.compose %v2640, %v2635
      %v2645 = vextract.low.u32 %v2644
      %v2646 = vextract.high.u32 %v2644
      %v2647 = vmul.u32 %v2640, %v2631
      %v2648 = vadd.s32 %v2643, %v2645
      %vm2649 = vc.u32 %v2643, %v2645
      %v2650 = vadd.s32 %v2646, 1
      %v2651 = vsel %vm2649, %v2650, %v2646
      %v2652 = vadd.s32 %v2647, %v2651
      %v2653 = vadd.s32 %v2652, 536870912
      %v2654 = vshrl.u32 %v2653, 30
      %v2655 = vshll.u32 %v2654, 30
      %v2656 = vsub.s32 %v2652, %v2655
      %vm2657 = vcmp.lt.s32.totalorder %v2656, 0
      %v2658 = vsub.s32 0, %v2656
      %v2659 = vsel %vm2657, %v2658, %v2656
      %v2660 = vclz %v2659
      %v2661 = vsub.s32 %v2660, 2
      %vm2662 = vcmp.gt.s32.totalorder 0, %v2661
      %v2663 = vsel %vm2662, 0, %v2661
      %v2664 = vsub.s32 32, %v2663
      %v2665 = vshll.u32 %v2656, %v2663
      %v2666 = vshrl.u32 %v2648, %v2664
      %v2667 = vor.u32 %v2665, %v2666
      %v2668 = vsub.s32 4294967266, %v2663
      %v2669 = vadd.s32 %v2668, 127
      %v2670 = vshll.u32 %v2669, 23
      %v2671 = vor.u32 4788187, %v2670
      %v2672 = vand.u32 2147483647, %v2671
      %v2674 = vcvt.s32.f32 %v2667
      %v2675 = vmul.f32 %v2674, %v2672
      %v2676 = vxor.u32 %v2675, 2147483648
      %v2677 = vsel %vm2594, %v2676, %v2675
      %v2678 = vsub.s32 4, %v2654
      %v2679 = vsel %vm2594, %v2678, %v2654
      %v2680 = vsel %vm2593, %v758, %v2677
      %v2681 = vsel %vm2593, 0, %v2679
      %v2682 = vcosq.f32.pop %v2680
      %v2683 = vsinq.f32.pop %v2680
      %vm2684 = vweird.f32 %v758
      %v2685 = vand.u32 %v2681, 3
      %vm2686 = vcmp.lt.s32.totalorder %v2685, 2
      %vm2687 = vcmp.eq.s32.totalorder %v2685, 0
      %v2688 = vxor.u32 %v2683, 2147483648
      %v2689 = vsel %vm2687, %v2682, %v2688
      %vm2690 = vcmp.eq.s32.totalorder %v2685, 2
      %v2691 = vxor.u32 %v2682, 2147483648
      %v2692 = vsel %vm2690, %v2691, %v2683
      %v2693 = vsel %vm2686, %v2689, %v2692
      %v2694 = vsel %vm2684, nan, %v2693
      %v2695 = vand.u32 2147483647, %v763
      %vm2696 = vcmp.le.f32.partialorder %v2695, 0.7853982
      %vm2697 = vcmp.lt.s32.totalorder %v763, 0
      %v2698 = vand.u32 %v763, 2139095040
      %v2699 = vshrl.u32 %v2698, 23
      %v2700 = vsub.s32 %v2699, 127
      %v2701 = vand.u32 2147483647, %v763
      %v2702 = vand.u32 %v2701, 8388607
      %v2703 = vor.u32 %v2702, 8388608
      %v2704 = vsub.s32 0, %v2703
      %v2705 = vadd.s32 %v2700, 1
      %vm2706 = vcmp.gt.s32.totalorder %v2705, 0
      %v2707 = vsel %vm2706, %v2705, 0
      %v2708 = vshrl.u32 %v2707, 5
      %v2709 = vand.u32 %v2707, 31
      %v2710 = vsub.s32 32, %v2709
      %v2711 = vshrl.u32 683565275, %v2710
      %v2712 = vshll.u32 683565275, %v2709
      %v2713 = vshrl.u32 2475754826, %v2710
      %v2714 = vor.u32 %v2712, %v2713
      %v2715 = vshll.u32 2475754826, %v2709
      %v2716 = vshrl.u32 2131351028, %v2710
      %v2717 = vor.u32 %v2715, %v2716
      %v2718 = vshll.u32 2131351028, %v2709
      %v2719 = vshrl.u32 2102212464, %v2710
      %v2720 = vor.u32 %v2718, %v2719
      %v2721 = vshll.u32 2102212464, %v2709
      %v2722 = vshrl.u32 920167782, %v2710
      %v2723 = vor.u32 %v2721, %v2722
      %v2724 = vshll.u32 920167782, %v2709
      %v2725 = vshrl.u32 1326507024, %v2710
      %v2726 = vor.u32 %v2724, %v2725
      %vm2727 = vcmp.lt.s32.totalorder %v2708, 1
      %vm2728 = vcmp.lt.s32.totalorder %v2708, 2
      %vm2729 = vcmp.lt.s32.totalorder %v2708, 3
      %vm2730 = vcmp.lt.s32.totalorder %v2708, 4
      %v2731 = vsel %vm2727, %v2711, %v2714
      %v2732 = vsel %vm2730, %v2720, 2102212464
      %v2733 = vsel %vm2729, %v2717, %v2732
      %v2734 = vsel %vm2728, %v2731, %v2733
      %v2735 = vsel %vm2727, %v2714, %v2717
      %v2736 = vsel %vm2730, %v2723, 920167782
      %v2737 = vsel %vm2729, %v2720, %v2736
      %v2738 = vsel %vm2728, %v2735, %v2737
      %v2739 = vsel %vm2727, %v2717, %v2720
      %v2740 = vsel %vm2730, %v2726, 1326507024
      %v2741 = vsel %vm2729, %v2723, %v2740
      %v2742 = vsel %vm2728, %v2739, %v2741
      %v2743 = vshll.u32 %v2703, 8
      %v2744 = vmul.u32.u64.compose %v2743, %v2742
      %v2745 = vextract.low.u32 %v2744
      %v2746 = vextract.high.u32 %v2744
      %v2747 = vmul.u32.u64.compose %v2743, %v2738
      %v2748 = vextract.low.u32 %v2747
      %v2749 = vextract.high.u32 %v2747
      %v2750 = vmul.u32 %v2743, %v2734
      %v2751 = vadd.s32 %v2746, %v2748
      %vm2752 = vc.u32 %v2746, %v2748
      %v2753 = vadd.s32 %v2749, 1
      %v2754 = vsel %vm2752, %v2753, %v2749
      %v2755 = vadd.s32 %v2750, %v2754
      %v2756 = vadd.s32 %v2755, 536870912
      %v2757 = vshrl.u32 %v2756, 30
      %v2758 = vshll.u32 %v2757, 30
      %v2759 = vsub.s32 %v2755, %v2758
      %vm2760 = vcmp.lt.s32.totalorder %v2759, 0
      %v2761 = vsub.s32 0, %v2759
      %v2762 = vsel %vm2760, %v2761, %v2759
      %v2763 = vclz %v2762
      %v2764 = vsub.s32 %v2763, 2
      %vm2765 = vcmp.gt.s32.totalorder 0, %v2764
      %v2766 = vsel %vm2765, 0, %v2764
      %v2767 = vsub.s32 32, %v2766
      %v2768 = vshll.u32 %v2759, %v2766
      %v2769 = vshrl.u32 %v2751, %v2767
      %v2770 = vor.u32 %v2768, %v2769
      %v2771 = vsub.s32 4294967266, %v2766
      %v2772 = vadd.s32 %v2771, 127
      %v2773 = vshll.u32 %v2772, 23
      %v2774 = vor.u32 4788187, %v2773
      %v2775 = vand.u32 2147483647, %v2774
      %v2777 = vcvt.s32.f32 %v2770
      %v2778 = vmul.f32 %v2777, %v2775
      %v2779 = vxor.u32 %v2778, 2147483648
      %v2780 = vsel %vm2697, %v2779, %v2778
      %v2781 = vsub.s32 4, %v2757
      %v2782 = vsel %vm2697, %v2781, %v2757
      %v2783 = vsel %vm2696, %v763, %v2780
      %v2784 = vsel %vm2696, 0, %v2782
      %v2785 = vcosq.f32.pop %v2783
      %v2786 = vsinq.f32.pop %v2783
      %vm2787 = vweird.f32 %v763
      %v2788 = vand.u32 %v2784, 3
      %vm2789 = vcmp.lt.s32.totalorder %v2788, 2
      %vm2790 = vcmp.eq.s32.totalorder %v2788, 0
      %v2791 = vxor.u32 %v2786, 2147483648
      %v2792 = vsel %vm2790, %v2785, %v2791
      %vm2793 = vcmp.eq.s32.totalorder %v2788, 2
      %v2794 = vxor.u32 %v2785, 2147483648
      %v2795 = vsel %vm2793, %v2794, %v2786
      %v2796 = vsel %vm2789, %v2792, %v2795
      %v2797 = vsel %vm2787, nan, %v2796
      %v2798 = vand.u32 2147483647, %v766
      %vm2799 = vcmp.le.f32.partialorder %v2798, 0.7853982
      %vm2800 = vcmp.lt.s32.totalorder %v766, 0
      %v2801 = vand.u32 %v766, 2139095040
      %v2802 = vshrl.u32 %v2801, 23
      %v2803 = vsub.s32 %v2802, 127
      %v2804 = vand.u32 2147483647, %v766
      %v2805 = vand.u32 %v2804, 8388607
      %v2806 = vor.u32 %v2805, 8388608
      %v2807 = vsub.s32 0, %v2806
      %v2808 = vadd.s32 %v2803, 1
      %vm2809 = vcmp.gt.s32.totalorder %v2808, 0
      %v2810 = vsel %vm2809, %v2808, 0
      %v2811 = vshrl.u32 %v2810, 5
      %v2812 = vand.u32 %v2810, 31
      %v2813 = vsub.s32 32, %v2812
      %v2814 = vshrl.u32 683565275, %v2813
      %v2815 = vshll.u32 683565275, %v2812
      %v2816 = vshrl.u32 2475754826, %v2813
      %v2817 = vor.u32 %v2815, %v2816
      %v2818 = vshll.u32 2475754826, %v2812
      %v2819 = vshrl.u32 2131351028, %v2813
      %v2820 = vor.u32 %v2818, %v2819
      %v2821 = vshll.u32 2131351028, %v2812
      %v2822 = vshrl.u32 2102212464, %v2813
      %v2823 = vor.u32 %v2821, %v2822
      %v2824 = vshll.u32 2102212464, %v2812
      %v2825 = vshrl.u32 920167782, %v2813
      %v2826 = vor.u32 %v2824, %v2825
      %v2827 = vshll.u32 920167782, %v2812
      %v2828 = vshrl.u32 1326507024, %v2813
      %v2829 = vor.u32 %v2827, %v2828
      %vm2830 = vcmp.lt.s32.totalorder %v2811, 1
      %vm2831 = vcmp.lt.s32.totalorder %v2811, 2
      %vm2832 = vcmp.lt.s32.totalorder %v2811, 3
      %vm2833 = vcmp.lt.s32.totalorder %v2811, 4
      %v2834 = vsel %vm2830, %v2814, %v2817
      %v2835 = vsel %vm2833, %v2823, 2102212464
      %v2836 = vsel %vm2832, %v2820, %v2835
      %v2837 = vsel %vm2831, %v2834, %v2836
      %v2838 = vsel %vm2830, %v2817, %v2820
      %v2839 = vsel %vm2833, %v2826, 920167782
      %v2840 = vsel %vm2832, %v2823, %v2839
      %v2841 = vsel %vm2831, %v2838, %v2840
      %v2842 = vsel %vm2830, %v2820, %v2823
      %v2843 = vsel %vm2833, %v2829, 1326507024
      %v2844 = vsel %vm2832, %v2826, %v2843
      %v2845 = vsel %vm2831, %v2842, %v2844
      %v2846 = vshll.u32 %v2806, 8
      %v2847 = vmul.u32.u64.compose %v2846, %v2845
      %v2848 = vextract.low.u32 %v2847
      %v2849 = vextract.high.u32 %v2847
      %v2850 = vmul.u32.u64.compose %v2846, %v2841
      %v2851 = vextract.low.u32 %v2850
      %v2852 = vextract.high.u32 %v2850
      %v2853 = vmul.u32 %v2846, %v2837
      %v2854 = vadd.s32 %v2849, %v2851
      %vm2855 = vc.u32 %v2849, %v2851
      %v2856 = vadd.s32 %v2852, 1
      %v2857 = vsel %vm2855, %v2856, %v2852
      %v2858 = vadd.s32 %v2853, %v2857
      %v2859 = vadd.s32 %v2858, 536870912
      %v2860 = vshrl.u32 %v2859, 30
      %v2861 = vshll.u32 %v2860, 30
      %v2862 = vsub.s32 %v2858, %v2861
      %vm2863 = vcmp.lt.s32.totalorder %v2862, 0
      %v2864 = vsub.s32 0, %v2862
      %v2865 = vsel %vm2863, %v2864, %v2862
      %v2866 = vclz %v2865
      %v2867 = vsub.s32 %v2866, 2
      %vm2868 = vcmp.gt.s32.totalorder 0, %v2867
      %v2869 = vsel %vm2868, 0, %v2867
      %v2870 = vsub.s32 32, %v2869
      %v2871 = vshll.u32 %v2862, %v2869
      %v2872 = vshrl.u32 %v2854, %v2870
      %v2873 = vor.u32 %v2871, %v2872
      %v2874 = vsub.s32 4294967266, %v2869
      %v2875 = vadd.s32 %v2874, 127
      %v2876 = vshll.u32 %v2875, 23
      %v2877 = vor.u32 4788187, %v2876
      %v2878 = vand.u32 2147483647, %v2877
      %v2880 = vcvt.s32.f32 %v2873
      %v2881 = vmul.f32 %v2880, %v2878
      %v2882 = vxor.u32 %v2881, 2147483648
      %v2883 = vsel %vm2800, %v2882, %v2881
      %v2884 = vsub.s32 4, %v2860
      %v2885 = vsel %vm2800, %v2884, %v2860
      %v2886 = vsel %vm2799, %v766, %v2883
      %v2887 = vsel %vm2799, 0, %v2885
      %v2888 = vcosq.f32.pop %v2886
      %v2889 = vsinq.f32.pop %v2886
      %vm2890 = vweird.f32 %v766
      %v2891 = vand.u32 %v2887, 3
      %vm2892 = vcmp.lt.s32.totalorder %v2891, 2
      %vm2893 = vcmp.eq.s32.totalorder %v2891, 0
      %v2894 = vxor.u32 %v2889, 2147483648
      %v2895 = vsel %vm2893, %v2888, %v2894
      %vm2896 = vcmp.eq.s32.totalorder %v2891, 2
      %v2897 = vxor.u32 %v2888, 2147483648
      %v2898 = vsel %vm2896, %v2897, %v2889
      %v2899 = vsel %vm2892, %v2895, %v2898
      %v2900 = vsel %vm2890, nan, %v2899
      %v2901 = vand.u32 2147483647, %v771
      %vm2902 = vcmp.le.f32.partialorder %v2901, 0.7853982
      %vm2903 = vcmp.lt.s32.totalorder %v771, 0
      %v2904 = vand.u32 %v771, 2139095040
      %v2905 = vshrl.u32 %v2904, 23
      %v2906 = vsub.s32 %v2905, 127
      %v2907 = vand.u32 2147483647, %v771
      %v2908 = vand.u32 %v2907, 8388607
      %v2909 = vor.u32 %v2908, 8388608
      %v2910 = vsub.s32 0, %v2909
      %v2911 = vadd.s32 %v2906, 1
      %vm2912 = vcmp.gt.s32.totalorder %v2911, 0
      %v2913 = vsel %vm2912, %v2911, 0
      %v2914 = vshrl.u32 %v2913, 5
      %v2915 = vand.u32 %v2913, 31
      %v2916 = vsub.s32 32, %v2915
      %v2917 = vshrl.u32 683565275, %v2916
      %v2918 = vshll.u32 683565275, %v2915
      %v2919 = vshrl.u32 2475754826, %v2916
      %v2920 = vor.u32 %v2918, %v2919
      %v2921 = vshll.u32 2475754826, %v2915
      %v2922 = vshrl.u32 2131351028, %v2916
      %v2923 = vor.u32 %v2921, %v2922
      %v2924 = vshll.u32 2131351028, %v2915
      %v2925 = vshrl.u32 2102212464, %v2916
      %v2926 = vor.u32 %v2924, %v2925
      %v2927 = vshll.u32 2102212464, %v2915
      %v2928 = vshrl.u32 920167782, %v2916
      %v2929 = vor.u32 %v2927, %v2928
      %v2930 = vshll.u32 920167782, %v2915
      %v2931 = vshrl.u32 1326507024, %v2916
      %v2932 = vor.u32 %v2930, %v2931
      %vm2933 = vcmp.lt.s32.totalorder %v2914, 1
      %vm2934 = vcmp.lt.s32.totalorder %v2914, 2
      %vm2935 = vcmp.lt.s32.totalorder %v2914, 3
      %vm2936 = vcmp.lt.s32.totalorder %v2914, 4
      %v2937 = vsel %vm2933, %v2917, %v2920
      %v2938 = vsel %vm2936, %v2926, 2102212464
      %v2939 = vsel %vm2935, %v2923, %v2938
      %v2940 = vsel %vm2934, %v2937, %v2939
      %v2941 = vsel %vm2933, %v2920, %v2923
      %v2942 = vsel %vm2936, %v2929, 920167782
      %v2943 = vsel %vm2935, %v2926, %v2942
      %v2944 = vsel %vm2934, %v2941, %v2943
      %v2945 = vsel %vm2933, %v2923, %v2926
      %v2946 = vsel %vm2936, %v2932, 1326507024
      %v2947 = vsel %vm2935, %v2929, %v2946
      %v2948 = vsel %vm2934, %v2945, %v2947
      %v2949 = vshll.u32 %v2909, 8
      %v2950 = vmul.u32.u64.compose %v2949, %v2948
      %v2951 = vextract.low.u32 %v2950
      %v2952 = vextract.high.u32 %v2950
      %v2953 = vmul.u32.u64.compose %v2949, %v2944
      %v2954 = vextract.low.u32 %v2953
      %v2955 = vextract.high.u32 %v2953
      %v2956 = vmul.u32 %v2949, %v2940
      %v2957 = vadd.s32 %v2952, %v2954
      %vm2958 = vc.u32 %v2952, %v2954
      %v2959 = vadd.s32 %v2955, 1
      %v2960 = vsel %vm2958, %v2959, %v2955
      %v2961 = vadd.s32 %v2956, %v2960
      %v2962 = vadd.s32 %v2961, 536870912
      %v2963 = vshrl.u32 %v2962, 30
      %v2964 = vshll.u32 %v2963, 30
      %v2965 = vsub.s32 %v2961, %v2964
      %vm2966 = vcmp.lt.s32.totalorder %v2965, 0
      %v2967 = vsub.s32 0, %v2965
      %v2968 = vsel %vm2966, %v2967, %v2965
      %v2969 = vclz %v2968
      %v2970 = vsub.s32 %v2969, 2
      %vm2971 = vcmp.gt.s32.totalorder 0, %v2970
      %v2972 = vsel %vm2971, 0, %v2970
      %v2973 = vsub.s32 32, %v2972
      %v2974 = vshll.u32 %v2965, %v2972
      %v2975 = vshrl.u32 %v2957, %v2973
      %v2976 = vor.u32 %v2974, %v2975
      %v2977 = vsub.s32 4294967266, %v2972
      %v2978 = vadd.s32 %v2977, 127
      %v2979 = vshll.u32 %v2978, 23
      %v2980 = vor.u32 4788187, %v2979
      %v2981 = vand.u32 2147483647, %v2980
      %v2983 = vcvt.s32.f32 %v2976
      %v2984 = vmul.f32 %v2983, %v2981
      %v2985 = vxor.u32 %v2984, 2147483648
      %v2986 = vsel %vm2903, %v2985, %v2984
      %v2987 = vsub.s32 4, %v2963
      %v2988 = vsel %vm2903, %v2987, %v2963
      %v2989 = vsel %vm2902, %v771, %v2986
      %v2990 = vsel %vm2902, 0, %v2988
      %v2991 = vcosq.f32.pop %v2989
      %v2992 = vsinq.f32.pop %v2989
      %vm2993 = vweird.f32 %v771
      %v2994 = vand.u32 %v2990, 3
      %vm2995 = vcmp.lt.s32.totalorder %v2994, 2
      %vm2996 = vcmp.eq.s32.totalorder %v2994, 0
      %v2997 = vxor.u32 %v2992, 2147483648
      %v2998 = vsel %vm2996, %v2991, %v2997
      %vm2999 = vcmp.eq.s32.totalorder %v2994, 2
      %v3000 = vxor.u32 %v2991, 2147483648
      %v3001 = vsel %vm2999, %v3000, %v2992
      %v3002 = vsel %vm2995, %v2998, %v3001
      %v3003 = vsel %vm2993, nan, %v3002
      %v3004 = vand.u32 2147483647, %v774
      %vm3005 = vcmp.le.f32.partialorder %v3004, 0.7853982
      %vm3006 = vcmp.lt.s32.totalorder %v774, 0
      %v3007 = vand.u32 %v774, 2139095040
      %v3008 = vshrl.u32 %v3007, 23
      %v3009 = vsub.s32 %v3008, 127
      %v3010 = vand.u32 2147483647, %v774
      %v3011 = vand.u32 %v3010, 8388607
      %v3012 = vor.u32 %v3011, 8388608
      %v3013 = vsub.s32 0, %v3012
      %v3014 = vadd.s32 %v3009, 1
      %vm3015 = vcmp.gt.s32.totalorder %v3014, 0
      %v3016 = vsel %vm3015, %v3014, 0
      %v3017 = vshrl.u32 %v3016, 5
      %v3018 = vand.u32 %v3016, 31
      %v3019 = vsub.s32 32, %v3018
      %v3020 = vshrl.u32 683565275, %v3019
      %v3021 = vshll.u32 683565275, %v3018
      %v3022 = vshrl.u32 2475754826, %v3019
      %v3023 = vor.u32 %v3021, %v3022
      %v3024 = vshll.u32 2475754826, %v3018
      %v3025 = vshrl.u32 2131351028, %v3019
      %v3026 = vor.u32 %v3024, %v3025
      %v3027 = vshll.u32 2131351028, %v3018
      %v3028 = vshrl.u32 2102212464, %v3019
      %v3029 = vor.u32 %v3027, %v3028
      %v3030 = vshll.u32 2102212464, %v3018
      %v3031 = vshrl.u32 920167782, %v3019
      %v3032 = vor.u32 %v3030, %v3031
      %v3033 = vshll.u32 920167782, %v3018
      %v3034 = vshrl.u32 1326507024, %v3019
      %v3035 = vor.u32 %v3033, %v3034
      %vm3036 = vcmp.lt.s32.totalorder %v3017, 1
      %vm3037 = vcmp.lt.s32.totalorder %v3017, 2
      %vm3038 = vcmp.lt.s32.totalorder %v3017, 3
      %vm3039 = vcmp.lt.s32.totalorder %v3017, 4
      %v3040 = vsel %vm3036, %v3020, %v3023
      %v3041 = vsel %vm3039, %v3029, 2102212464
      %v3042 = vsel %vm3038, %v3026, %v3041
      %v3043 = vsel %vm3037, %v3040, %v3042
      %v3044 = vsel %vm3036, %v3023, %v3026
      %v3045 = vsel %vm3039, %v3032, 920167782
      %v3046 = vsel %vm3038, %v3029, %v3045
      %v3047 = vsel %vm3037, %v3044, %v3046
      %v3048 = vsel %vm3036, %v3026, %v3029
      %v3049 = vsel %vm3039, %v3035, 1326507024
      %v3050 = vsel %vm3038, %v3032, %v3049
      %v3051 = vsel %vm3037, %v3048, %v3050
      %v3052 = vshll.u32 %v3012, 8
      %v3053 = vmul.u32.u64.compose %v3052, %v3051
      %v3054 = vextract.low.u32 %v3053
      %v3055 = vextract.high.u32 %v3053
      %v3056 = vmul.u32.u64.compose %v3052, %v3047
      %v3057 = vextract.low.u32 %v3056
      %v3058 = vextract.high.u32 %v3056
      %v3059 = vmul.u32 %v3052, %v3043
      %v3060 = vadd.s32 %v3055, %v3057
      %vm3061 = vc.u32 %v3055, %v3057
      %v3062 = vadd.s32 %v3058, 1
      %v3063 = vsel %vm3061, %v3062, %v3058
      %v3064 = vadd.s32 %v3059, %v3063
      %v3065 = vadd.s32 %v3064, 536870912
      %v3066 = vshrl.u32 %v3065, 30
      %v3067 = vshll.u32 %v3066, 30
      %v3068 = vsub.s32 %v3064, %v3067
      %vm3069 = vcmp.lt.s32.totalorder %v3068, 0
      %v3070 = vsub.s32 0, %v3068
      %v3071 = vsel %vm3069, %v3070, %v3068
      %v3072 = vclz %v3071
      %v3073 = vsub.s32 %v3072, 2
      %vm3074 = vcmp.gt.s32.totalorder 0, %v3073
      %v3075 = vsel %vm3074, 0, %v3073
      %v3076 = vsub.s32 32, %v3075
      %v3077 = vshll.u32 %v3068, %v3075
      %v3078 = vshrl.u32 %v3060, %v3076
      %v3079 = vor.u32 %v3077, %v3078
      %v3080 = vsub.s32 4294967266, %v3075
      %v3081 = vadd.s32 %v3080, 127
      %v3082 = vshll.u32 %v3081, 23
      %v3083 = vor.u32 4788187, %v3082
      %v3084 = vand.u32 2147483647, %v3083
      %v3086 = vcvt.s32.f32 %v3079
      %v3087 = vmul.f32 %v3086, %v3084
      %v3088 = vxor.u32 %v3087, 2147483648
      %v3089 = vsel %vm3006, %v3088, %v3087
      %v3090 = vsub.s32 4, %v3066
      %v3091 = vsel %vm3006, %v3090, %v3066
      %v3092 = vsel %vm3005, %v774, %v3089
      %v3093 = vsel %vm3005, 0, %v3091
      %v3094 = vcosq.f32.pop %v3092
      %v3095 = vsinq.f32.pop %v3092
      %vm3096 = vweird.f32 %v774
      %v3097 = vand.u32 %v3093, 3
      %vm3098 = vcmp.lt.s32.totalorder %v3097, 2
      %vm3099 = vcmp.eq.s32.totalorder %v3097, 0
      %v3100 = vxor.u32 %v3095, 2147483648
      %v3101 = vsel %vm3099, %v3094, %v3100
      %vm3102 = vcmp.eq.s32.totalorder %v3097, 2
      %v3103 = vxor.u32 %v3094, 2147483648
      %v3104 = vsel %vm3102, %v3103, %v3095
      %v3105 = vsel %vm3098, %v3101, %v3104
      %v3106 = vsel %vm3096, nan, %v3105
      %v3107 = vand.u32 2147483647, %v779
      %vm3108 = vcmp.le.f32.partialorder %v3107, 0.7853982
      %vm3109 = vcmp.lt.s32.totalorder %v779, 0
      %v3110 = vand.u32 %v779, 2139095040
      %v3111 = vshrl.u32 %v3110, 23
      %v3112 = vsub.s32 %v3111, 127
      %v3113 = vand.u32 2147483647, %v779
      %v3114 = vand.u32 %v3113, 8388607
      %v3115 = vor.u32 %v3114, 8388608
      %v3116 = vsub.s32 0, %v3115
      %v3117 = vadd.s32 %v3112, 1
      %vm3118 = vcmp.gt.s32.totalorder %v3117, 0
      %v3119 = vsel %vm3118, %v3117, 0
      %v3120 = vshrl.u32 %v3119, 5
      %v3121 = vand.u32 %v3119, 31
      %v3122 = vsub.s32 32, %v3121
      %v3123 = vshrl.u32 683565275, %v3122
      %v3124 = vshll.u32 683565275, %v3121
      %v3125 = vshrl.u32 2475754826, %v3122
      %v3126 = vor.u32 %v3124, %v3125
      %v3127 = vshll.u32 2475754826, %v3121
      %v3128 = vshrl.u32 2131351028, %v3122
      %v3129 = vor.u32 %v3127, %v3128
      %v3130 = vshll.u32 2131351028, %v3121
      %v3131 = vshrl.u32 2102212464, %v3122
      %v3132 = vor.u32 %v3130, %v3131
      %v3133 = vshll.u32 2102212464, %v3121
      %v3134 = vshrl.u32 920167782, %v3122
      %v3135 = vor.u32 %v3133, %v3134
      %v3136 = vshll.u32 920167782, %v3121
      %v3137 = vshrl.u32 1326507024, %v3122
      %v3138 = vor.u32 %v3136, %v3137
      %vm3139 = vcmp.lt.s32.totalorder %v3120, 1
      %vm3140 = vcmp.lt.s32.totalorder %v3120, 2
      %vm3141 = vcmp.lt.s32.totalorder %v3120, 3
      %vm3142 = vcmp.lt.s32.totalorder %v3120, 4
      %v3143 = vsel %vm3139, %v3123, %v3126
      %v3144 = vsel %vm3142, %v3132, 2102212464
      %v3145 = vsel %vm3141, %v3129, %v3144
      %v3146 = vsel %vm3140, %v3143, %v3145
      %v3147 = vsel %vm3139, %v3126, %v3129
      %v3148 = vsel %vm3142, %v3135, 920167782
      %v3149 = vsel %vm3141, %v3132, %v3148
      %v3150 = vsel %vm3140, %v3147, %v3149
      %v3151 = vsel %vm3139, %v3129, %v3132
      %v3152 = vsel %vm3142, %v3138, 1326507024
      %v3153 = vsel %vm3141, %v3135, %v3152
      %v3154 = vsel %vm3140, %v3151, %v3153
      %v3155 = vshll.u32 %v3115, 8
      %v3156 = vmul.u32.u64.compose %v3155, %v3154
      %v3157 = vextract.low.u32 %v3156
      %v3158 = vextract.high.u32 %v3156
      %v3159 = vmul.u32.u64.compose %v3155, %v3150
      %v3160 = vextract.low.u32 %v3159
      %v3161 = vextract.high.u32 %v3159
      %v3162 = vmul.u32 %v3155, %v3146
      %v3163 = vadd.s32 %v3158, %v3160
      %vm3164 = vc.u32 %v3158, %v3160
      %v3165 = vadd.s32 %v3161, 1
      %v3166 = vsel %vm3164, %v3165, %v3161
      %v3167 = vadd.s32 %v3162, %v3166
      %v3168 = vadd.s32 %v3167, 536870912
      %v3169 = vshrl.u32 %v3168, 30
      %v3170 = vshll.u32 %v3169, 30
      %v3171 = vsub.s32 %v3167, %v3170
      %vm3172 = vcmp.lt.s32.totalorder %v3171, 0
      %v3173 = vsub.s32 0, %v3171
      %v3174 = vsel %vm3172, %v3173, %v3171
      %v3175 = vclz %v3174
      %v3176 = vsub.s32 %v3175, 2
      %vm3177 = vcmp.gt.s32.totalorder 0, %v3176
      %v3178 = vsel %vm3177, 0, %v3176
      %v3179 = vsub.s32 32, %v3178
      %v3180 = vshll.u32 %v3171, %v3178
      %v3181 = vshrl.u32 %v3163, %v3179
      %v3182 = vor.u32 %v3180, %v3181
      %v3183 = vsub.s32 4294967266, %v3178
      %v3184 = vadd.s32 %v3183, 127
      %v3185 = vshll.u32 %v3184, 23
      %v3186 = vor.u32 4788187, %v3185
      %v3187 = vand.u32 2147483647, %v3186
      %v3189 = vcvt.s32.f32 %v3182
      %v3190 = vmul.f32 %v3189, %v3187
      %v3191 = vxor.u32 %v3190, 2147483648
      %v3192 = vsel %vm3109, %v3191, %v3190
      %v3193 = vsub.s32 4, %v3169
      %v3194 = vsel %vm3109, %v3193, %v3169
      %v3195 = vsel %vm3108, %v779, %v3192
      %v3196 = vsel %vm3108, 0, %v3194
      %v3197 = vcosq.f32.pop %v3195
      %v3198 = vsinq.f32.pop %v3195
      %vm3199 = vweird.f32 %v779
      %v3200 = vand.u32 %v3196, 3
      %vm3201 = vcmp.lt.s32.totalorder %v3200, 2
      %vm3202 = vcmp.eq.s32.totalorder %v3200, 0
      %v3203 = vxor.u32 %v3198, 2147483648
      %v3204 = vsel %vm3202, %v3197, %v3203
      %vm3205 = vcmp.eq.s32.totalorder %v3200, 2
      %v3206 = vxor.u32 %v3197, 2147483648
      %v3207 = vsel %vm3205, %v3206, %v3198
      %v3208 = vsel %vm3201, %v3204, %v3207
      %v3209 = vsel %vm3199, nan, %v3208
      %v3210 = vand.u32 2147483647, %v782
      %vm3211 = vcmp.le.f32.partialorder %v3210, 0.7853982
      %vm3212 = vcmp.lt.s32.totalorder %v782, 0
      %v3213 = vand.u32 %v782, 2139095040
      %v3214 = vshrl.u32 %v3213, 23
      %v3215 = vsub.s32 %v3214, 127
      %v3216 = vand.u32 2147483647, %v782
      %v3217 = vand.u32 %v3216, 8388607
      %v3218 = vor.u32 %v3217, 8388608
      %v3219 = vsub.s32 0, %v3218
      %v3220 = vadd.s32 %v3215, 1
      %vm3221 = vcmp.gt.s32.totalorder %v3220, 0
      %v3222 = vsel %vm3221, %v3220, 0
      %v3223 = vshrl.u32 %v3222, 5
      %v3224 = vand.u32 %v3222, 31
      %v3225 = vsub.s32 32, %v3224
      %v3226 = vshrl.u32 683565275, %v3225
      %v3227 = vshll.u32 683565275, %v3224
      %v3228 = vshrl.u32 2475754826, %v3225
      %v3229 = vor.u32 %v3227, %v3228
      %v3230 = vshll.u32 2475754826, %v3224
      %v3231 = vshrl.u32 2131351028, %v3225
      %v3232 = vor.u32 %v3230, %v3231
      %v3233 = vshll.u32 2131351028, %v3224
      %v3234 = vshrl.u32 2102212464, %v3225
      %v3235 = vor.u32 %v3233, %v3234
      %v3236 = vshll.u32 2102212464, %v3224
      %v3237 = vshrl.u32 920167782, %v3225
      %v3238 = vor.u32 %v3236, %v3237
      %v3239 = vshll.u32 920167782, %v3224
      %v3240 = vshrl.u32 1326507024, %v3225
      %v3241 = vor.u32 %v3239, %v3240
      %vm3242 = vcmp.lt.s32.totalorder %v3223, 1
      %vm3243 = vcmp.lt.s32.totalorder %v3223, 2
      %vm3244 = vcmp.lt.s32.totalorder %v3223, 3
      %vm3245 = vcmp.lt.s32.totalorder %v3223, 4
      %v3246 = vsel %vm3242, %v3226, %v3229
      %v3247 = vsel %vm3245, %v3235, 2102212464
      %v3248 = vsel %vm3244, %v3232, %v3247
      %v3249 = vsel %vm3243, %v3246, %v3248
      %v3250 = vsel %vm3242, %v3229, %v3232
      %v3251 = vsel %vm3245, %v3238, 920167782
      %v3252 = vsel %vm3244, %v3235, %v3251
      %v3253 = vsel %vm3243, %v3250, %v3252
      %v3254 = vsel %vm3242, %v3232, %v3235
      %v3255 = vsel %vm3245, %v3241, 1326507024
      %v3256 = vsel %vm3244, %v3238, %v3255
      %v3257 = vsel %vm3243, %v3254, %v3256
      %v3258 = vshll.u32 %v3218, 8
      %v3259 = vmul.u32.u64.compose %v3258, %v3257
      %v3260 = vextract.low.u32 %v3259
      %v3261 = vextract.high.u32 %v3259
      %v3262 = vmul.u32.u64.compose %v3258, %v3253
      %v3263 = vextract.low.u32 %v3262
      %v3264 = vextract.high.u32 %v3262
      %v3265 = vmul.u32 %v3258, %v3249
      %v3266 = vadd.s32 %v3261, %v3263
      %vm3267 = vc.u32 %v3261, %v3263
      %v3268 = vadd.s32 %v3264, 1
      %v3269 = vsel %vm3267, %v3268, %v3264
      %v3270 = vadd.s32 %v3265, %v3269
      %v3271 = vadd.s32 %v3270, 536870912
      %v3272 = vshrl.u32 %v3271, 30
      %v3273 = vshll.u32 %v3272, 30
      %v3274 = vsub.s32 %v3270, %v3273
      %vm3275 = vcmp.lt.s32.totalorder %v3274, 0
      %v3276 = vsub.s32 0, %v3274
      %v3277 = vsel %vm3275, %v3276, %v3274
      %v3278 = vclz %v3277
      %v3279 = vsub.s32 %v3278, 2
      %vm3280 = vcmp.gt.s32.totalorder 0, %v3279
      %v3281 = vsel %vm3280, 0, %v3279
      %v3282 = vsub.s32 32, %v3281
      %v3283 = vshll.u32 %v3274, %v3281
      %v3284 = vshrl.u32 %v3266, %v3282
      %v3285 = vor.u32 %v3283, %v3284
      %v3286 = vsub.s32 4294967266, %v3281
      %v3287 = vadd.s32 %v3286, 127
      %v3288 = vshll.u32 %v3287, 23
      %v3289 = vor.u32 4788187, %v3288
      %v3290 = vand.u32 2147483647, %v3289
      %v3292 = vcvt.s32.f32 %v3285
      %v3293 = vmul.f32 %v3292, %v3290
      %v3294 = vxor.u32 %v3293, 2147483648
      %v3295 = vsel %vm3212, %v3294, %v3293
      %v3296 = vsub.s32 4, %v3272
      %v3297 = vsel %vm3212, %v3296, %v3272
      %v3298 = vsel %vm3211, %v782, %v3295
      %v3299 = vsel %vm3211, 0, %v3297
      %v3300 = vcosq.f32.pop %v3298
      %v3301 = vsinq.f32.pop %v3298
      %vm3302 = vweird.f32 %v782
      %v3303 = vand.u32 %v3299, 3
      %vm3304 = vcmp.lt.s32.totalorder %v3303, 2
      %vm3305 = vcmp.eq.s32.totalorder %v3303, 0
      %v3306 = vxor.u32 %v3301, 2147483648
      %v3307 = vsel %vm3305, %v3300, %v3306
      %vm3308 = vcmp.eq.s32.totalorder %v3303, 2
      %v3309 = vxor.u32 %v3300, 2147483648
      %v3310 = vsel %vm3308, %v3309, %v3301
      %v3311 = vsel %vm3304, %v3307, %v3310
      %v3312 = vsel %vm3302, nan, %v3311
      %v3313 = vand.u32 2147483647, %v787
      %vm3314 = vcmp.le.f32.partialorder %v3313, 0.7853982
      %vm3315 = vcmp.lt.s32.totalorder %v787, 0
      %v3316 = vand.u32 %v787, 2139095040
      %v3317 = vshrl.u32 %v3316, 23
      %v3318 = vsub.s32 %v3317, 127
      %v3319 = vand.u32 2147483647, %v787
      %v3320 = vand.u32 %v3319, 8388607
      %v3321 = vor.u32 %v3320, 8388608
      %v3322 = vsub.s32 0, %v3321
      %v3323 = vadd.s32 %v3318, 1
      %vm3324 = vcmp.gt.s32.totalorder %v3323, 0
      %v3325 = vsel %vm3324, %v3323, 0
      %v3326 = vshrl.u32 %v3325, 5
      %v3327 = vand.u32 %v3325, 31
      %v3328 = vsub.s32 32, %v3327
      %v3329 = vshrl.u32 683565275, %v3328
      %v3330 = vshll.u32 683565275, %v3327
      %v3331 = vshrl.u32 2475754826, %v3328
      %v3332 = vor.u32 %v3330, %v3331
      %v3333 = vshll.u32 2475754826, %v3327
      %v3334 = vshrl.u32 2131351028, %v3328
      %v3335 = vor.u32 %v3333, %v3334
      %v3336 = vshll.u32 2131351028, %v3327
      %v3337 = vshrl.u32 2102212464, %v3328
      %v3338 = vor.u32 %v3336, %v3337
      %v3339 = vshll.u32 2102212464, %v3327
      %v3340 = vshrl.u32 920167782, %v3328
      %v3341 = vor.u32 %v3339, %v3340
      %v3342 = vshll.u32 920167782, %v3327
      %v3343 = vshrl.u32 1326507024, %v3328
      %v3344 = vor.u32 %v3342, %v3343
      %vm3345 = vcmp.lt.s32.totalorder %v3326, 1
      %vm3346 = vcmp.lt.s32.totalorder %v3326, 2
      %vm3347 = vcmp.lt.s32.totalorder %v3326, 3
      %vm3348 = vcmp.lt.s32.totalorder %v3326, 4
      %v3349 = vsel %vm3345, %v3329, %v3332
      %v3350 = vsel %vm3348, %v3338, 2102212464
      %v3351 = vsel %vm3347, %v3335, %v3350
      %v3352 = vsel %vm3346, %v3349, %v3351
      %v3353 = vsel %vm3345, %v3332, %v3335
      %v3354 = vsel %vm3348, %v3341, 920167782
      %v3355 = vsel %vm3347, %v3338, %v3354
      %v3356 = vsel %vm3346, %v3353, %v3355
      %v3357 = vsel %vm3345, %v3335, %v3338
      %v3358 = vsel %vm3348, %v3344, 1326507024
      %v3359 = vsel %vm3347, %v3341, %v3358
      %v3360 = vsel %vm3346, %v3357, %v3359
      %v3361 = vshll.u32 %v3321, 8
      %v3362 = vmul.u32.u64.compose %v3361, %v3360
      %v3363 = vextract.low.u32 %v3362
      %v3364 = vextract.high.u32 %v3362
      %v3365 = vmul.u32.u64.compose %v3361, %v3356
      %v3366 = vextract.low.u32 %v3365
      %v3367 = vextract.high.u32 %v3365
      %v3368 = vmul.u32 %v3361, %v3352
      %v3369 = vadd.s32 %v3364, %v3366
      %vm3370 = vc.u32 %v3364, %v3366
      %v3371 = vadd.s32 %v3367, 1
      %v3372 = vsel %vm3370, %v3371, %v3367
      %v3373 = vadd.s32 %v3368, %v3372
      %v3374 = vadd.s32 %v3373, 536870912
      %v3375 = vshrl.u32 %v3374, 30
      %v3376 = vshll.u32 %v3375, 30
      %v3377 = vsub.s32 %v3373, %v3376
      %vm3378 = vcmp.lt.s32.totalorder %v3377, 0
      %v3379 = vsub.s32 0, %v3377
      %v3380 = vsel %vm3378, %v3379, %v3377
      %v3381 = vclz %v3380
      %v3382 = vsub.s32 %v3381, 2
      %vm3383 = vcmp.gt.s32.totalorder 0, %v3382
      %v3384 = vsel %vm3383, 0, %v3382
      %v3385 = vsub.s32 32, %v3384
      %v3386 = vshll.u32 %v3377, %v3384
      %v3387 = vshrl.u32 %v3369, %v3385
      %v3388 = vor.u32 %v3386, %v3387
      %v3389 = vsub.s32 4294967266, %v3384
      %v3390 = vadd.s32 %v3389, 127
      %v3391 = vshll.u32 %v3390, 23
      %v3392 = vor.u32 4788187, %v3391
      %v3393 = vand.u32 2147483647, %v3392
      %v3395 = vcvt.s32.f32 %v3388
      %v3396 = vmul.f32 %v3395, %v3393
      %v3397 = vxor.u32 %v3396, 2147483648
      %v3398 = vsel %vm3315, %v3397, %v3396
      %v3399 = vsub.s32 4, %v3375
      %v3400 = vsel %vm3315, %v3399, %v3375
      %v3401 = vsel %vm3314, %v787, %v3398
      %v3402 = vsel %vm3314, 0, %v3400
      %v3403 = vcosq.f32.pop %v3401
      %v3404 = vsinq.f32.pop %v3401
      %vm3405 = vweird.f32 %v787
      %v3406 = vand.u32 %v3402, 3
      %vm3407 = vcmp.lt.s32.totalorder %v3406, 2
      %vm3408 = vcmp.eq.s32.totalorder %v3406, 0
      %v3409 = vxor.u32 %v3404, 2147483648
      %v3410 = vsel %vm3408, %v3403, %v3409
      %vm3411 = vcmp.eq.s32.totalorder %v3406, 2
      %v3412 = vxor.u32 %v3403, 2147483648
      %v3413 = vsel %vm3411, %v3412, %v3404
      %v3414 = vsel %vm3407, %v3410, %v3413
      %v3415 = vsel %vm3405, nan, %v3414
      %v3416 = vand.u32 2147483647, %v790
      %vm3417 = vcmp.le.f32.partialorder %v3416, 0.7853982
      %vm3418 = vcmp.lt.s32.totalorder %v790, 0
      %v3419 = vand.u32 %v790, 2139095040
      %v3420 = vshrl.u32 %v3419, 23
      %v3421 = vsub.s32 %v3420, 127
      %v3422 = vand.u32 2147483647, %v790
      %v3423 = vand.u32 %v3422, 8388607
      %v3424 = vor.u32 %v3423, 8388608
      %v3425 = vsub.s32 0, %v3424
      %v3426 = vadd.s32 %v3421, 1
      %vm3427 = vcmp.gt.s32.totalorder %v3426, 0
      %v3428 = vsel %vm3427, %v3426, 0
      %v3429 = vshrl.u32 %v3428, 5
      %v3430 = vand.u32 %v3428, 31
      %v3431 = vsub.s32 32, %v3430
      %v3432 = vshrl.u32 683565275, %v3431
      %v3433 = vshll.u32 683565275, %v3430
      %v3434 = vshrl.u32 2475754826, %v3431
      %v3435 = vor.u32 %v3433, %v3434
      %v3436 = vshll.u32 2475754826, %v3430
      %v3437 = vshrl.u32 2131351028, %v3431
      %v3438 = vor.u32 %v3436, %v3437
      %v3439 = vshll.u32 2131351028, %v3430
      %v3440 = vshrl.u32 2102212464, %v3431
      %v3441 = vor.u32 %v3439, %v3440
      %v3442 = vshll.u32 2102212464, %v3430
      %v3443 = vshrl.u32 920167782, %v3431
      %v3444 = vor.u32 %v3442, %v3443
      %v3445 = vshll.u32 920167782, %v3430
      %v3446 = vshrl.u32 1326507024, %v3431
      %v3447 = vor.u32 %v3445, %v3446
      %vm3448 = vcmp.lt.s32.totalorder %v3429, 1
      %vm3449 = vcmp.lt.s32.totalorder %v3429, 2
      %vm3450 = vcmp.lt.s32.totalorder %v3429, 3
      %vm3451 = vcmp.lt.s32.totalorder %v3429, 4
      %v3452 = vsel %vm3448, %v3432, %v3435
      %v3453 = vsel %vm3451, %v3441, 2102212464
      %v3454 = vsel %vm3450, %v3438, %v3453
      %v3455 = vsel %vm3449, %v3452, %v3454
      %v3456 = vsel %vm3448, %v3435, %v3438
      %v3457 = vsel %vm3451, %v3444, 920167782
      %v3458 = vsel %vm3450, %v3441, %v3457
      %v3459 = vsel %vm3449, %v3456, %v3458
      %v3460 = vsel %vm3448, %v3438, %v3441
      %v3461 = vsel %vm3451, %v3447, 1326507024
      %v3462 = vsel %vm3450, %v3444, %v3461
      %v3463 = vsel %vm3449, %v3460, %v3462
      %v3464 = vshll.u32 %v3424, 8
      %v3465 = vmul.u32.u64.compose %v3464, %v3463
      %v3466 = vextract.low.u32 %v3465
      %v3467 = vextract.high.u32 %v3465
      %v3468 = vmul.u32.u64.compose %v3464, %v3459
      %v3469 = vextract.low.u32 %v3468
      %v3470 = vextract.high.u32 %v3468
      %v3471 = vmul.u32 %v3464, %v3455
      %v3472 = vadd.s32 %v3467, %v3469
      %vm3473 = vc.u32 %v3467, %v3469
      %v3474 = vadd.s32 %v3470, 1
      %v3475 = vsel %vm3473, %v3474, %v3470
      %v3476 = vadd.s32 %v3471, %v3475
      %v3477 = vadd.s32 %v3476, 536870912
      %v3478 = vshrl.u32 %v3477, 30
      %v3479 = vshll.u32 %v3478, 30
      %v3480 = vsub.s32 %v3476, %v3479
      %vm3481 = vcmp.lt.s32.totalorder %v3480, 0
      %v3482 = vsub.s32 0, %v3480
      %v3483 = vsel %vm3481, %v3482, %v3480
      %v3484 = vclz %v3483
      %v3485 = vsub.s32 %v3484, 2
      %vm3486 = vcmp.gt.s32.totalorder 0, %v3485
      %v3487 = vsel %vm3486, 0, %v3485
      %v3488 = vsub.s32 32, %v3487
      %v3489 = vshll.u32 %v3480, %v3487
      %v3490 = vshrl.u32 %v3472, %v3488
      %v3491 = vor.u32 %v3489, %v3490
      %v3492 = vsub.s32 4294967266, %v3487
      %v3493 = vadd.s32 %v3492, 127
      %v3494 = vshll.u32 %v3493, 23
      %v3495 = vor.u32 4788187, %v3494
      %v3496 = vand.u32 2147483647, %v3495
      %v3498 = vcvt.s32.f32 %v3491
      %v3499 = vmul.f32 %v3498, %v3496
      %v3500 = vxor.u32 %v3499, 2147483648
      %v3501 = vsel %vm3418, %v3500, %v3499
      %v3502 = vsub.s32 4, %v3478
      %v3503 = vsel %vm3418, %v3502, %v3478
      %v3504 = vsel %vm3417, %v790, %v3501
      %v3505 = vsel %vm3417, 0, %v3503
      %v3506 = vcosq.f32.pop %v3504
      %v3507 = vsinq.f32.pop %v3504
      %vm3508 = vweird.f32 %v790
      %v3509 = vand.u32 %v3505, 3
      %vm3510 = vcmp.lt.s32.totalorder %v3509, 2
      %vm3511 = vcmp.eq.s32.totalorder %v3509, 0
      %v3512 = vxor.u32 %v3507, 2147483648
      %v3513 = vsel %vm3511, %v3506, %v3512
      %vm3514 = vcmp.eq.s32.totalorder %v3509, 2
      %v3515 = vxor.u32 %v3506, 2147483648
      %v3516 = vsel %vm3514, %v3515, %v3507
      %v3517 = vsel %vm3510, %v3513, %v3516
      %v3518 = vsel %vm3508, nan, %v3517
      %v3519 = vand.u32 2147483647, %v795
      %vm3520 = vcmp.le.f32.partialorder %v3519, 0.7853982
      %vm3521 = vcmp.lt.s32.totalorder %v795, 0
      %v3522 = vand.u32 %v795, 2139095040
      %v3523 = vshrl.u32 %v3522, 23
      %v3524 = vsub.s32 %v3523, 127
      %v3525 = vand.u32 2147483647, %v795
      %v3526 = vand.u32 %v3525, 8388607
      %v3527 = vor.u32 %v3526, 8388608
      %v3528 = vsub.s32 0, %v3527
      %v3529 = vadd.s32 %v3524, 1
      %vm3530 = vcmp.gt.s32.totalorder %v3529, 0
      %v3531 = vsel %vm3530, %v3529, 0
      %v3532 = vshrl.u32 %v3531, 5
      %v3533 = vand.u32 %v3531, 31
      %v3534 = vsub.s32 32, %v3533
      %v3535 = vshrl.u32 683565275, %v3534
      %v3536 = vshll.u32 683565275, %v3533
      %v3537 = vshrl.u32 2475754826, %v3534
      %v3538 = vor.u32 %v3536, %v3537
      %v3539 = vshll.u32 2475754826, %v3533
      %v3540 = vshrl.u32 2131351028, %v3534
      %v3541 = vor.u32 %v3539, %v3540
      %v3542 = vshll.u32 2131351028, %v3533
      %v3543 = vshrl.u32 2102212464, %v3534
      %v3544 = vor.u32 %v3542, %v3543
      %v3545 = vshll.u32 2102212464, %v3533
      %v3546 = vshrl.u32 920167782, %v3534
      %v3547 = vor.u32 %v3545, %v3546
      %v3548 = vshll.u32 920167782, %v3533
      %v3549 = vshrl.u32 1326507024, %v3534
      %v3550 = vor.u32 %v3548, %v3549
      %vm3551 = vcmp.lt.s32.totalorder %v3532, 1
      %vm3552 = vcmp.lt.s32.totalorder %v3532, 2
      %vm3553 = vcmp.lt.s32.totalorder %v3532, 3
      %vm3554 = vcmp.lt.s32.totalorder %v3532, 4
      %v3555 = vsel %vm3551, %v3535, %v3538
      %v3556 = vsel %vm3554, %v3544, 2102212464
      %v3557 = vsel %vm3553, %v3541, %v3556
      %v3558 = vsel %vm3552, %v3555, %v3557
      %v3559 = vsel %vm3551, %v3538, %v3541
      %v3560 = vsel %vm3554, %v3547, 920167782
      %v3561 = vsel %vm3553, %v3544, %v3560
      %v3562 = vsel %vm3552, %v3559, %v3561
      %v3563 = vsel %vm3551, %v3541, %v3544
      %v3564 = vsel %vm3554, %v3550, 1326507024
      %v3565 = vsel %vm3553, %v3547, %v3564
      %v3566 = vsel %vm3552, %v3563, %v3565
      %v3567 = vshll.u32 %v3527, 8
      %v3568 = vmul.u32.u64.compose %v3567, %v3566
      %v3569 = vextract.low.u32 %v3568
      %v3570 = vextract.high.u32 %v3568
      %v3571 = vmul.u32.u64.compose %v3567, %v3562
      %v3572 = vextract.low.u32 %v3571
      %v3573 = vextract.high.u32 %v3571
      %v3574 = vmul.u32 %v3567, %v3558
      %v3575 = vadd.s32 %v3570, %v3572
      %vm3576 = vc.u32 %v3570, %v3572
      %v3577 = vadd.s32 %v3573, 1
      %v3578 = vsel %vm3576, %v3577, %v3573
      %v3579 = vadd.s32 %v3574, %v3578
      %v3580 = vadd.s32 %v3579, 536870912
      %v3581 = vshrl.u32 %v3580, 30
      %v3582 = vshll.u32 %v3581, 30
      %v3583 = vsub.s32 %v3579, %v3582
      %vm3584 = vcmp.lt.s32.totalorder %v3583, 0
      %v3585 = vsub.s32 0, %v3583
      %v3586 = vsel %vm3584, %v3585, %v3583
      %v3587 = vclz %v3586
      %v3588 = vsub.s32 %v3587, 2
      %vm3589 = vcmp.gt.s32.totalorder 0, %v3588
      %v3590 = vsel %vm3589, 0, %v3588
      %v3591 = vsub.s32 32, %v3590
      %v3592 = vshll.u32 %v3583, %v3590
      %v3593 = vshrl.u32 %v3575, %v3591
      %v3594 = vor.u32 %v3592, %v3593
      %v3595 = vsub.s32 4294967266, %v3590
      %v3596 = vadd.s32 %v3595, 127
      %v3597 = vshll.u32 %v3596, 23
      %v3598 = vor.u32 4788187, %v3597
      %v3599 = vand.u32 2147483647, %v3598
      %v3601 = vcvt.s32.f32 %v3594
      %v3602 = vmul.f32 %v3601, %v3599
      %v3603 = vxor.u32 %v3602, 2147483648
      %v3604 = vsel %vm3521, %v3603, %v3602
      %v3605 = vsub.s32 4, %v3581
      %v3606 = vsel %vm3521, %v3605, %v3581
      %v3607 = vsel %vm3520, %v795, %v3604
      %v3608 = vsel %vm3520, 0, %v3606
      %v3609 = vcosq.f32.pop %v3607
      %v3610 = vsinq.f32.pop %v3607
      %vm3611 = vweird.f32 %v795
      %v3612 = vand.u32 %v3608, 3
      %vm3613 = vcmp.lt.s32.totalorder %v3612, 2
      %vm3614 = vcmp.eq.s32.totalorder %v3612, 0
      %v3615 = vxor.u32 %v3610, 2147483648
      %v3616 = vsel %vm3614, %v3609, %v3615
      %vm3617 = vcmp.eq.s32.totalorder %v3612, 2
      %v3618 = vxor.u32 %v3609, 2147483648
      %v3619 = vsel %vm3617, %v3618, %v3610
      %v3620 = vsel %vm3613, %v3616, %v3619
      %v3621 = vsel %vm3611, nan, %v3620
      %v3622 = vand.u32 2147483647, %v798
      %vm3623 = vcmp.le.f32.partialorder %v3622, 0.7853982
      %vm3624 = vcmp.lt.s32.totalorder %v798, 0
      %v3625 = vand.u32 %v798, 2139095040
      %v3626 = vshrl.u32 %v3625, 23
      %v3627 = vsub.s32 %v3626, 127
      %v3628 = vand.u32 2147483647, %v798
      %v3629 = vand.u32 %v3628, 8388607
      %v3630 = vor.u32 %v3629, 8388608
      %v3631 = vsub.s32 0, %v3630
      %v3632 = vadd.s32 %v3627, 1
      %vm3633 = vcmp.gt.s32.totalorder %v3632, 0
      %v3634 = vsel %vm3633, %v3632, 0
      %v3635 = vshrl.u32 %v3634, 5
      %v3636 = vand.u32 %v3634, 31
      %v3637 = vsub.s32 32, %v3636
      %v3638 = vshrl.u32 683565275, %v3637
      %v3639 = vshll.u32 683565275, %v3636
      %v3640 = vshrl.u32 2475754826, %v3637
      %v3641 = vor.u32 %v3639, %v3640
      %v3642 = vshll.u32 2475754826, %v3636
      %v3643 = vshrl.u32 2131351028, %v3637
      %v3644 = vor.u32 %v3642, %v3643
      %v3645 = vshll.u32 2131351028, %v3636
      %v3646 = vshrl.u32 2102212464, %v3637
      %v3647 = vor.u32 %v3645, %v3646
      %v3648 = vshll.u32 2102212464, %v3636
      %v3649 = vshrl.u32 920167782, %v3637
      %v3650 = vor.u32 %v3648, %v3649
      %v3651 = vshll.u32 920167782, %v3636
      %v3652 = vshrl.u32 1326507024, %v3637
      %v3653 = vor.u32 %v3651, %v3652
      %vm3654 = vcmp.lt.s32.totalorder %v3635, 1
      %vm3655 = vcmp.lt.s32.totalorder %v3635, 2
      %vm3656 = vcmp.lt.s32.totalorder %v3635, 3
      %vm3657 = vcmp.lt.s32.totalorder %v3635, 4
      %v3658 = vsel %vm3654, %v3638, %v3641
      %v3659 = vsel %vm3657, %v3647, 2102212464
      %v3660 = vsel %vm3656, %v3644, %v3659
      %v3661 = vsel %vm3655, %v3658, %v3660
      %v3662 = vsel %vm3654, %v3641, %v3644
      %v3663 = vsel %vm3657, %v3650, 920167782
      %v3664 = vsel %vm3656, %v3647, %v3663
      %v3665 = vsel %vm3655, %v3662, %v3664
      %v3666 = vsel %vm3654, %v3644, %v3647
      %v3667 = vsel %vm3657, %v3653, 1326507024
      %v3668 = vsel %vm3656, %v3650, %v3667
      %v3669 = vsel %vm3655, %v3666, %v3668
      %v3670 = vshll.u32 %v3630, 8
      %v3671 = vmul.u32.u64.compose %v3670, %v3669
      %v3672 = vextract.low.u32 %v3671
      %v3673 = vextract.high.u32 %v3671
      %v3674 = vmul.u32.u64.compose %v3670, %v3665
      %v3675 = vextract.low.u32 %v3674
      %v3676 = vextract.high.u32 %v3674
      %v3677 = vmul.u32 %v3670, %v3661
      %v3678 = vadd.s32 %v3673, %v3675
      %vm3679 = vc.u32 %v3673, %v3675
      %v3680 = vadd.s32 %v3676, 1
      %v3681 = vsel %vm3679, %v3680, %v3676
      %v3682 = vadd.s32 %v3677, %v3681
      %v3683 = vadd.s32 %v3682, 536870912
      %v3684 = vshrl.u32 %v3683, 30
      %v3685 = vshll.u32 %v3684, 30
      %v3686 = vsub.s32 %v3682, %v3685
      %vm3687 = vcmp.lt.s32.totalorder %v3686, 0
      %v3688 = vsub.s32 0, %v3686
      %v3689 = vsel %vm3687, %v3688, %v3686
      %v3690 = vclz %v3689
      %v3691 = vsub.s32 %v3690, 2
      %vm3692 = vcmp.gt.s32.totalorder 0, %v3691
      %v3693 = vsel %vm3692, 0, %v3691
      %v3694 = vsub.s32 32, %v3693
      %v3695 = vshll.u32 %v3686, %v3693
      %v3696 = vshrl.u32 %v3678, %v3694
      %v3697 = vor.u32 %v3695, %v3696
      %v3698 = vsub.s32 4294967266, %v3693
      %v3699 = vadd.s32 %v3698, 127
      %v3700 = vshll.u32 %v3699, 23
      %v3701 = vor.u32 4788187, %v3700
      %v3702 = vand.u32 2147483647, %v3701
      %v3704 = vcvt.s32.f32 %v3697
      %v3705 = vmul.f32 %v3704, %v3702
      %v3706 = vxor.u32 %v3705, 2147483648
      %v3707 = vsel %vm3624, %v3706, %v3705
      %v3708 = vsub.s32 4, %v3684
      %v3709 = vsel %vm3624, %v3708, %v3684
      %v3710 = vsel %vm3623, %v798, %v3707
      %v3711 = vsel %vm3623, 0, %v3709
      %v3712 = vcosq.f32.pop %v3710
      %v3713 = vsinq.f32.pop %v3710
      %vm3714 = vweird.f32 %v798
      %v3715 = vand.u32 %v3711, 3
      %vm3716 = vcmp.lt.s32.totalorder %v3715, 2
      %vm3717 = vcmp.eq.s32.totalorder %v3715, 0
      %v3718 = vxor.u32 %v3713, 2147483648
      %v3719 = vsel %vm3717, %v3712, %v3718
      %vm3720 = vcmp.eq.s32.totalorder %v3715, 2
      %v3721 = vxor.u32 %v3712, 2147483648
      %v3722 = vsel %vm3720, %v3721, %v3713
      %v3723 = vsel %vm3716, %v3719, %v3722
      %v3724 = vsel %vm3714, nan, %v3723
      %v3725 = vand.u32 2147483647, %v803
      %vm3726 = vcmp.le.f32.partialorder %v3725, 0.7853982
      %vm3727 = vcmp.lt.s32.totalorder %v803, 0
      %v3728 = vand.u32 %v803, 2139095040
      %v3729 = vshrl.u32 %v3728, 23
      %v3730 = vsub.s32 %v3729, 127
      %v3731 = vand.u32 2147483647, %v803
      %v3732 = vand.u32 %v3731, 8388607
      %v3733 = vor.u32 %v3732, 8388608
      %v3734 = vsub.s32 0, %v3733
      %v3735 = vadd.s32 %v3730, 1
      %vm3736 = vcmp.gt.s32.totalorder %v3735, 0
      %v3737 = vsel %vm3736, %v3735, 0
      %v3738 = vshrl.u32 %v3737, 5
      %v3739 = vand.u32 %v3737, 31
      %v3740 = vsub.s32 32, %v3739
      %v3741 = vshrl.u32 683565275, %v3740
      %v3742 = vshll.u32 683565275, %v3739
      %v3743 = vshrl.u32 2475754826, %v3740
      %v3744 = vor.u32 %v3742, %v3743
      %v3745 = vshll.u32 2475754826, %v3739
      %v3746 = vshrl.u32 2131351028, %v3740
      %v3747 = vor.u32 %v3745, %v3746
      %v3748 = vshll.u32 2131351028, %v3739
      %v3749 = vshrl.u32 2102212464, %v3740
      %v3750 = vor.u32 %v3748, %v3749
      %v3751 = vshll.u32 2102212464, %v3739
      %v3752 = vshrl.u32 920167782, %v3740
      %v3753 = vor.u32 %v3751, %v3752
      %v3754 = vshll.u32 920167782, %v3739
      %v3755 = vshrl.u32 1326507024, %v3740
      %v3756 = vor.u32 %v3754, %v3755
      %vm3757 = vcmp.lt.s32.totalorder %v3738, 1
      %vm3758 = vcmp.lt.s32.totalorder %v3738, 2
      %vm3759 = vcmp.lt.s32.totalorder %v3738, 3
      %vm3760 = vcmp.lt.s32.totalorder %v3738, 4
      %v3761 = vsel %vm3757, %v3741, %v3744
      %v3762 = vsel %vm3760, %v3750, 2102212464
      %v3763 = vsel %vm3759, %v3747, %v3762
      %v3764 = vsel %vm3758, %v3761, %v3763
      %v3765 = vsel %vm3757, %v3744, %v3747
      %v3766 = vsel %vm3760, %v3753, 920167782
      %v3767 = vsel %vm3759, %v3750, %v3766
      %v3768 = vsel %vm3758, %v3765, %v3767
      %v3769 = vsel %vm3757, %v3747, %v3750
      %v3770 = vsel %vm3760, %v3756, 1326507024
      %v3771 = vsel %vm3759, %v3753, %v3770
      %v3772 = vsel %vm3758, %v3769, %v3771
      %v3773 = vshll.u32 %v3733, 8
      %v3774 = vmul.u32.u64.compose %v3773, %v3772
      %v3775 = vextract.low.u32 %v3774
      %v3776 = vextract.high.u32 %v3774
      %v3777 = vmul.u32.u64.compose %v3773, %v3768
      %v3778 = vextract.low.u32 %v3777
      %v3779 = vextract.high.u32 %v3777
      %v3780 = vmul.u32 %v3773, %v3764
      %v3781 = vadd.s32 %v3776, %v3778
      %vm3782 = vc.u32 %v3776, %v3778
      %v3783 = vadd.s32 %v3779, 1
      %v3784 = vsel %vm3782, %v3783, %v3779
      %v3785 = vadd.s32 %v3780, %v3784
      %v3786 = vadd.s32 %v3785, 536870912
      %v3787 = vshrl.u32 %v3786, 30
      %v3788 = vshll.u32 %v3787, 30
      %v3789 = vsub.s32 %v3785, %v3788
      %vm3790 = vcmp.lt.s32.totalorder %v3789, 0
      %v3791 = vsub.s32 0, %v3789
      %v3792 = vsel %vm3790, %v3791, %v3789
      %v3793 = vclz %v3792
      %v3794 = vsub.s32 %v3793, 2
      %vm3795 = vcmp.gt.s32.totalorder 0, %v3794
      %v3796 = vsel %vm3795, 0, %v3794
      %v3797 = vsub.s32 32, %v3796
      %v3798 = vshll.u32 %v3789, %v3796
      %v3799 = vshrl.u32 %v3781, %v3797
      %v3800 = vor.u32 %v3798, %v3799
      %v3801 = vsub.s32 4294967266, %v3796
      %v3802 = vadd.s32 %v3801, 127
      %v3803 = vshll.u32 %v3802, 23
      %v3804 = vor.u32 4788187, %v3803
      %v3805 = vand.u32 2147483647, %v3804
      %v3807 = vcvt.s32.f32 %v3800
      %v3808 = vmul.f32 %v3807, %v3805
      %v3809 = vxor.u32 %v3808, 2147483648
      %v3810 = vsel %vm3727, %v3809, %v3808
      %v3811 = vsub.s32 4, %v3787
      %v3812 = vsel %vm3727, %v3811, %v3787
      %v3813 = vsel %vm3726, %v803, %v3810
      %v3814 = vsel %vm3726, 0, %v3812
      %v3815 = vcosq.f32.pop %v3813
      %v3816 = vsinq.f32.pop %v3813
      %vm3817 = vweird.f32 %v803
      %v3818 = vand.u32 %v3814, 3
      %vm3819 = vcmp.lt.s32.totalorder %v3818, 2
      %vm3820 = vcmp.eq.s32.totalorder %v3818, 0
      %v3821 = vxor.u32 %v3816, 2147483648
      %v3822 = vsel %vm3820, %v3815, %v3821
      %vm3823 = vcmp.eq.s32.totalorder %v3818, 2
      %v3824 = vxor.u32 %v3815, 2147483648
      %v3825 = vsel %vm3823, %v3824, %v3816
      %v3826 = vsel %vm3819, %v3822, %v3825
      %v3827 = vsel %vm3817, nan, %v3826
      %v3828 = vand.u32 2147483647, %v806
      %vm3829 = vcmp.le.f32.partialorder %v3828, 0.7853982
      %vm3830 = vcmp.lt.s32.totalorder %v806, 0
      %v3831 = vand.u32 %v806, 2139095040
      %v3832 = vshrl.u32 %v3831, 23
      %v3833 = vsub.s32 %v3832, 127
      %v3834 = vand.u32 2147483647, %v806
      %v3835 = vand.u32 %v3834, 8388607
      %v3836 = vor.u32 %v3835, 8388608
      %v3837 = vsub.s32 0, %v3836
      %v3838 = vadd.s32 %v3833, 1
      %vm3839 = vcmp.gt.s32.totalorder %v3838, 0
      %v3840 = vsel %vm3839, %v3838, 0
      %v3841 = vshrl.u32 %v3840, 5
      %v3842 = vand.u32 %v3840, 31
      %v3843 = vsub.s32 32, %v3842
      %v3844 = vshrl.u32 683565275, %v3843
      %v3845 = vshll.u32 683565275, %v3842
      %v3846 = vshrl.u32 2475754826, %v3843
      %v3847 = vor.u32 %v3845, %v3846
      %v3848 = vshll.u32 2475754826, %v3842
      %v3849 = vshrl.u32 2131351028, %v3843
      %v3850 = vor.u32 %v3848, %v3849
      %v3851 = vshll.u32 2131351028, %v3842
      %v3852 = vshrl.u32 2102212464, %v3843
      %v3853 = vor.u32 %v3851, %v3852
      %v3854 = vshll.u32 2102212464, %v3842
      %v3855 = vshrl.u32 920167782, %v3843
      %v3856 = vor.u32 %v3854, %v3855
      %v3857 = vshll.u32 920167782, %v3842
      %v3858 = vshrl.u32 1326507024, %v3843
      %v3859 = vor.u32 %v3857, %v3858
      %vm3860 = vcmp.lt.s32.totalorder %v3841, 1
      %vm3861 = vcmp.lt.s32.totalorder %v3841, 2
      %vm3862 = vcmp.lt.s32.totalorder %v3841, 3
      %vm3863 = vcmp.lt.s32.totalorder %v3841, 4
      %v3864 = vsel %vm3860, %v3844, %v3847
      %v3865 = vsel %vm3863, %v3853, 2102212464
      %v3866 = vsel %vm3862, %v3850, %v3865
      %v3867 = vsel %vm3861, %v3864, %v3866
      %v3868 = vsel %vm3860, %v3847, %v3850
      %v3869 = vsel %vm3863, %v3856, 920167782
      %v3870 = vsel %vm3862, %v3853, %v3869
      %v3871 = vsel %vm3861, %v3868, %v3870
      %v3872 = vsel %vm3860, %v3850, %v3853
      %v3873 = vsel %vm3863, %v3859, 1326507024
      %v3874 = vsel %vm3862, %v3856, %v3873
      %v3875 = vsel %vm3861, %v3872, %v3874
      %v3876 = vshll.u32 %v3836, 8
      %v3877 = vmul.u32.u64.compose %v3876, %v3875
      %v3878 = vextract.low.u32 %v3877
      %v3879 = vextract.high.u32 %v3877
      %v3880 = vmul.u32.u64.compose %v3876, %v3871
      %v3881 = vextract.low.u32 %v3880
      %v3882 = vextract.high.u32 %v3880
      %v3883 = vmul.u32 %v3876, %v3867
      %v3884 = vadd.s32 %v3879, %v3881
      %vm3885 = vc.u32 %v3879, %v3881
      %v3886 = vadd.s32 %v3882, 1
      %v3887 = vsel %vm3885, %v3886, %v3882
      %v3888 = vadd.s32 %v3883, %v3887
      %v3889 = vadd.s32 %v3888, 536870912
      %v3890 = vshrl.u32 %v3889, 30
      %v3891 = vshll.u32 %v3890, 30
      %v3892 = vsub.s32 %v3888, %v3891
      %vm3893 = vcmp.lt.s32.totalorder %v3892, 0
      %v3894 = vsub.s32 0, %v3892
      %v3895 = vsel %vm3893, %v3894, %v3892
      %v3896 = vclz %v3895
      %v3897 = vsub.s32 %v3896, 2
      %vm3898 = vcmp.gt.s32.totalorder 0, %v3897
      %v3899 = vsel %vm3898, 0, %v3897
      %v3900 = vsub.s32 32, %v3899
      %v3901 = vshll.u32 %v3892, %v3899
      %v3902 = vshrl.u32 %v3884, %v3900
      %v3903 = vor.u32 %v3901, %v3902
      %v3904 = vsub.s32 4294967266, %v3899
      %v3905 = vadd.s32 %v3904, 127
      %v3906 = vshll.u32 %v3905, 23
      %v3907 = vor.u32 4788187, %v3906
      %v3908 = vand.u32 2147483647, %v3907
      %v3910 = vcvt.s32.f32 %v3903
      %v3911 = vmul.f32 %v3910, %v3908
      %v3912 = vxor.u32 %v3911, 2147483648
      %v3913 = vsel %vm3830, %v3912, %v3911
      %v3914 = vsub.s32 4, %v3890
      %v3915 = vsel %vm3830, %v3914, %v3890
      %v3916 = vsel %vm3829, %v806, %v3913
      %v3917 = vsel %vm3829, 0, %v3915
      %v3918 = vcosq.f32.pop %v3916
      %v3919 = vsinq.f32.pop %v3916
      %vm3920 = vweird.f32 %v806
      %v3921 = vand.u32 %v3917, 3
      %vm3922 = vcmp.lt.s32.totalorder %v3921, 2
      %vm3923 = vcmp.eq.s32.totalorder %v3921, 0
      %v3924 = vxor.u32 %v3919, 2147483648
      %v3925 = vsel %vm3923, %v3918, %v3924
      %vm3926 = vcmp.eq.s32.totalorder %v3921, 2
      %v3927 = vxor.u32 %v3918, 2147483648
      %v3928 = vsel %vm3926, %v3927, %v3919
      %v3929 = vsel %vm3922, %v3925, %v3928
      %v3930 = vsel %vm3920, nan, %v3929
      %v3931 = vand.u32 2147483647, %v811
      %vm3932 = vcmp.le.f32.partialorder %v3931, 0.7853982
      %vm3933 = vcmp.lt.s32.totalorder %v811, 0
      %v3934 = vand.u32 %v811, 2139095040
      %v3935 = vshrl.u32 %v3934, 23
      %v3936 = vsub.s32 %v3935, 127
      %v3937 = vand.u32 2147483647, %v811
      %v3938 = vand.u32 %v3937, 8388607
      %v3939 = vor.u32 %v3938, 8388608
      %v3940 = vsub.s32 0, %v3939
      %v3941 = vadd.s32 %v3936, 1
      %vm3942 = vcmp.gt.s32.totalorder %v3941, 0
      %v3943 = vsel %vm3942, %v3941, 0
      %v3944 = vshrl.u32 %v3943, 5
      %v3945 = vand.u32 %v3943, 31
      %v3946 = vsub.s32 32, %v3945
      %v3947 = vshrl.u32 683565275, %v3946
      %v3948 = vshll.u32 683565275, %v3945
      %v3949 = vshrl.u32 2475754826, %v3946
      %v3950 = vor.u32 %v3948, %v3949
      %v3951 = vshll.u32 2475754826, %v3945
      %v3952 = vshrl.u32 2131351028, %v3946
      %v3953 = vor.u32 %v3951, %v3952
      %v3954 = vshll.u32 2131351028, %v3945
      %v3955 = vshrl.u32 2102212464, %v3946
      %v3956 = vor.u32 %v3954, %v3955
      %v3957 = vshll.u32 2102212464, %v3945
      %v3958 = vshrl.u32 920167782, %v3946
      %v3959 = vor.u32 %v3957, %v3958
      %v3960 = vshll.u32 920167782, %v3945
      %v3961 = vshrl.u32 1326507024, %v3946
      %v3962 = vor.u32 %v3960, %v3961
      %vm3963 = vcmp.lt.s32.totalorder %v3944, 1
      %vm3964 = vcmp.lt.s32.totalorder %v3944, 2
      %vm3965 = vcmp.lt.s32.totalorder %v3944, 3
      %vm3966 = vcmp.lt.s32.totalorder %v3944, 4
      %v3967 = vsel %vm3963, %v3947, %v3950
      %v3968 = vsel %vm3966, %v3956, 2102212464
      %v3969 = vsel %vm3965, %v3953, %v3968
      %v3970 = vsel %vm3964, %v3967, %v3969
      %v3971 = vsel %vm3963, %v3950, %v3953
      %v3972 = vsel %vm3966, %v3959, 920167782
      %v3973 = vsel %vm3965, %v3956, %v3972
      %v3974 = vsel %vm3964, %v3971, %v3973
      %v3975 = vsel %vm3963, %v3953, %v3956
      %v3976 = vsel %vm3966, %v3962, 1326507024
      %v3977 = vsel %vm3965, %v3959, %v3976
      %v3978 = vsel %vm3964, %v3975, %v3977
      %v3979 = vshll.u32 %v3939, 8
      %v3980 = vmul.u32.u64.compose %v3979, %v3978
      %v3981 = vextract.low.u32 %v3980
      %v3982 = vextract.high.u32 %v3980
      %v3983 = vmul.u32.u64.compose %v3979, %v3974
      %v3984 = vextract.low.u32 %v3983
      %v3985 = vextract.high.u32 %v3983
      %v3986 = vmul.u32 %v3979, %v3970
      %v3987 = vadd.s32 %v3982, %v3984
      %vm3988 = vc.u32 %v3982, %v3984
      %v3989 = vadd.s32 %v3985, 1
      %v3990 = vsel %vm3988, %v3989, %v3985
      %v3991 = vadd.s32 %v3986, %v3990
      %v3992 = vadd.s32 %v3991, 536870912
      %v3993 = vshrl.u32 %v3992, 30
      %v3994 = vshll.u32 %v3993, 30
      %v3995 = vsub.s32 %v3991, %v3994
      %vm3996 = vcmp.lt.s32.totalorder %v3995, 0
      %v3997 = vsub.s32 0, %v3995
      %v3998 = vsel %vm3996, %v3997, %v3995
      %v3999 = vclz %v3998
      %v4000 = vsub.s32 %v3999, 2
      %vm4001 = vcmp.gt.s32.totalorder 0, %v4000
      %v4002 = vsel %vm4001, 0, %v4000
      %v4003 = vsub.s32 32, %v4002
      %v4004 = vshll.u32 %v3995, %v4002
      %v4005 = vshrl.u32 %v3987, %v4003
      %v4006 = vor.u32 %v4004, %v4005
      %v4007 = vsub.s32 4294967266, %v4002
      %v4008 = vadd.s32 %v4007, 127
      %v4009 = vshll.u32 %v4008, 23
      %v4010 = vor.u32 4788187, %v4009
      %v4011 = vand.u32 2147483647, %v4010
      %v4013 = vcvt.s32.f32 %v4006
      %v4014 = vmul.f32 %v4013, %v4011
      %v4015 = vxor.u32 %v4014, 2147483648
      %v4016 = vsel %vm3933, %v4015, %v4014
      %v4017 = vsub.s32 4, %v3993
      %v4018 = vsel %vm3933, %v4017, %v3993
      %v4019 = vsel %vm3932, %v811, %v4016
      %v4020 = vsel %vm3932, 0, %v4018
      %v4021 = vcosq.f32.pop %v4019
      %v4022 = vsinq.f32.pop %v4019
      %vm4023 = vweird.f32 %v811
      %v4024 = vand.u32 %v4020, 3
      %vm4025 = vcmp.lt.s32.totalorder %v4024, 2
      %vm4026 = vcmp.eq.s32.totalorder %v4024, 0
      %v4027 = vxor.u32 %v4022, 2147483648
      %v4028 = vsel %vm4026, %v4021, %v4027
      %vm4029 = vcmp.eq.s32.totalorder %v4024, 2
      %v4030 = vxor.u32 %v4021, 2147483648
      %v4031 = vsel %vm4029, %v4030, %v4022
      %v4032 = vsel %vm4025, %v4028, %v4031
      %v4033 = vsel %vm4023, nan, %v4032
      %v4034 = vand.u32 2147483647, %v814
      %vm4035 = vcmp.le.f32.partialorder %v4034, 0.7853982
      %vm4036 = vcmp.lt.s32.totalorder %v814, 0
      %v4037 = vand.u32 %v814, 2139095040
      %v4038 = vshrl.u32 %v4037, 23
      %v4039 = vsub.s32 %v4038, 127
      %v4040 = vand.u32 2147483647, %v814
      %v4041 = vand.u32 %v4040, 8388607
      %v4042 = vor.u32 %v4041, 8388608
      %v4043 = vsub.s32 0, %v4042
      %v4044 = vadd.s32 %v4039, 1
      %vm4045 = vcmp.gt.s32.totalorder %v4044, 0
      %v4046 = vsel %vm4045, %v4044, 0
      %v4047 = vshrl.u32 %v4046, 5
      %v4048 = vand.u32 %v4046, 31
      %v4049 = vsub.s32 32, %v4048
      %v4050 = vshrl.u32 683565275, %v4049
      %v4051 = vshll.u32 683565275, %v4048
      %v4052 = vshrl.u32 2475754826, %v4049
      %v4053 = vor.u32 %v4051, %v4052
      %v4054 = vshll.u32 2475754826, %v4048
      %v4055 = vshrl.u32 2131351028, %v4049
      %v4056 = vor.u32 %v4054, %v4055
      %v4057 = vshll.u32 2131351028, %v4048
      %v4058 = vshrl.u32 2102212464, %v4049
      %v4059 = vor.u32 %v4057, %v4058
      %v4060 = vshll.u32 2102212464, %v4048
      %v4061 = vshrl.u32 920167782, %v4049
      %v4062 = vor.u32 %v4060, %v4061
      %v4063 = vshll.u32 920167782, %v4048
      %v4064 = vshrl.u32 1326507024, %v4049
      %v4065 = vor.u32 %v4063, %v4064
      %vm4066 = vcmp.lt.s32.totalorder %v4047, 1
      %vm4067 = vcmp.lt.s32.totalorder %v4047, 2
      %vm4068 = vcmp.lt.s32.totalorder %v4047, 3
      %vm4069 = vcmp.lt.s32.totalorder %v4047, 4
      %v4070 = vsel %vm4066, %v4050, %v4053
      %v4071 = vsel %vm4069, %v4059, 2102212464
      %v4072 = vsel %vm4068, %v4056, %v4071
      %v4073 = vsel %vm4067, %v4070, %v4072
      %v4074 = vsel %vm4066, %v4053, %v4056
      %v4075 = vsel %vm4069, %v4062, 920167782
      %v4076 = vsel %vm4068, %v4059, %v4075
      %v4077 = vsel %vm4067, %v4074, %v4076
      %v4078 = vsel %vm4066, %v4056, %v4059
      %v4079 = vsel %vm4069, %v4065, 1326507024
      %v4080 = vsel %vm4068, %v4062, %v4079
      %v4081 = vsel %vm4067, %v4078, %v4080
      %v4082 = vshll.u32 %v4042, 8
      %v4083 = vmul.u32.u64.compose %v4082, %v4081
      %v4084 = vextract.low.u32 %v4083
      %v4085 = vextract.high.u32 %v4083
      %v4086 = vmul.u32.u64.compose %v4082, %v4077
      %v4087 = vextract.low.u32 %v4086
      %v4088 = vextract.high.u32 %v4086
      %v4089 = vmul.u32 %v4082, %v4073
      %v4090 = vadd.s32 %v4085, %v4087
      %vm4091 = vc.u32 %v4085, %v4087
      %v4092 = vadd.s32 %v4088, 1
      %v4093 = vsel %vm4091, %v4092, %v4088
      %v4094 = vadd.s32 %v4089, %v4093
      %v4095 = vadd.s32 %v4094, 536870912
      %v4096 = vshrl.u32 %v4095, 30
      %v4097 = vshll.u32 %v4096, 30
      %v4098 = vsub.s32 %v4094, %v4097
      %vm4099 = vcmp.lt.s32.totalorder %v4098, 0
      %v4100 = vsub.s32 0, %v4098
      %v4101 = vsel %vm4099, %v4100, %v4098
      %v4102 = vclz %v4101
      %v4103 = vsub.s32 %v4102, 2
      %vm4104 = vcmp.gt.s32.totalorder 0, %v4103
      %v4105 = vsel %vm4104, 0, %v4103
      %v4106 = vsub.s32 32, %v4105
      %v4107 = vshll.u32 %v4098, %v4105
      %v4108 = vshrl.u32 %v4090, %v4106
      %v4109 = vor.u32 %v4107, %v4108
      %v4110 = vsub.s32 4294967266, %v4105
      %v4111 = vadd.s32 %v4110, 127
      %v4112 = vshll.u32 %v4111, 23
      %v4113 = vor.u32 4788187, %v4112
      %v4114 = vand.u32 2147483647, %v4113
      %v4116 = vcvt.s32.f32 %v4109
      %v4117 = vmul.f32 %v4116, %v4114
      %v4118 = vxor.u32 %v4117, 2147483648
      %v4119 = vsel %vm4036, %v4118, %v4117
      %v4120 = vsub.s32 4, %v4096
      %v4121 = vsel %vm4036, %v4120, %v4096
      %v4122 = vsel %vm4035, %v814, %v4119
      %v4123 = vsel %vm4035, 0, %v4121
      %v4124 = vcosq.f32.pop %v4122
      %v4125 = vsinq.f32.pop %v4122
      %vm4126 = vweird.f32 %v814
      %v4127 = vand.u32 %v4123, 3
      %vm4128 = vcmp.lt.s32.totalorder %v4127, 2
      %vm4129 = vcmp.eq.s32.totalorder %v4127, 0
      %v4130 = vxor.u32 %v4125, 2147483648
      %v4131 = vsel %vm4129, %v4124, %v4130
      %vm4132 = vcmp.eq.s32.totalorder %v4127, 2
      %v4133 = vxor.u32 %v4124, 2147483648
      %v4134 = vsel %vm4132, %v4133, %v4125
      %v4135 = vsel %vm4128, %v4131, %v4134
      %v4136 = vsel %vm4126, nan, %v4135
      %v4137 = vpack.c.bf16 %v2694, %v2591
      %v4138 = vpack.c.bf16 %v2900, %v2797
      %v4139 = vpack.c.bf16 %v3106, %v3003
      %v4140 = vpack.c.bf16 %v3312, %v3209
      %v4141 = vpack.c.bf16 %v3518, %v3415
      %v4142 = vpack.c.bf16 %v3724, %v3621
      %v4143 = vpack.c.bf16 %v3930, %v3827
      %v4144 = vpack.c.bf16 %v4136, %v4033
      %v4145 = vld [vmem:[%s2] sm:$0xf]
      %v4146 = vld [vmem:[%s2 + $0x4] sm:$0x3]
      %v4147 = vld [vmem:[%s3] sm:$0xf]
      %v4148 = vld [vmem:[%s3 + $0x4] sm:$0xf]
      %v4149 = vld [vmem:[%s3 + $0x8] sm:$0xf]
      %v4150 = vld [vmem:[%s3 + $0xc] sm:$0xf]
      %v4151 = vld [vmem:[%s3 + $0x10] sm:$0xf]
      %v4152 = vld [vmem:[%s3 + $0x14] sm:$0xf]
      %v4153 = vld [vmem:[%s3 + $0x18] sm:$0xf]
      %v4154 = vld [vmem:[%s3 + $0x1c] sm:$0xf]
      %v4155 = vld [vmem:[%s3 + $0x20] sm:$0x1]
      %v4165 = vunpack.c.l.b16 %v4147
      %v4166 = vunpack.c.l.b16 %v4148
      %v4167 = vunpack.c.l.b16 %v4149
      %v4168 = vunpack.c.l.b16 %v4150
      %v4169 = vunpack.c.l.b16 %v4151
      %v4170 = vunpack.c.l.b16 %v4152
      %v4171 = vunpack.c.l.b16 %v4153
      %v4172 = vunpack.c.l.b16 %v4154
      %v4173 = vunpack.c.l.b16 %v4155
      %v4174 = vpack.c.b16 %v4166, %v4165
      %v4175 = vpack.c.b16 %v4168, %v4167
      %v4176 = vpack.c.b16 %v4170, %v4169
      %v4177 = vpack.c.b16 %v4172, %v4171
      %v4178 = vpack.c.b16 %v4173, %v4173
      %vm4183 = vcmask 539648
      %v4185 = vsel %vm4183, %v2481, 0
      %v4188 = vsel %vm4183, %v2482, 0
      %v4191 = vsel %vm4183, %v2483, 0
      %v4194 = vsel %vm4183, %v2484, 0
      %v4197 = vsel %vm4183, %v2485, 0
      %v4200 = vsel %vm4183, %v2486, 0
      %v4203 = vsel %vm4183, %v2487, 0
      %v4206 = vsel %vm4183, %v2488, 0
      %vm4208 = vcmask 1040384
      %v4210 = vsel %vm4208, %v4178, 0
      %4212 = vmatprep.subr.bf16.mxu0 0
      %4213 = vmatpush1.bf16.msra.mxu0 %v4174
      %4214 = vmatprep.subr.bf16.mxu0 0
      %4215 = vmatpush1.bf16.msra.mxu0 %v4175
      %4216 = vmatprep.subr.bf16.mxu0 0
      %4217 = vmatpush1.bf16.msra.mxu0 %v4176
      %4218 = vmatprep.subr.bf16.mxu0 0
      %4219 = vmatpush1.bf16.msra.mxu0 %v4177
      %4220 = vmatprep.subr.bf16.mxu0 0
      %4221 = vmatpush1.bf16.msra.mxu0 %v4210
      %4222 = vmatprep.subr.bf16.mxu0 0
      %4223 = vmatpush1.bf16.msra.mxu0 0
      %4224 = vmatprep.subr.bf16.mxu0 0
      %4225 = vmatpush1.bf16.msra.mxu0 0
      %4226 = vmatprep.subr.bf16.mxu0 0
      %4227 = vmatpush1.bf16.msra.mxu0 0
      %4228 = vmatprep.subr.bf16.mxu0 0
      %4229 = vmatpush1.bf16.msra.mxu0 0
      %4230 = vmatprep.subr.bf16.mxu0 0
      %4231 = vmatpush1.bf16.msra.mxu0 0
      %4232 = vmatprep.subr.bf16.mxu0 0
      %4233 = vmatpush1.bf16.msra.mxu0 0
      %4234 = vmatprep.subr.bf16.mxu0 0
      %4235 = vmatpush1.bf16.msra.mxu0 0
      %4236 = vmatprep.subr.bf16.mxu0 0
      %4237 = vmatpush1.bf16.msra.mxu0 0
      %4238 = vmatprep.subr.bf16.mxu0 0
      %4239 = vmatpush1.bf16.msra.mxu0 0
      %4240 = vmatprep.subr.bf16.mxu0 0
      %4241 = vmatpush1.bf16.msra.mxu0 0
      %4242 = vmatprep.subr.bf16.mxu0 0
      %4243 = vmatpush1.bf16.msra.mxu0 0
      %4244 = vmatprep.mubr.bf16.mxu0 0
      %4245 = vmatmul.mubr.bf16.gmra.mrb[0].mxu0 %v4185
      %v4246 = vpop.f32.mrb[0].mxu0
      %v4247 = vadd.f32 0.0, %v4246
      %v4248 = vpop.f32.mrb[0].mxu0
      %v4249 = vpop.f32.mrb[0].mxu0
      %v4250 = vadd.f32 0.0, %v4249
      %v4251 = vpop.f32.mrb[0].mxu0
      %4252 = vmatprep.mubr.bf16.mxu0 0
      %4253 = vmatmul.mubr.bf16.gmra.mrb[0].mxu0 %v4188
      %v4254 = vpop.f32.mrb[0].mxu0
      %v4255 = vadd.f32 0.0, %v4254
      %v4256 = vpop.f32.mrb[0].mxu0
      %v4257 = vpop.f32.mrb[0].mxu0
      %v4258 = vadd.f32 0.0, %v4257
      %v4259 = vpop.f32.mrb[0].mxu0
      %4260 = vmatprep.mubr.bf16.mxu0 0
      %4261 = vmatmul.mubr.bf16.gmra.mrb[0].mxu0 %v4191
      %v4262 = vpop.f32.mrb[0].mxu0
      %v4263 = vadd.f32 0.0, %v4262
      %v4264 = vpop.f32.mrb[0].mxu0
      %v4265 = vpop.f32.mrb[0].mxu0
      %v4266 = vadd.f32 0.0, %v4265
      %v4267 = vpop.f32.mrb[0].mxu0
      %4268 = vmatprep.mubr.bf16.mxu0 0
      %4269 = vmatmul.mubr.bf16.gmra.mrb[0].mxu0 %v4194
      %v4270 = vpop.f32.mrb[0].mxu0
      %v4271 = vadd.f32 0.0, %v4270
      %v4272 = vpop.f32.mrb[0].mxu0
      %v4273 = vpop.f32.mrb[0].mxu0
      %v4274 = vadd.f32 0.0, %v4273
      %v4275 = vpop.f32.mrb[0].mxu0
      %4276 = vmatprep.mubr.bf16.mxu0 0
      %4277 = vmatmul.mubr.bf16.gmra.mrb[0].mxu0 %v4197
      %v4278 = vpop.f32.mrb[0].mxu0
      %v4279 = vadd.f32 0.0, %v4278
      %v4280 = vpop.f32.mrb[0].mxu0
      %v4281 = vpop.f32.mrb[0].mxu0
      %v4282 = vadd.f32 0.0, %v4281
      %v4283 = vpop.f32.mrb[0].mxu0
      %4284 = vmatprep.mubr.bf16.mxu0 0
      %4285 = vmatmul.mubr.bf16.gmra.mrb[0].mxu0 %v4200
      %v4286 = vpop.f32.mrb[0].mxu0
      %v4287 = vadd.f32 0.0, %v4286
      %v4288 = vpop.f32.mrb[0].mxu0
      %v4289 = vpop.f32.mrb[0].mxu0
      %v4290 = vadd.f32 0.0, %v4289
      %v4291 = vpop.f32.mrb[0].mxu0
      %4292 = vmatprep.mubr.bf16.mxu0 0
      %4293 = vmatmul.mubr.bf16.gmra.mrb[0].mxu0 %v4203
      %v4294 = vpop.f32.mrb[0].mxu0
      %v4295 = vadd.f32 0.0, %v4294
      %v4296 = vpop.f32.mrb[0].mxu0
      %v4297 = vpop.f32.mrb[0].mxu0
      %v4298 = vadd.f32 0.0, %v4297
      %v4299 = vpop.f32.mrb[0].mxu0
      %4300 = vmatprep.mubr.bf16.mxu0 0
      %4301 = vmatmul.mubr.bf16.gmra.mrb[0].mxu0 %v4206
      %v4302 = vpop.f32.mrb[0].mxu0
      %v4303 = vadd.f32 0.0, %v4302
      %v4304 = vpop.f32.mrb[0].mxu0
      %v4305 = vpop.f32.mrb[0].mxu0
      %v4306 = vadd.f32 0.0, %v4305
      %v4307 = vpop.f32.mrb[0].mxu0
      %4308 = vdwg.mxu0
      %v4311 = vunpack.c.l.b16 %v4145
      %v4312 = vunpack.c.l.b16 %v4146
      %v4313 = vpack.c.b16 %v4312, %v4311
      %v4315 = vsel %vm595, %v4313, 0
      %4317 = vmatprep.subr.bf16.mxu0 0
      %4318 = vmatpush1.bf16.msra.mxu0 %v4315
      %4319 = vmatprep.subr.bf16.mxu0 0
      %4320 = vmatpush1.bf16.msra.mxu0 0
      %4321 = vmatprep.subr.bf16.mxu0 0
      %4322 = vmatpush1.bf16.msra.mxu0 0
      %4323 = vmatprep.subr.bf16.mxu0 0
      %4324 = vmatpush1.bf16.msra.mxu0 0
      %4325 = vmatprep.subr.bf16.mxu0 0
      %4326 = vmatpush1.bf16.msra.mxu0 0
      %4327 = vmatprep.subr.bf16.mxu0 0
      %4328 = vmatpush1.bf16.msra.mxu0 0
      %4329 = vmatprep.subr.bf16.mxu0 0
      %4330 = vmatpush1.bf16.msra.mxu0 0
      %4331 = vmatprep.subr.bf16.mxu0 0
      %4332 = vmatpush1.bf16.msra.mxu0 0
      %4333 = vmatprep.subr.bf16.mxu0 0
      %4334 = vmatpush1.bf16.msra.mxu0 0
      %4335 = vmatprep.subr.bf16.mxu0 0
      %4336 = vmatpush1.bf16.msra.mxu0 0
      %4337 = vmatprep.subr.bf16.mxu0 0
      %4338 = vmatpush1.bf16.msra.mxu0 0
      %4339 = vmatprep.subr.bf16.mxu0 0
      %4340 = vmatpush1.bf16.msra.mxu0 0
      %4341 = vmatprep.subr.bf16.mxu0 0
      %4342 = vmatpush1.bf16.msra.mxu0 0
      %4343 = vmatprep.subr.bf16.mxu0 0
      %4344 = vmatpush1.bf16.msra.mxu0 0
      %4345 = vmatprep.subr.bf16.mxu0 0
      %4346 = vmatpush1.bf16.msra.mxu0 0
      %4347 = vmatprep.subr.bf16.mxu0 0
      %4348 = vmatpush1.bf16.msra.mxu0 0
      %4349 = vmatprep.mubr.bf16.mxu0 0
      %4350 = vmatmul.mubr.bf16.gmra.mrb[0].mxu0 %v697
      %v4351 = vpop.f32.mrb[0].mxu0
      %v4352 = vadd.f32 %v4247, %v4351
      %v4353 = vpop.f32.mrb[0].mxu0
      %v4354 = vpop.f32.mrb[0].mxu0
      %v4355 = vadd.f32 %v4250, %v4354
      %v4356 = vpop.f32.mrb[0].mxu0
      %4357 = vmatprep.mubr.bf16.mxu0 0
      %4358 = vmatmul.mubr.bf16.gmra.mrb[0].mxu0 %v700
      %v4359 = vpop.f32.mrb[0].mxu0
      %v4360 = vadd.f32 %v4255, %v4359
      %v4361 = vpop.f32.mrb[0].mxu0
      %v4362 = vpop.f32.mrb[0].mxu0
      %v4363 = vadd.f32 %v4258, %v4362
      %v4364 = vpop.f32.mrb[0].mxu0
      %4365 = vmatprep.mubr.bf16.mxu0 0
      %4366 = vmatmul.mubr.bf16.gmra.mrb[0].mxu0 %v703
      %v4367 = vpop.f32.mrb[0].mxu0
      %v4368 = vadd.f32 %v4263, %v4367
      %v4369 = vpop.f32.mrb[0].mxu0
      %v4370 = vpop.f32.mrb[0].mxu0
      %v4371 = vadd.f32 %v4266, %v4370
      %v4372 = vpop.f32.mrb[0].mxu0
      %4373 = vmatprep.mubr.bf16.mxu0 0
      %4374 = vmatmul.mubr.bf16.gmra.mrb[0].mxu0 %v706
      %v4375 = vpop.f32.mrb[0].mxu0
      %v4376 = vadd.f32 %v4271, %v4375
      %v4377 = vpop.f32.mrb[0].mxu0
      %v4378 = vpop.f32.mrb[0].mxu0
      %v4379 = vadd.f32 %v4274, %v4378
      %v4380 = vpop.f32.mrb[0].mxu0
      %4381 = vmatprep.mubr.bf16.mxu0 0
      %4382 = vmatmul.mubr.bf16.gmra.mrb[0].mxu0 %v709
      %v4383 = vpop.f32.mrb[0].mxu0
      %v4384 = vadd.f32 %v4279, %v4383
      %v4385 = vpop.f32.mrb[0].mxu0
      %v4386 = vpop.f32.mrb[0].mxu0
      %v4387 = vadd.f32 %v4282, %v4386
      %v4388 = vpop.f32.mrb[0].mxu0
      %4389 = vmatprep.mubr.bf16.mxu0 0
      %4390 = vmatmul.mubr.bf16.gmra.mrb[0].mxu0 %v712
      %v4391 = vpop.f32.mrb[0].mxu0
      %v4392 = vadd.f32 %v4287, %v4391
      %v4393 = vpop.f32.mrb[0].mxu0
      %v4394 = vpop.f32.mrb[0].mxu0
      %v4395 = vadd.f32 %v4290, %v4394
      %v4396 = vpop.f32.mrb[0].mxu0
      %4397 = vmatprep.mubr.bf16.mxu0 0
      %4398 = vmatmul.mubr.bf16.gmra.mrb[0].mxu0 %v715
      %v4399 = vpop.f32.mrb[0].mxu0
      %v4400 = vadd.f32 %v4295, %v4399
      %v4401 = vpop.f32.mrb[0].mxu0
      %v4402 = vpop.f32.mrb[0].mxu0
      %v4403 = vadd.f32 %v4298, %v4402
      %v4404 = vpop.f32.mrb[0].mxu0
      %4405 = vmatprep.mubr.bf16.mxu0 0
      %4406 = vmatmul.mubr.bf16.gmra.mrb[0].mxu0 %v718
      %v4407 = vpop.f32.mrb[0].mxu0
      %v4408 = vadd.f32 %v4303, %v4407
      %v4409 = vpop.f32.mrb[0].mxu0
      %v4410 = vpop.f32.mrb[0].mxu0
      %v4411 = vadd.f32 %v4306, %v4410
      %v4412 = vpop.f32.mrb[0].mxu0
      %4413 = vdwg.mxu0
      %v4414 = vld [vmem:[%s4] sm:$0xf]
      %v4415 = vld [vmem:[%s4 + $0x4] sm:$0xf]
      %v4416 = vld [vmem:[%s4 + $0x8] sm:$0xf]
      %v4417 = vld [vmem:[%s4 + $0xc] sm:$0xf]
      %v4418 = vld [vmem:[%s4 + $0x10] sm:$0xf]
      %v4419 = vld [vmem:[%s4 + $0x14] sm:$0xf]
      %v4420 = vld [vmem:[%s4 + $0x18] sm:$0xf]
      %v4421 = vld [vmem:[%s4 + $0x1c] sm:$0xf]
      %v4422 = vld [vmem:[%s4 + $0x20] sm:$0x1]
      %v4432 = vunpack.c.l.b16 %v4414
      %v4433 = vunpack.c.l.b16 %v4415
      %v4434 = vunpack.c.l.b16 %v4416
      %v4435 = vunpack.c.l.b16 %v4417
      %v4436 = vunpack.c.l.b16 %v4418
      %v4437 = vunpack.c.l.b16 %v4419
      %v4438 = vunpack.c.l.b16 %v4420
      %v4439 = vunpack.c.l.b16 %v4421
      %v4440 = vunpack.c.l.b16 %v4422
      %v4441 = vpack.c.b16 %v4433, %v4432
      %v4442 = vpack.c.b16 %v4435, %v4434
      %v4443 = vpack.c.b16 %v4437, %v4436
      %v4444 = vpack.c.b16 %v4439, %v4438
      %v4445 = vpack.c.b16 %v4440, %v4440
      %v4451 = vsel %vm4183, %v4137, 0
      %v4454 = vsel %vm4183, %v4138, 0
      %v4457 = vsel %vm4183, %v4139, 0
      %v4460 = vsel %vm4183, %v4140, 0
      %v4463 = vsel %vm4183, %v4141, 0
      %v4466 = vsel %vm4183, %v4142, 0
      %v4469 = vsel %vm4183, %v4143, 0
      %v4472 = vsel %vm4183, %v4144, 0
      %v4475 = vsel %vm4208, %v4445, 0
      %4477 = vmatprep.subr.bf16.mxu0 0
      %4478 = vmatpush1.bf16.msra.mxu0 %v4441
      %4479 = vmatprep.subr.bf16.mxu0 0
      %4480 = vmatpush1.bf16.msra.mxu0 %v4442
      %4481 = vmatprep.subr.bf16.mxu0 0
      %4482 = vmatpush1.bf16.msra.mxu0 %v4443
      %4483 = vmatprep.subr.bf16.mxu0 0
      %4484 = vmatpush1.bf16.msra.mxu0 %v4444
      %4485 = vmatprep.subr.bf16.mxu0 0
      %4486 = vmatpush1.bf16.msra.mxu0 %v4475
      %4487 = vmatprep.subr.bf16.mxu0 0
      %4488 = vmatpush1.bf16.msra.mxu0 0
      %4489 = vmatprep.subr.bf16.mxu0 0
      %4490 = vmatpush1.bf16.msra.mxu0 0
      %4491 = vmatprep.subr.bf16.mxu0 0
      %4492 = vmatpush1.bf16.msra.mxu0 0
      %4493 = vmatprep.subr.bf16.mxu0 0
      %4494 = vmatpush1.bf16.msra.mxu0 0
      %4495 = vmatprep.subr.bf16.mxu0 0
      %4496 = vmatpush1.bf16.msra.mxu0 0
      %4497 = vmatprep.subr.bf16.mxu0 0
      %4498 = vmatpush1.bf16.msra.mxu0 0
      %4499 = vmatprep.subr.bf16.mxu0 0
      %4500 = vmatpush1.bf16.msra.mxu0 0
      %4501 = vmatprep.subr.bf16.mxu0 0
      %4502 = vmatpush1.bf16.msra.mxu0 0
      %4503 = vmatprep.subr.bf16.mxu0 0
      %4504 = vmatpush1.bf16.msra.mxu0 0
      %4505 = vmatprep.subr.bf16.mxu0 0
      %4506 = vmatpush1.bf16.msra.mxu0 0
      %4507 = vmatprep.subr.bf16.mxu0 0
      %4508 = vmatpush1.bf16.msra.mxu0 0
      %4509 = vmatprep.mubr.bf16.mxu0 0
      %4510 = vmatmul.mubr.bf16.gmra.mrb[0].mxu0 %v4451
      %v4511 = vpop.f32.mrb[0].mxu0
      %v4512 = vadd.f32 0.0, %v4511
      %v4513 = vpop.f32.mrb[0].mxu0
      %v4514 = vpop.f32.mrb[0].mxu0
      %v4515 = vadd.f32 0.0, %v4514
      %v4516 = vpop.f32.mrb[0].mxu0
      %4517 = vmatprep.mubr.bf16.mxu0 0
      %4518 = vmatmul.mubr.bf16.gmra.mrb[0].mxu0 %v4454
      %v4519 = vpop.f32.mrb[0].mxu0
      %v4520 = vadd.f32 0.0, %v4519
      %v4521 = vpop.f32.mrb[0].mxu0
      %v4522 = vpop.f32.mrb[0].mxu0
      %v4523 = vadd.f32 0.0, %v4522
      %v4524 = vpop.f32.mrb[0].mxu0
      %4525 = vmatprep.mubr.bf16.mxu0 0
      %4526 = vmatmul.mubr.bf16.gmra.mrb[0].mxu0 %v4457
      %v4527 = vpop.f32.mrb[0].mxu0
      %v4528 = vadd.f32 0.0, %v4527
      %v4529 = vpop.f32.mrb[0].mxu0
      %v4530 = vpop.f32.mrb[0].mxu0
      %v4531 = vadd.f32 0.0, %v4530
      %v4532 = vpop.f32.mrb[0].mxu0
      %4533 = vmatprep.mubr.bf16.mxu0 0
      %4534 = vmatmul.mubr.bf16.gmra.mrb[0].mxu0 %v4460
      %v4535 = vpop.f32.mrb[0].mxu0
      %v4536 = vadd.f32 0.0, %v4535
      %v4537 = vpop.f32.mrb[0].mxu0
      %v4538 = vpop.f32.mrb[0].mxu0
      %v4539 = vadd.f32 0.0, %v4538
      %v4540 = vpop.f32.mrb[0].mxu0
      %4541 = vmatprep.mubr.bf16.mxu0 0
      %4542 = vmatmul.mubr.bf16.gmra.mrb[0].mxu0 %v4463
      %v4543 = vpop.f32.mrb[0].mxu0
      %v4544 = vadd.f32 0.0, %v4543
      %v4545 = vpop.f32.mrb[0].mxu0
      %v4546 = vpop.f32.mrb[0].mxu0
      %v4547 = vadd.f32 0.0, %v4546
      %v4548 = vpop.f32.mrb[0].mxu0
      %4549 = vmatprep.mubr.bf16.mxu0 0
      %4550 = vmatmul.mubr.bf16.gmra.mrb[0].mxu0 %v4466
      %v4551 = vpop.f32.mrb[0].mxu0
      %v4552 = vadd.f32 0.0, %v4551
      %v4553 = vpop.f32.mrb[0].mxu0
      %v4554 = vpop.f32.mrb[0].mxu0
      %v4555 = vadd.f32 0.0, %v4554
      %v4556 = vpop.f32.mrb[0].mxu0
      %4557 = vmatprep.mubr.bf16.mxu0 0
      %4558 = vmatmul.mubr.bf16.gmra.mrb[0].mxu0 %v4469
      %v4559 = vpop.f32.mrb[0].mxu0
      %v4560 = vadd.f32 0.0, %v4559
      %v4561 = vpop.f32.mrb[0].mxu0
      %v4562 = vpop.f32.mrb[0].mxu0
      %v4563 = vadd.f32 0.0, %v4562
      %v4564 = vpop.f32.mrb[0].mxu0
      %4565 = vmatprep.mubr.bf16.mxu0 0
      %4566 = vmatmul.mubr.bf16.gmra.mrb[0].mxu0 %v4472
      %v4567 = vpop.f32.mrb[0].mxu0
      %v4568 = vadd.f32 0.0, %v4567
      %v4569 = vpop.f32.mrb[0].mxu0
      %v4570 = vpop.f32.mrb[0].mxu0
      %v4571 = vadd.f32 0.0, %v4570
      %v4572 = vpop.f32.mrb[0].mxu0
      %4573 = vdwg.mxu0
      %v4574 = vadd.f32 %v4352, %v4512
      %v4575 = vadd.f32 %v4355, %v4515
      %v4576 = vadd.f32 %v4360, %v4520
      %v4577 = vadd.f32 %v4363, %v4523
      %v4578 = vadd.f32 %v4368, %v4528
      %v4579 = vadd.f32 %v4371, %v4531
      %v4580 = vadd.f32 %v4376, %v4536
      %v4581 = vadd.f32 %v4379, %v4539
      %v4582 = vadd.f32 %v4384, %v4544
      %v4583 = vadd.f32 %v4387, %v4547
      %v4584 = vadd.f32 %v4392, %v4552
      %v4585 = vadd.f32 %v4395, %v4555
      %v4586 = vadd.f32 %v4400, %v4560
      %v4587 = vadd.f32 %v4403, %v4563
      %v4588 = vadd.f32 %v4408, %v4568
      %v4589 = vadd.f32 %v4411, %v4571
      %v4590 = vld [vmem:[%s5] sm:$0x1]
      %v4592 = vlaneseq
      %v4593 = vshrl.u32 %v4592, 7
      %v4594 = vsub.s32 0, %v4593
      %v4595 = vrot.slane %v4590, %v4594
      %v4597 = vadd.f32 %v4574, %v4595
      %v4598 = vadd.f32 %v4575, %v4595
      %v4599 = vadd.f32 %v4576, %v4595
      %v4600 = vadd.f32 %v4577, %v4595
      %v4601 = vadd.f32 %v4578, %v4595
      %v4602 = vadd.f32 %v4579, %v4595
      %v4603 = vadd.f32 %v4580, %v4595
      %v4604 = vadd.f32 %v4581, %v4595
      %v4605 = vadd.f32 %v4582, %v4595
      %v4606 = vadd.f32 %v4583, %v4595
      %v4607 = vadd.f32 %v4584, %v4595
      %v4608 = vadd.f32 %v4585, %v4595
      %v4609 = vadd.f32 %v4586, %v4595
      %v4610 = vadd.f32 %v4587, %v4595
      %v4611 = vadd.f32 %v4588, %v4595
      %v4612 = vadd.f32 %v4589, %v4595
      %v4613 = vmax.f32 %v4597, 0.0
      %v4614 = vmax.f32 %v4598, 0.0
      %v4615 = vmax.f32 %v4599, 0.0
      %v4616 = vmax.f32 %v4600, 0.0
      %v4617 = vmax.f32 %v4601, 0.0
      %v4618 = vmax.f32 %v4602, 0.0
      %v4619 = vmax.f32 %v4603, 0.0
      %v4620 = vmax.f32 %v4604, 0.0
      %v4621 = vmax.f32 %v4605, 0.0
      %v4622 = vmax.f32 %v4606, 0.0
      %v4623 = vmax.f32 %v4607, 0.0
      %v4624 = vmax.f32 %v4608, 0.0
      %v4625 = vmax.f32 %v4609, 0.0
      %v4626 = vmax.f32 %v4610, 0.0
      %v4627 = vmax.f32 %v4611, 0.0
      %v4628 = vmax.f32 %v4612, 0.0
      %v4629 = vpack.c.bf16 %v4614, %v4613
      %v4630 = vpack.c.bf16 %v4616, %v4615
      %v4631 = vpack.c.bf16 %v4618, %v4617
      %v4632 = vpack.c.bf16 %v4620, %v4619
      %v4633 = vpack.c.bf16 %v4622, %v4621
      %v4634 = vpack.c.bf16 %v4624, %v4623
      %v4635 = vpack.c.bf16 %v4626, %v4625
      %v4636 = vpack.c.bf16 %v4628, %v4627
      %v4637 = vld [vmem:[%s6] sm:$0xf]
      %v4638 = vld [vmem:[%s6 + $0x4] sm:$0xf]
      %v4639 = vld [vmem:[%s6 + $0x8] sm:$0xf]
      %v4640 = vld [vmem:[%s6 + $0xc] sm:$0xf]
      %v4641 = vld [vmem:[%s6 + $0x10] sm:$0xf]
      %v4642 = vld [vmem:[%s6 + $0x14] sm:$0xf]
      %v4643 = vld [vmem:[%s6 + $0x18] sm:$0xf]
      %v4644 = vld [vmem:[%s6 + $0x1c] sm:$0xf]
      %v4645 = vld [vmem:[%s6 + $0x20] sm:$0xf]
      %v4646 = vld [vmem:[%s6 + $0x24] sm:$0xf]
      %v4647 = vld [vmem:[%s6 + $0x28] sm:$0xf]
      %v4648 = vld [vmem:[%s6 + $0x2c] sm:$0xf]
      %v4649 = vld [vmem:[%s6 + $0x30] sm:$0xf]
      %v4650 = vld [vmem:[%s6 + $0x34] sm:$0xf]
      %v4651 = vld [vmem:[%s6 + $0x38] sm:$0xf]
      %v4652 = vld [vmem:[%s6 + $0x3c] sm:$0xf]
      %v4653 = vld [vmem:[%s7] sm:$0x1]
      %v4655 = vlaneseq
      %v4656 = vshrl.u32 %v4655, 7
      %v4657 = vsub.s32 0, %v4656
      %v4658 = vrot.slane %v4653, %v4657
      %v4676 = vunpack.c.l.b16 %v4637
      %v4677 = vunpack.c.l.b16 %v4638
      %v4678 = vunpack.c.l.b16 %v4639
      %v4679 = vunpack.c.l.b16 %v4640
      %v4680 = vunpack.c.l.b16 %v4641
      %v4681 = vunpack.c.l.b16 %v4642
      %v4682 = vunpack.c.l.b16 %v4643
      %v4683 = vunpack.c.l.b16 %v4644
      %v4684 = vunpack.c.l.b16 %v4645
      %v4685 = vunpack.c.l.b16 %v4646
      %v4686 = vunpack.c.l.b16 %v4647
      %v4687 = vunpack.c.l.b16 %v4648
      %v4688 = vunpack.c.l.b16 %v4649
      %v4689 = vunpack.c.l.b16 %v4650
      %v4690 = vunpack.c.l.b16 %v4651
      %v4691 = vunpack.c.l.b16 %v4652
      %v4692 = vpack.c.b16 %v4677, %v4676
      %v4693 = vpack.c.b16 %v4679, %v4678
      %v4694 = vpack.c.b16 %v4681, %v4680
      %v4695 = vpack.c.b16 %v4683, %v4682
      %v4696 = vpack.c.b16 %v4685, %v4684
      %v4697 = vpack.c.b16 %v4687, %v4686
      %v4698 = vpack.c.b16 %v4689, %v4688
      %v4699 = vpack.c.b16 %v4691, %v4690
      %4708 = vmatprep.subr.bf16.mxu0 0
      %4709 = vmatpush1.bf16.msra.mxu0 %v4692
      %4710 = vmatprep.subr.bf16.mxu0 0
      %4711 = vmatpush1.bf16.msra.mxu0 %v4693
      %4712 = vmatprep.subr.bf16.mxu0 0
      %4713 = vmatpush1.bf16.msra.mxu0 %v4694
      %4714 = vmatprep.subr.bf16.mxu0 0
      %4715 = vmatpush1.bf16.msra.mxu0 %v4695
      %4716 = vmatprep.subr.bf16.mxu0 0
      %4717 = vmatpush1.bf16.msra.mxu0 %v4696
      %4718 = vmatprep.subr.bf16.mxu0 0
      %4719 = vmatpush1.bf16.msra.mxu0 %v4697
      %4720 = vmatprep.subr.bf16.mxu0 0
      %4721 = vmatpush1.bf16.msra.mxu0 %v4698
      %4722 = vmatprep.subr.bf16.mxu0 0
      %4723 = vmatpush1.bf16.msra.mxu0 %v4699
      %4724 = vmatprep.subr.bf16.mxu0 0
      %4725 = vmatpush1.bf16.msra.mxu0 0
      %4726 = vmatprep.subr.bf16.mxu0 0
      %4727 = vmatpush1.bf16.msra.mxu0 0
      %4728 = vmatprep.subr.bf16.mxu0 0
      %4729 = vmatpush1.bf16.msra.mxu0 0
      %4730 = vmatprep.subr.bf16.mxu0 0
      %4731 = vmatpush1.bf16.msra.mxu0 0
      %4732 = vmatprep.subr.bf16.mxu0 0
      %4733 = vmatpush1.bf16.msra.mxu0 0
      %4734 = vmatprep.subr.bf16.mxu0 0
      %4735 = vmatpush1.bf16.msra.mxu0 0
      %4736 = vmatprep.subr.bf16.mxu0 0
      %4737 = vmatpush1.bf16.msra.mxu0 0
      %4738 = vmatprep.subr.bf16.mxu0 0
      %4739 = vmatpush1.bf16.msra.mxu0 0
      %4740 = vmatprep.mubr.bf16.mxu0 0
      %4741 = vmatmul.mubr.bf16.gmra.mrb[0].mxu0 %v4629
      %v4742 = vpop.f32.mrb[0].mxu0
      %v4743 = vadd.f32 %v4658, %v4742
      %v4744 = vpop.f32.mrb[0].mxu0
      %v4745 = vpop.f32.mrb[0].mxu0
      %v4746 = vadd.f32 %v4658, %v4745
      %v4747 = vpop.f32.mrb[0].mxu0
      %4748 = vmatprep.mubr.bf16.mxu0 0
      %4749 = vmatmul.mubr.bf16.gmra.mrb[0].mxu0 %v4630
      %v4750 = vpop.f32.mrb[0].mxu0
      %v4751 = vadd.f32 %v4658, %v4750
      %v4752 = vpop.f32.mrb[0].mxu0
      %v4753 = vpop.f32.mrb[0].mxu0
      %v4754 = vadd.f32 %v4658, %v4753
      %v4755 = vpop.f32.mrb[0].mxu0
      %4756 = vmatprep.mubr.bf16.mxu0 0
      %4757 = vmatmul.mubr.bf16.gmra.mrb[0].mxu0 %v4631
      %v4758 = vpop.f32.mrb[0].mxu0
      %v4759 = vadd.f32 %v4658, %v4758
      %v4760 = vpop.f32.mrb[0].mxu0
      %v4761 = vpop.f32.mrb[0].mxu0
      %v4762 = vadd.f32 %v4658, %v4761
      %v4763 = vpop.f32.mrb[0].mxu0
      %4764 = vmatprep.mubr.bf16.mxu0 0
      %4765 = vmatmul.mubr.bf16.gmra.mrb[0].mxu0 %v4632
      %v4766 = vpop.f32.mrb[0].mxu0
      %v4767 = vadd.f32 %v4658, %v4766
      %v4768 = vpop.f32.mrb[0].mxu0
      %v4769 = vpop.f32.mrb[0].mxu0
      %v4770 = vadd.f32 %v4658, %v4769
      %v4771 = vpop.f32.mrb[0].mxu0
      %4772 = vmatprep.mubr.bf16.mxu0 0
      %4773 = vmatmul.mubr.bf16.gmra.mrb[0].mxu0 %v4633
      %v4774 = vpop.f32.mrb[0].mxu0
      %v4775 = vadd.f32 %v4658, %v4774
      %v4776 = vpop.f32.mrb[0].mxu0
      %v4777 = vpop.f32.mrb[0].mxu0
      %v4778 = vadd.f32 %v4658, %v4777
      %v4779 = vpop.f32.mrb[0].mxu0
      %4780 = vmatprep.mubr.bf16.mxu0 0
      %4781 = vmatmul.mubr.bf16.gmra.mrb[0].mxu0 %v4634
      %v4782 = vpop.f32.mrb[0].mxu0
      %v4783 = vadd.f32 %v4658, %v4782
      %v4784 = vpop.f32.mrb[0].mxu0
      %v4785 = vpop.f32.mrb[0].mxu0
      %v4786 = vadd.f32 %v4658, %v4785
      %v4787 = vpop.f32.mrb[0].mxu0
      %4788 = vmatprep.mubr.bf16.mxu0 0
      %4789 = vmatmul.mubr.bf16.gmra.mrb[0].mxu0 %v4635
      %v4790 = vpop.f32.mrb[0].mxu0
      %v4791 = vadd.f32 %v4658, %v4790
      %v4792 = vpop.f32.mrb[0].mxu0
      %v4793 = vpop.f32.mrb[0].mxu0
      %v4794 = vadd.f32 %v4658, %v4793
      %v4795 = vpop.f32.mrb[0].mxu0
      %4796 = vmatprep.mubr.bf16.mxu0 0
      %4797 = vmatmul.mubr.bf16.gmra.mrb[0].mxu0 %v4636
      %v4798 = vpop.f32.mrb[0].mxu0
      %v4799 = vadd.f32 %v4658, %v4798
      %v4800 = vpop.f32.mrb[0].mxu0
      %v4801 = vpop.f32.mrb[0].mxu0
      %v4802 = vadd.f32 %v4658, %v4801
      %v4803 = vpop.f32.mrb[0].mxu0
      %4804 = vdwg.mxu0
      %v4805 = vmax.f32 %v4743, 0.0
      %v4806 = vmax.f32 %v4746, 0.0
      %v4807 = vmax.f32 %v4751, 0.0
      %v4808 = vmax.f32 %v4754, 0.0
      %v4809 = vmax.f32 %v4759, 0.0
      %v4810 = vmax.f32 %v4762, 0.0
      %v4811 = vmax.f32 %v4767, 0.0
      %v4812 = vmax.f32 %v4770, 0.0
      %v4813 = vmax.f32 %v4775, 0.0
      %v4814 = vmax.f32 %v4778, 0.0
      %v4815 = vmax.f32 %v4783, 0.0
      %v4816 = vmax.f32 %v4786, 0.0
      %v4817 = vmax.f32 %v4791, 0.0
      %v4818 = vmax.f32 %v4794, 0.0
      %v4819 = vmax.f32 %v4799, 0.0
      %v4820 = vmax.f32 %v4802, 0.0
      %v4821 = vpack.c.bf16 %v4806, %v4805
      %v4822 = vpack.c.bf16 %v4808, %v4807
      %v4823 = vpack.c.bf16 %v4810, %v4809
      %v4824 = vpack.c.bf16 %v4812, %v4811
      %v4825 = vpack.c.bf16 %v4814, %v4813
      %v4826 = vpack.c.bf16 %v4816, %v4815
      %v4827 = vpack.c.bf16 %v4818, %v4817
      %v4828 = vpack.c.bf16 %v4820, %v4819
      %v4829 = vld [vmem:[%s8] sm:$0xff]
      %v4830 = vld [vmem:[%s8 + $0x8] sm:$0xff]
      %v4831 = vld [vmem:[%s8 + $0x10] sm:$0xff]
      %v4832 = vld [vmem:[%s8 + $0x18] sm:$0xff]
      %v4833 = vld [vmem:[%s8 + $0x20] sm:$0xff]
      %v4834 = vld [vmem:[%s8 + $0x28] sm:$0xff]
      %v4835 = vld [vmem:[%s8 + $0x30] sm:$0xff]
      %v4836 = vld [vmem:[%s8 + $0x38] sm:$0xff]
      %v4837 = vld [vmem:[%s8 + $0x40] sm:$0xff]
      %v4838 = vld [vmem:[%s8 + $0x48] sm:$0xff]
      %v4839 = vld [vmem:[%s8 + $0x50] sm:$0xff]
      %v4840 = vld [vmem:[%s8 + $0x58] sm:$0xff]
      %v4841 = vld [vmem:[%s8 + $0x60] sm:$0xff]
      %v4842 = vld [vmem:[%s8 + $0x68] sm:$0xff]
      %v4843 = vld [vmem:[%s8 + $0x70] sm:$0xff]
      %v4844 = vld [vmem:[%s8 + $0x78] sm:$0xff]
      %v4845 = vld [vmem:[%s9] sm:$0x3]
      %v4847 = vlaneseq
      %v4848 = vshrl.u32 %v4847, 7
      %v4849 = vsub.s32 0, %v4848
      %v4850 = vrot.slane %v4845, %v4849
      %v4851 = vlaneseq
      %v4852 = vshrl.u32 %v4851, 7
      %v4853 = vsub.s32 1, %v4852
      %v4854 = vrot.slane %v4845, %v4853
      %v4873 = vunpack.c.l.b16 %v4829
      %v4874 = vunpack.c.h.b16 %v4829
      %v4875 = vunpack.c.l.b16 %v4830
      %v4876 = vunpack.c.h.b16 %v4830
      %v4877 = vunpack.c.l.b16 %v4831
      %v4878 = vunpack.c.h.b16 %v4831
      %v4879 = vunpack.c.l.b16 %v4832
      %v4880 = vunpack.c.h.b16 %v4832
      %v4881 = vunpack.c.l.b16 %v4833
      %v4882 = vunpack.c.h.b16 %v4833
      %v4883 = vunpack.c.l.b16 %v4834
      %v4884 = vunpack.c.h.b16 %v4834
      %v4885 = vunpack.c.l.b16 %v4835
      %v4886 = vunpack.c.h.b16 %v4835
      %v4887 = vunpack.c.l.b16 %v4836
      %v4888 = vunpack.c.h.b16 %v4836
      %v4889 = vunpack.c.l.b16 %v4837
      %v4890 = vunpack.c.h.b16 %v4837
      %v4891 = vunpack.c.l.b16 %v4838
      %v4892 = vunpack.c.h.b16 %v4838
      %v4893 = vunpack.c.l.b16 %v4839
      %v4894 = vunpack.c.h.b16 %v4839
      %v4895 = vunpack.c.l.b16 %v4840
      %v4896 = vunpack.c.h.b16 %v4840
      %v4897 = vunpack.c.l.b16 %v4841
      %v4898 = vunpack.c.h.b16 %v4841
      %v4899 = vunpack.c.l.b16 %v4842
      %v4900 = vunpack.c.h.b16 %v4842
      %v4901 = vunpack.c.l.b16 %v4843
      %v4902 = vunpack.c.h.b16 %v4843
      %v4903 = vunpack.c.l.b16 %v4844
      %v4904 = vunpack.c.h.b16 %v4844
      %v4905 = vpack.c.b16 %v4875, %v4873
      %v4906 = vpack.c.b16 %v4876, %v4874
      %v4907 = vpack.c.b16 %v4879, %v4877
      %v4908 = vpack.c.b16 %v4880, %v4878
      %v4909 = vpack.c.b16 %v4883, %v4881
      %v4910 = vpack.c.b16 %v4884, %v4882
      %v4911 = vpack.c.b16 %v4887, %v4885
      %v4912 = vpack.c.b16 %v4888, %v4886
      %v4913 = vpack.c.b16 %v4891, %v4889
      %v4914 = vpack.c.b16 %v4892, %v4890
      %v4915 = vpack.c.b16 %v4895, %v4893
      %v4916 = vpack.c.b16 %v4896, %v4894
      %v4917 = vpack.c.b16 %v4899, %v4897
      %v4918 = vpack.c.b16 %v4900, %v4898
      %v4919 = vpack.c.b16 %v4903, %v4901
      %v4920 = vpack.c.b16 %v4904, %v4902
      %4937 = vmatprep.subr.bf16.mxu0 %v4906
      %4938 = vmatpush1.bf16.msra.mxu0 %v4905
      %4939 = vmatprep.subr.bf16.mxu0 %v4908
      %4940 = vmatpush1.bf16.msra.mxu0 %v4907
      %4941 = vmatprep.subr.bf16.mxu0 %v4910
      %4942 = vmatpush1.bf16.msra.mxu0 %v4909
      %4943 = vmatprep.subr.bf16.mxu0 %v4912
      %4944 = vmatpush1.bf16.msra.mxu0 %v4911
      %4945 = vmatprep.subr.bf16.mxu0 %v4914
      %4946 = vmatpush1.bf16.msra.mxu0 %v4913
      %4947 = vmatprep.subr.bf16.mxu0 %v4916
      %4948 = vmatpush1.bf16.msra.mxu0 %v4915
      %4949 = vmatprep.subr.bf16.mxu0 %v4918
      %4950 = vmatpush1.bf16.msra.mxu0 %v4917
      %4951 = vmatprep.subr.bf16.mxu0 %v4920
      %4952 = vmatpush1.bf16.msra.mxu0 %v4919
      %4953 = vmatprep.subr.bf16.mxu0 0
      %4954 = vmatpush1.bf16.msra.mxu0 0
      %4955 = vmatprep.subr.bf16.mxu0 0
      %4956 = vmatpush1.bf16.msra.mxu0 0
      %4957 = vmatprep.subr.bf16.mxu0 0
      %4958 = vmatpush1.bf16.msra.mxu0 0
      %4959 = vmatprep.subr.bf16.mxu0 0
      %4960 = vmatpush1.bf16.msra.mxu0 0
      %4961 = vmatprep.subr.bf16.mxu0 0
      %4962 = vmatpush1.bf16.msra.mxu0 0
      %4963 = vmatprep.subr.bf16.mxu0 0
      %4964 = vmatpush1.bf16.msra.mxu0 0
      %4965 = vmatprep.subr.bf16.mxu0 0
      %4966 = vmatpush1.bf16.msra.mxu0 0
      %4967 = vmatprep.subr.bf16.mxu0 0
      %4968 = vmatpush1.bf16.msra.mxu0 0
      %4969 = vmatprep.mubr.bf16.mxu0 0
      %4970 = vmatmul.mubr.bf16.gmra.mrb[0].mxu0 %v4821
      %v4971 = vpop.f32.mrb[0].mxu0
      %v4972 = vadd.f32 %v4850, %v4971
      %v4973 = vpop.f32.mrb[0].mxu0
      %v4974 = vadd.f32 %v4854, %v4973
      %v4975 = vpop.f32.mrb[0].mxu0
      %v4976 = vadd.f32 %v4850, %v4975
      %v4977 = vpop.f32.mrb[0].mxu0
      %v4978 = vadd.f32 %v4854, %v4977
      %4979 = vmatprep.mubr.bf16.mxu0 0
      %4980 = vmatmul.mubr.bf16.gmra.mrb[0].mxu0 %v4822
      %v4981 = vpop.f32.mrb[0].mxu0
      %v4982 = vadd.f32 %v4850, %v4981
      %v4983 = vpop.f32.mrb[0].mxu0
      %v4984 = vadd.f32 %v4854, %v4983
      %v4985 = vpop.f32.mrb[0].mxu0
      %v4986 = vadd.f32 %v4850, %v4985
      %v4987 = vpop.f32.mrb[0].mxu0
      %v4988 = vadd.f32 %v4854, %v4987
      %4989 = vmatprep.mubr.bf16.mxu0 0
      %4990 = vmatmul.mubr.bf16.gmra.mrb[0].mxu0 %v4823
      %v4991 = vpop.f32.mrb[0].mxu0
      %v4992 = vadd.f32 %v4850, %v4991
      %v4993 = vpop.f32.mrb[0].mxu0
      %v4994 = vadd.f32 %v4854, %v4993
      %v4995 = vpop.f32.mrb[0].mxu0
      %v4996 = vadd.f32 %v4850, %v4995
      %v4997 = vpop.f32.mrb[0].mxu0
      %v4998 = vadd.f32 %v4854, %v4997
      %4999 = vmatprep.mubr.bf16.mxu0 0
      %5000 = vmatmul.mubr.bf16.gmra.mrb[0].mxu0 %v4824
      %v5001 = vpop.f32.mrb[0].mxu0
      %v5002 = vadd.f32 %v4850, %v5001
      %v5003 = vpop.f32.mrb[0].mxu0
      %v5004 = vadd.f32 %v4854, %v5003
      %v5005 = vpop.f32.mrb[0].mxu0
      %v5006 = vadd.f32 %v4850, %v5005
      %v5007 = vpop.f32.mrb[0].mxu0
      %v5008 = vadd.f32 %v4854, %v5007
      %5009 = vmatprep.mubr.bf16.mxu0 0
      %5010 = vmatmul.mubr.bf16.gmra.mrb[0].mxu0 %v4825
      %v5011 = vpop.f32.mrb[0].mxu0
      %v5012 = vadd.f32 %v4850, %v5011
      %v5013 = vpop.f32.mrb[0].mxu0
      %v5014 = vadd.f32 %v4854, %v5013
      %v5015 = vpop.f32.mrb[0].mxu0
      %v5016 = vadd.f32 %v4850, %v5015
      %v5017 = vpop.f32.mrb[0].mxu0
      %v5018 = vadd.f32 %v4854, %v5017
      %5019 = vmatprep.mubr.bf16.mxu0 0
      %5020 = vmatmul.mubr.bf16.gmra.mrb[0].mxu0 %v4826
      %v5021 = vpop.f32.mrb[0].mxu0
      %v5022 = vadd.f32 %v4850, %v5021
      %v5023 = vpop.f32.mrb[0].mxu0
      %v5024 = vadd.f32 %v4854, %v5023
      %v5025 = vpop.f32.mrb[0].mxu0
      %v5026 = vadd.f32 %v4850, %v5025
      %v5027 = vpop.f32.mrb[0].mxu0
      %v5028 = vadd.f32 %v4854, %v5027
      %5029 = vmatprep.mubr.bf16.mxu0 0
      %5030 = vmatmul.mubr.bf16.gmra.mrb[0].mxu0 %v4827
      %v5031 = vpop.f32.mrb[0].mxu0
      %v5032 = vadd.f32 %v4850, %v5031
      %v5033 = vpop.f32.mrb[0].mxu0
      %v5034 = vadd.f32 %v4854, %v5033
      %v5035 = vpop.f32.mrb[0].mxu0
      %v5036 = vadd.f32 %v4850, %v5035
      %v5037 = vpop.f32.mrb[0].mxu0
      %v5038 = vadd.f32 %v4854, %v5037
      %5039 = vmatprep.mubr.bf16.mxu0 0
      %5040 = vmatmul.mubr.bf16.gmra.mrb[0].mxu0 %v4828
      %v5041 = vpop.f32.mrb[0].mxu0
      %v5042 = vadd.f32 %v4850, %v5041
      %v5043 = vpop.f32.mrb[0].mxu0
      %v5044 = vadd.f32 %v4854, %v5043
      %v5045 = vpop.f32.mrb[0].mxu0
      %v5046 = vadd.f32 %v4850, %v5045
      %v5047 = vpop.f32.mrb[0].mxu0
      %v5048 = vadd.f32 %v4854, %v5047
      %5049 = vdwg.mxu0
      %v5050 = vpack.c.bf16 %v4976, %v4972
      %v5051 = vpack.c.bf16 %v4978, %v4974
      %v5052 = vpack.c.bf16 %v4986, %v4982
      %v5053 = vpack.c.bf16 %v4988, %v4984
      %v5054 = vpack.c.bf16 %v4996, %v4992
      %v5055 = vpack.c.bf16 %v4998, %v4994
      %v5056 = vpack.c.bf16 %v5006, %v5002
      %v5057 = vpack.c.bf16 %v5008, %v5004
      %v5058 = vpack.c.bf16 %v5016, %v5012
      %v5059 = vpack.c.bf16 %v5018, %v5014
      %v5060 = vpack.c.bf16 %v5026, %v5022
      %v5061 = vpack.c.bf16 %v5028, %v5024
      %v5062 = vpack.c.bf16 %v5036, %v5032
      %v5063 = vpack.c.bf16 %v5038, %v5034
      %v5064 = vpack.c.bf16 %v5046, %v5042
      %v5065 = vpack.c.bf16 %v5048, %v5044
      %v5066 = vld [vmem:[%s10] sm:$0xf]
      %v5067 = vld [vmem:[%s10 + $0x4] sm:$0xf]
      %v5068 = vld [vmem:[%s10 + $0x8] sm:$0xf]
      %v5069 = vld [vmem:[%s10 + $0xc] sm:$0xf]
      %v5070 = vld [vmem:[%s10 + $0x10] sm:$0xf]
      %v5071 = vld [vmem:[%s10 + $0x14] sm:$0xf]
      %v5072 = vld [vmem:[%s10 + $0x18] sm:$0xf]
      %v5073 = vld [vmem:[%s10 + $0x1c] sm:$0xf]
      %v5074 = vld [vmem:[%s10 + $0x20] sm:$0xf]
      %v5075 = vld [vmem:[%s10 + $0x24] sm:$0xf]
      %v5076 = vld [vmem:[%s10 + $0x28] sm:$0xf]
      %v5077 = vld [vmem:[%s10 + $0x2c] sm:$0xf]
      %v5078 = vld [vmem:[%s10 + $0x30] sm:$0xf]
      %v5079 = vld [vmem:[%s10 + $0x34] sm:$0xf]
      %v5080 = vld [vmem:[%s10 + $0x38] sm:$0xf]
      %v5081 = vld [vmem:[%s10 + $0x3c] sm:$0xf]
      %v5082 = vld [vmem:[%s10 + $0x40] sm:$0xf]
      %v5083 = vld [vmem:[%s10 + $0x44] sm:$0xf]
      %v5084 = vld [vmem:[%s10 + $0x48] sm:$0xf]
      %v5085 = vld [vmem:[%s10 + $0x4c] sm:$0xf]
      %v5086 = vld [vmem:[%s10 + $0x50] sm:$0xf]
      %v5087 = vld [vmem:[%s10 + $0x54] sm:$0xf]
      %v5088 = vld [vmem:[%s10 + $0x58] sm:$0xf]
      %v5089 = vld [vmem:[%s10 + $0x5c] sm:$0xf]
      %v5090 = vld [vmem:[%s10 + $0x60] sm:$0xf]
      %v5091 = vld [vmem:[%s10 + $0x64] sm:$0xf]
      %v5092 = vld [vmem:[%s10 + $0x68] sm:$0xf]
      %v5093 = vld [vmem:[%s10 + $0x6c] sm:$0xf]
      %v5094 = vld [vmem:[%s10 + $0x70] sm:$0xf]
      %v5095 = vld [vmem:[%s10 + $0x74] sm:$0xf]
      %v5096 = vld [vmem:[%s10 + $0x78] sm:$0xf]
      %v5097 = vld [vmem:[%s10 + $0x7c] sm:$0xf]
      %v5098 = vld [vmem:[%s11] sm:$0x1]
      %5100 = vset.pattern.permute.xlu0 11
      %5101 = vperm.xlu0 %5100, %v499
      %v5102 = vpop.permute.xlu0 %5101
      %5105 = vset.pattern.permute.xlu0 11
      %5106 = vperm.xlu0 %5105, %v500
      %v5107 = vpop.permute.xlu0 %5106
      %5110 = vset.pattern.permute.xlu0 11
      %5111 = vperm.xlu0 %5110, %v501
      %v5112 = vpop.permute.xlu0 %5111
      %5115 = vset.pattern.permute.xlu0 11
      %5116 = vperm.xlu0 %5115, %v502
      %v5117 = vpop.permute.xlu0 %5116
      %5120 = vset.pattern.permute.xlu0 11
      %5121 = vperm.xlu0 %5120, %v503
      %v5122 = vpop.permute.xlu0 %5121
      %5125 = vset.pattern.permute.xlu0 11
      %5126 = vperm.xlu0 %5125, %v504
      %v5127 = vpop.permute.xlu0 %5126
      %5130 = vset.pattern.permute.xlu0 11
      %5131 = vperm.xlu0 %5130, %v505
      %v5132 = vpop.permute.xlu0 %5131
      %5135 = vset.pattern.permute.xlu0 11
      %5136 = vperm.xlu0 %5135, %v506
      %v5137 = vpop.permute.xlu0 %5136
      %5140 = vset.pattern.permute.xlu0 11
      %5141 = vperm.xlu0 %5140, %v507
      %v5142 = vpop.permute.xlu0 %5141
      %5145 = vset.pattern.permute.xlu0 11
      %5146 = vperm.xlu0 %5145, %v508
      %v5147 = vpop.permute.xlu0 %5146
      %5150 = vset.pattern.permute.xlu0 11
      %5151 = vperm.xlu0 %5150, %v509
      %v5152 = vpop.permute.xlu0 %5151
      %5155 = vset.pattern.permute.xlu0 11
      %5156 = vperm.xlu0 %5155, %v510
      %v5157 = vpop.permute.xlu0 %5156
      %5160 = vset.pattern.permute.xlu0 11
      %5161 = vperm.xlu0 %5160, %v511
      %v5162 = vpop.permute.xlu0 %5161
      %5165 = vset.pattern.permute.xlu0 11
      %5166 = vperm.xlu0 %5165, %v512
      %v5167 = vpop.permute.xlu0 %5166
      %5170 = vset.pattern.permute.xlu0 11
      %5171 = vperm.xlu0 %5170, %v513
      %v5172 = vpop.permute.xlu0 %5171
      %5175 = vset.pattern.permute.xlu0 11
      %5176 = vperm.xlu0 %5175, %v514
      %v5177 = vpop.permute.xlu0 %5176
      %v5180 = vlaneseq
      %v5181 = vshrl.u32 %v5180, 7
      %v5182 = vsub.s32 0, %v5181
      %v5183 = vrot.slane %v5098, %v5182
      %v5185 = vmul.f32 %v5102, %v5183
      %v5186 = vmul.f32 %v5107, %v5183
      %v5187 = vmul.f32 %v5112, %v5183
      %v5188 = vmul.f32 %v5117, %v5183
      %v5189 = vmul.f32 %v5122, %v5183
      %v5190 = vmul.f32 %v5127, %v5183
      %v5191 = vmul.f32 %v5132, %v5183
      %v5192 = vmul.f32 %v5137, %v5183
      %v5193 = vmul.f32 %v5142, %v5183
      %v5194 = vmul.f32 %v5147, %v5183
      %v5195 = vmul.f32 %v5152, %v5183
      %v5196 = vmul.f32 %v5157, %v5183
      %v5197 = vmul.f32 %v5162, %v5183
      %v5198 = vmul.f32 %v5167, %v5183
      %v5199 = vmul.f32 %v5172, %v5183
      %v5200 = vmul.f32 %v5177, %v5183
      %v5233 = vunpack.c.l.b16 %v5066
      %v5234 = vunpack.c.l.b16 %v5067
      %v5235 = vunpack.c.l.b16 %v5068
      %v5236 = vunpack.c.l.b16 %v5069
      %v5237 = vunpack.c.l.b16 %v5070
      %v5238 = vunpack.c.l.b16 %v5071
      %v5239 = vunpack.c.l.b16 %v5072
      %v5240 = vunpack.c.l.b16 %v5073
      %v5241 = vunpack.c.l.b16 %v5074
      %v5242 = vunpack.c.l.b16 %v5075
      %v5243 = vunpack.c.l.b16 %v5076
      %v5244 = vunpack.c.l.b16 %v5077
      %v5245 = vunpack.c.l.b16 %v5078
      %v5246 = vunpack.c.l.b16 %v5079
      %v5247 = vunpack.c.l.b16 %v5080
      %v5248 = vunpack.c.l.b16 %v5081
      %v5249 = vunpack.c.l.b16 %v5082
      %v5250 = vunpack.c.l.b16 %v5083
      %v5251 = vunpack.c.l.b16 %v5084
      %v5252 = vunpack.c.l.b16 %v5085
      %v5253 = vunpack.c.l.b16 %v5086
      %v5254 = vunpack.c.l.b16 %v5087
      %v5255 = vunpack.c.l.b16 %v5088
      %v5256 = vunpack.c.l.b16 %v5089
      %v5257 = vunpack.c.l.b16 %v5090
      %v5258 = vunpack.c.l.b16 %v5091
      %v5259 = vunpack.c.l.b16 %v5092
      %v5260 = vunpack.c.l.b16 %v5093
      %v5261 = vunpack.c.l.b16 %v5094
      %v5262 = vunpack.c.l.b16 %v5095
      %v5263 = vunpack.c.l.b16 %v5096
      %v5264 = vunpack.c.l.b16 %v5097
      %v5265 = vpack.c.b16 %v5234, %v5233
      %v5266 = vpack.c.b16 %v5236, %v5235
      %v5267 = vpack.c.b16 %v5238, %v5237
      %v5268 = vpack.c.b16 %v5240, %v5239
      %v5269 = vpack.c.b16 %v5242, %v5241
      %v5270 = vpack.c.b16 %v5244, %v5243
      %v5271 = vpack.c.b16 %v5246, %v5245
      %v5272 = vpack.c.b16 %v5248, %v5247
      %v5273 = vpack.c.b16 %v5250, %v5249
      %v5274 = vpack.c.b16 %v5252, %v5251
      %v5275 = vpack.c.b16 %v5254, %v5253
      %v5276 = vpack.c.b16 %v5256, %v5255
      %v5277 = vpack.c.b16 %v5258, %v5257
      %v5278 = vpack.c.b16 %v5260, %v5259
      %v5279 = vpack.c.b16 %v5262, %v5261
      %v5280 = vpack.c.b16 %v5264, %v5263
      %5297 = vmatprep.subr.bf16.mxu0 0
      %5298 = vmatpush1.bf16.msra.mxu0 %v5265
      %5299 = vmatprep.subr.bf16.mxu0 0
      %5300 = vmatpush1.bf16.msra.mxu0 %v5266
      %5301 = vmatprep.subr.bf16.mxu0 0
      %5302 = vmatpush1.bf16.msra.mxu0 %v5267
      %5303 = vmatprep.subr.bf16.mxu0 0
      %5304 = vmatpush1.bf16.msra.mxu0 %v5268
      %5305 = vmatprep.subr.bf16.mxu0 0
      %5306 = vmatpush1.bf16.msra.mxu0 %v5269
      %5307 = vmatprep.subr.bf16.mxu0 0
      %5308 = vmatpush1.bf16.msra.mxu0 %v5270
      %5309 = vmatprep.subr.bf16.mxu0 0
      %5310 = vmatpush1.bf16.msra.mxu0 %v5271
      %5311 = vmatprep.subr.bf16.mxu0 0
      %5312 = vmatpush1.bf16.msra.mxu0 %v5272
      %5313 = vmatprep.subr.bf16.mxu0 0
      %5314 = vmatpush1.bf16.msra.mxu0 %v5273
      %5315 = vmatprep.subr.bf16.mxu0 0
      %5316 = vmatpush1.bf16.msra.mxu0 %v5274
      %5317 = vmatprep.subr.bf16.mxu0 0
      %5318 = vmatpush1.bf16.msra.mxu0 %v5275
      %5319 = vmatprep.subr.bf16.mxu0 0
      %5320 = vmatpush1.bf16.msra.mxu0 %v5276
      %5321 = vmatprep.subr.bf16.mxu0 0
      %5322 = vmatpush1.bf16.msra.mxu0 %v5277
      %5323 = vmatprep.subr.bf16.mxu0 0
      %5324 = vmatpush1.bf16.msra.mxu0 %v5278
      %5325 = vmatprep.subr.bf16.mxu0 0
      %5326 = vmatpush1.bf16.msra.mxu0 %v5279
      %5327 = vmatprep.subr.bf16.mxu0 0
      %5328 = vmatpush1.bf16.msra.mxu0 %v5280
      %5329 = vmatprep.mubr.bf16.mxu0 %v5051
      %5330 = vmatmul.mubr.bf16.gmra.mrb[0].mxu0 %v5050
      %v5331 = vpop.f32.mrb[0].mxu0
      %v5332 = vadd.f32 %v5185, %v5331
      %v5333 = vpop.f32.mrb[0].mxu0
      %v5334 = vpop.f32.mrb[0].mxu0
      %v5335 = vadd.f32 %v5186, %v5334
      %v5336 = vpop.f32.mrb[0].mxu0
      %5337 = vmatprep.mubr.bf16.mxu0 %v5053
      %5338 = vmatmul.mubr.bf16.gmra.mrb[0].mxu0 %v5052
      %v5339 = vpop.f32.mrb[0].mxu0
      %v5340 = vadd.f32 %v5187, %v5339
      %v5341 = vpop.f32.mrb[0].mxu0
      %v5342 = vpop.f32.mrb[0].mxu0
      %v5343 = vadd.f32 %v5188, %v5342
      %v5344 = vpop.f32.mrb[0].mxu0
      %5345 = vmatprep.mubr.bf16.mxu0 %v5055
      %5346 = vmatmul.mubr.bf16.gmra.mrb[0].mxu0 %v5054
      %v5347 = vpop.f32.mrb[0].mxu0
      %v5348 = vadd.f32 %v5189, %v5347
      %v5349 = vpop.f32.mrb[0].mxu0
      %v5350 = vpop.f32.mrb[0].mxu0
      %v5351 = vadd.f32 %v5190, %v5350
      %v5352 = vpop.f32.mrb[0].mxu0
      %5353 = vmatprep.mubr.bf16.mxu0 %v5057
      %5354 = vmatmul.mubr.bf16.gmra.mrb[0].mxu0 %v5056
      %v5355 = vpop.f32.mrb[0].mxu0
      %v5356 = vadd.f32 %v5191, %v5355
      %v5357 = vpop.f32.mrb[0].mxu0
      %v5358 = vpop.f32.mrb[0].mxu0
      %v5359 = vadd.f32 %v5192, %v5358
      %v5360 = vpop.f32.mrb[0].mxu0
      %5361 = vmatprep.mubr.bf16.mxu0 %v5059
      %5362 = vmatmul.mubr.bf16.gmra.mrb[0].mxu0 %v5058
      %v5363 = vpop.f32.mrb[0].mxu0
      %v5364 = vadd.f32 %v5193, %v5363
      %v5365 = vpop.f32.mrb[0].mxu0
      %v5366 = vpop.f32.mrb[0].mxu0
      %v5367 = vadd.f32 %v5194, %v5366
      %v5368 = vpop.f32.mrb[0].mxu0
      %5369 = vmatprep.mubr.bf16.mxu0 %v5061
      %5370 = vmatmul.mubr.bf16.gmra.mrb[0].mxu0 %v5060
      %v5371 = vpop.f32.mrb[0].mxu0
      %v5372 = vadd.f32 %v5195, %v5371
      %v5373 = vpop.f32.mrb[0].mxu0
      %v5374 = vpop.f32.mrb[0].mxu0
      %v5375 = vadd.f32 %v5196, %v5374
      %v5376 = vpop.f32.mrb[0].mxu0
      %5377 = vmatprep.mubr.bf16.mxu0 %v5063
      %5378 = vmatmul.mubr.bf16.gmra.mrb[0].mxu0 %v5062
      %v5379 = vpop.f32.mrb[0].mxu0
      %v5380 = vadd.f32 %v5197, %v5379
      %v5381 = vpop.f32.mrb[0].mxu0
      %v5382 = vpop.f32.mrb[0].mxu0
      %v5383 = vadd.f32 %v5198, %v5382
      %v5384 = vpop.f32.mrb[0].mxu0
      %5385 = vmatprep.mubr.bf16.mxu0 %v5065
      %5386 = vmatmul.mubr.bf16.gmra.mrb[0].mxu0 %v5064
      %v5387 = vpop.f32.mrb[0].mxu0
      %v5388 = vadd.f32 %v5199, %v5387
      %v5389 = vpop.f32.mrb[0].mxu0
      %v5390 = vpop.f32.mrb[0].mxu0
      %v5391 = vadd.f32 %v5200, %v5390
      %v5392 = vpop.f32.mrb[0].mxu0
      %5393 = vdwg.mxu0
      %v5394 = vld [vmem:[%s12] sm:$0x1]
      %v5396 = vlaneseq
      %v5397 = vshrl.u32 %v5396, 7
      %v5398 = vsub.s32 0, %v5397
      %v5399 = vrot.slane %v5394, %v5398
      %v5401 = vadd.f32 %v5332, %v5399
      %v5402 = vadd.f32 %v5335, %v5399
      %v5403 = vadd.f32 %v5340, %v5399
      %v5404 = vadd.f32 %v5343, %v5399
      %v5405 = vadd.f32 %v5348, %v5399
      %v5406 = vadd.f32 %v5351, %v5399
      %v5407 = vadd.f32 %v5356, %v5399
      %v5408 = vadd.f32 %v5359, %v5399
      %v5409 = vadd.f32 %v5364, %v5399
      %v5410 = vadd.f32 %v5367, %v5399
      %v5411 = vadd.f32 %v5372, %v5399
      %v5412 = vadd.f32 %v5375, %v5399
      %v5413 = vadd.f32 %v5380, %v5399
      %v5414 = vadd.f32 %v5383, %v5399
      %v5415 = vadd.f32 %v5388, %v5399
      %v5416 = vadd.f32 %v5391, %v5399
      %v5417 = vmax.f32 %v5401, 0.0
      %v5418 = vmax.f32 %v5402, 0.0
      %v5419 = vmax.f32 %v5403, 0.0
      %v5420 = vmax.f32 %v5404, 0.0
      %v5421 = vmax.f32 %v5405, 0.0
      %v5422 = vmax.f32 %v5406, 0.0
      %v5423 = vmax.f32 %v5407, 0.0
      %v5424 = vmax.f32 %v5408, 0.0
      %v5425 = vmax.f32 %v5409, 0.0
      %v5426 = vmax.f32 %v5410, 0.0
      %v5427 = vmax.f32 %v5411, 0.0
      %v5428 = vmax.f32 %v5412, 0.0
      %v5429 = vmax.f32 %v5413, 0.0
      %v5430 = vmax.f32 %v5414, 0.0
      %v5431 = vmax.f32 %v5415, 0.0
      %v5432 = vmax.f32 %v5416, 0.0
      %v5433 = vpack.c.bf16 %v5418, %v5417
      %v5434 = vpack.c.bf16 %v5420, %v5419
      %v5435 = vpack.c.bf16 %v5422, %v5421
      %v5436 = vpack.c.bf16 %v5424, %v5423
      %v5437 = vpack.c.bf16 %v5426, %v5425
      %v5438 = vpack.c.bf16 %v5428, %v5427
      %v5439 = vpack.c.bf16 %v5430, %v5429
      %v5440 = vpack.c.bf16 %v5432, %v5431
      %v5441 = vld [vmem:[%s13] sm:$0xf]
      %v5442 = vld [vmem:[%s13 + $0x4] sm:$0xf]
      %v5443 = vld [vmem:[%s13 + $0x8] sm:$0xf]
      %v5444 = vld [vmem:[%s13 + $0xc] sm:$0xf]
      %v5445 = vld [vmem:[%s13 + $0x10] sm:$0xf]
      %v5446 = vld [vmem:[%s13 + $0x14] sm:$0xf]
      %v5447 = vld [vmem:[%s13 + $0x18] sm:$0xf]
      %v5448 = vld [vmem:[%s13 + $0x1c] sm:$0xf]
      %v5449 = vld [vmem:[%s13 + $0x20] sm:$0xf]
      %v5450 = vld [vmem:[%s13 + $0x24] sm:$0xf]
      %v5451 = vld [vmem:[%s13 + $0x28] sm:$0xf]
      %v5452 = vld [vmem:[%s13 + $0x2c] sm:$0xf]
      %v5453 = vld [vmem:[%s13 + $0x30] sm:$0xf]
      %v5454 = vld [vmem:[%s13 + $0x34] sm:$0xf]
      %v5455 = vld [vmem:[%s13 + $0x38] sm:$0xf]
      %v5456 = vld [vmem:[%s13 + $0x3c] sm:$0xf]
      %v5457 = vld [vmem:[%s14] sm:$0x1]
      %v5459 = vlaneseq
      %v5460 = vshrl.u32 %v5459, 7
      %v5461 = vsub.s32 0, %v5460
      %v5462 = vrot.slane %v5457, %v5461
      %v5480 = vunpack.c.l.b16 %v5441
      %v5481 = vunpack.c.l.b16 %v5442
      %v5482 = vunpack.c.l.b16 %v5443
      %v5483 = vunpack.c.l.b16 %v5444
      %v5484 = vunpack.c.l.b16 %v5445
      %v5485 = vunpack.c.l.b16 %v5446
      %v5486 = vunpack.c.l.b16 %v5447
      %v5487 = vunpack.c.l.b16 %v5448
      %v5488 = vunpack.c.l.b16 %v5449
      %v5489 = vunpack.c.l.b16 %v5450
      %v5490 = vunpack.c.l.b16 %v5451
      %v5491 = vunpack.c.l.b16 %v5452
      %v5492 = vunpack.c.l.b16 %v5453
      %v5493 = vunpack.c.l.b16 %v5454
      %v5494 = vunpack.c.l.b16 %v5455
      %v5495 = vunpack.c.l.b16 %v5456
      %v5496 = vpack.c.b16 %v5481, %v5480
      %v5497 = vpack.c.b16 %v5483, %v5482
      %v5498 = vpack.c.b16 %v5485, %v5484
      %v5499 = vpack.c.b16 %v5487, %v5486
      %v5500 = vpack.c.b16 %v5489, %v5488
      %v5501 = vpack.c.b16 %v5491, %v5490
      %v5502 = vpack.c.b16 %v5493, %v5492
      %v5503 = vpack.c.b16 %v5495, %v5494
      %5512 = vmatprep.subr.bf16.mxu0 0
      %5513 = vmatpush1.bf16.msra.mxu0 %v5496
      %5514 = vmatprep.subr.bf16.mxu0 0
      %5515 = vmatpush1.bf16.msra.mxu0 %v5497
      %5516 = vmatprep.subr.bf16.mxu0 0
      %5517 = vmatpush1.bf16.msra.mxu0 %v5498
      %5518 = vmatprep.subr.bf16.mxu0 0
      %5519 = vmatpush1.bf16.msra.mxu0 %v5499
      %5520 = vmatprep.subr.bf16.mxu0 0
      %5521 = vmatpush1.bf16.msra.mxu0 %v5500
      %5522 = vmatprep.subr.bf16.mxu0 0
      %5523 = vmatpush1.bf16.msra.mxu0 %v5501
      %5524 = vmatprep.subr.bf16.mxu0 0
      %5525 = vmatpush1.bf16.msra.mxu0 %v5502
      %5526 = vmatprep.subr.bf16.mxu0 0
      %5527 = vmatpush1.bf16.msra.mxu0 %v5503
      %5528 = vmatprep.subr.bf16.mxu0 0
      %5529 = vmatpush1.bf16.msra.mxu0 0
      %5530 = vmatprep.subr.bf16.mxu0 0
      %5531 = vmatpush1.bf16.msra.mxu0 0
      %5532 = vmatprep.subr.bf16.mxu0 0
      %5533 = vmatpush1.bf16.msra.mxu0 0
      %5534 = vmatprep.subr.bf16.mxu0 0
      %5535 = vmatpush1.bf16.msra.mxu0 0
      %5536 = vmatprep.subr.bf16.mxu0 0
      %5537 = vmatpush1.bf16.msra.mxu0 0
      %5538 = vmatprep.subr.bf16.mxu0 0
      %5539 = vmatpush1.bf16.msra.mxu0 0
      %5540 = vmatprep.subr.bf16.mxu0 0
      %5541 = vmatpush1.bf16.msra.mxu0 0
      %5542 = vmatprep.subr.bf16.mxu0 0
      %5543 = vmatpush1.bf16.msra.mxu0 0
      %5544 = vmatprep.mubr.bf16.mxu0 0
      %5545 = vmatmul.mubr.bf16.gmra.mrb[0].mxu0 %v5433
      %v5546 = vpop.f32.mrb[0].mxu0
      %v5547 = vadd.f32 %v5462, %v5546
      %v5548 = vpop.f32.mrb[0].mxu0
      %v5549 = vpop.f32.mrb[0].mxu0
      %v5550 = vadd.f32 %v5462, %v5549
      %v5551 = vpop.f32.mrb[0].mxu0
      %5552 = vmatprep.mubr.bf16.mxu0 0
      %5553 = vmatmul.mubr.bf16.gmra.mrb[0].mxu0 %v5434
      %v5554 = vpop.f32.mrb[0].mxu0
      %v5555 = vadd.f32 %v5462, %v5554
      %v5556 = vpop.f32.mrb[0].mxu0
      %v5557 = vpop.f32.mrb[0].mxu0
      %v5558 = vadd.f32 %v5462, %v5557
      %v5559 = vpop.f32.mrb[0].mxu0
      %5560 = vmatprep.mubr.bf16.mxu0 0
      %5561 = vmatmul.mubr.bf16.gmra.mrb[0].mxu0 %v5435
      %v5562 = vpop.f32.mrb[0].mxu0
      %v5563 = vadd.f32 %v5462, %v5562
      %v5564 = vpop.f32.mrb[0].mxu0
      %v5565 = vpop.f32.mrb[0].mxu0
      %v5566 = vadd.f32 %v5462, %v5565
      %v5567 = vpop.f32.mrb[0].mxu0
      %5568 = vmatprep.mubr.bf16.mxu0 0
      %5569 = vmatmul.mubr.bf16.gmra.mrb[0].mxu0 %v5436
      %v5570 = vpop.f32.mrb[0].mxu0
      %v5571 = vadd.f32 %v5462, %v5570
      %v5572 = vpop.f32.mrb[0].mxu0
      %v5573 = vpop.f32.mrb[0].mxu0
      %v5574 = vadd.f32 %v5462, %v5573
      %v5575 = vpop.f32.mrb[0].mxu0
      %5576 = vmatprep.mubr.bf16.mxu0 0
      %5577 = vmatmul.mubr.bf16.gmra.mrb[0].mxu0 %v5437
      %v5578 = vpop.f32.mrb[0].mxu0
      %v5579 = vadd.f32 %v5462, %v5578
      %v5580 = vpop.f32.mrb[0].mxu0
      %v5581 = vpop.f32.mrb[0].mxu0
      %v5582 = vadd.f32 %v5462, %v5581
      %v5583 = vpop.f32.mrb[0].mxu0
      %5584 = vmatprep.mubr.bf16.mxu0 0
      %5585 = vmatmul.mubr.bf16.gmra.mrb[0].mxu0 %v5438
      %v5586 = vpop.f32.mrb[0].mxu0
      %v5587 = vadd.f32 %v5462, %v5586
      %v5588 = vpop.f32.mrb[0].mxu0
      %v5589 = vpop.f32.mrb[0].mxu0
      %v5590 = vadd.f32 %v5462, %v5589
      %v5591 = vpop.f32.mrb[0].mxu0
      %5592 = vmatprep.mubr.bf16.mxu0 0
      %5593 = vmatmul.mubr.bf16.gmra.mrb[0].mxu0 %v5439
      %v5594 = vpop.f32.mrb[0].mxu0
      %v5595 = vadd.f32 %v5462, %v5594
      %v5596 = vpop.f32.mrb[0].mxu0
      %v5597 = vpop.f32.mrb[0].mxu0
      %v5598 = vadd.f32 %v5462, %v5597
      %v5599 = vpop.f32.mrb[0].mxu0
      %5600 = vmatprep.mubr.bf16.mxu0 0
      %5601 = vmatmul.mubr.bf16.gmra.mrb[0].mxu0 %v5440
      %v5602 = vpop.f32.mrb[0].mxu0
      %v5603 = vadd.f32 %v5462, %v5602
      %v5604 = vpop.f32.mrb[0].mxu0
      %v5605 = vpop.f32.mrb[0].mxu0
      %v5606 = vadd.f32 %v5462, %v5605
      %v5607 = vpop.f32.mrb[0].mxu0
      %5608 = vdwg.mxu0
      %v5609 = vxor.u32 %v5547, 2147483648
      %v5610 = vxor.u32 %v5550, 2147483648
      %v5611 = vxor.u32 %v5555, 2147483648
      %v5612 = vxor.u32 %v5558, 2147483648
      %v5613 = vxor.u32 %v5563, 2147483648
      %v5614 = vxor.u32 %v5566, 2147483648
      %v5615 = vxor.u32 %v5571, 2147483648
      %v5616 = vxor.u32 %v5574, 2147483648
      %v5617 = vxor.u32 %v5579, 2147483648
      %v5618 = vxor.u32 %v5582, 2147483648
      %v5619 = vxor.u32 %v5587, 2147483648
      %v5620 = vxor.u32 %v5590, 2147483648
      %v5621 = vxor.u32 %v5595, 2147483648
      %v5622 = vxor.u32 %v5598, 2147483648
      %v5623 = vxor.u32 %v5603, 2147483648
      %v5624 = vxor.u32 %v5606, 2147483648
      %v5625 = vmul.f32 %v5609, 1.442695
      %v5626 = vpow.pop %v5625
      %v5627 = vmul.f32 %v5610, 1.442695
      %v5628 = vpow.pop %v5627
      %v5629 = vmul.f32 %v5611, 1.442695
      %v5630 = vpow.pop %v5629
      %v5631 = vmul.f32 %v5612, 1.442695
      %v5632 = vpow.pop %v5631
      %v5633 = vmul.f32 %v5613, 1.442695
      %v5634 = vpow.pop %v5633
      %v5635 = vmul.f32 %v5614, 1.442695
      %v5636 = vpow.pop %v5635
      %v5637 = vmul.f32 %v5615, 1.442695
      %v5638 = vpow.pop %v5637
      %v5639 = vmul.f32 %v5616, 1.442695
      %v5640 = vpow.pop %v5639
      %v5641 = vmul.f32 %v5617, 1.442695
      %v5642 = vpow.pop %v5641
      %v5643 = vmul.f32 %v5618, 1.442695
      %v5644 = vpow.pop %v5643
      %v5645 = vmul.f32 %v5619, 1.442695
      %v5646 = vpow.pop %v5645
      %v5647 = vmul.f32 %v5620, 1.442695
      %v5648 = vpow.pop %v5647
      %v5649 = vmul.f32 %v5621, 1.442695
      %v5650 = vpow.pop %v5649
      %v5651 = vmul.f32 %v5622, 1.442695
      %v5652 = vpow.pop %v5651
      %v5653 = vmul.f32 %v5623, 1.442695
      %v5654 = vpow.pop %v5653
      %v5655 = vmul.f32 %v5624, 1.442695
      %v5656 = vpow.pop %v5655
      %v5657 = vadd.f32 %v5626, 1.0
      %v5658 = vadd.f32 %v5628, 1.0
      %v5659 = vadd.f32 %v5630, 1.0
      %v5660 = vadd.f32 %v5632, 1.0
      %v5661 = vadd.f32 %v5634, 1.0
      %v5662 = vadd.f32 %v5636, 1.0
      %v5663 = vadd.f32 %v5638, 1.0
      %v5664 = vadd.f32 %v5640, 1.0
      %v5665 = vadd.f32 %v5642, 1.0
      %v5666 = vadd.f32 %v5644, 1.0
      %v5667 = vadd.f32 %v5646, 1.0
      %v5668 = vadd.f32 %v5648, 1.0
      %v5669 = vadd.f32 %v5650, 1.0
      %v5670 = vadd.f32 %v5652, 1.0
      %v5671 = vadd.f32 %v5654, 1.0
      %v5672 = vadd.f32 %v5656, 1.0
      %v5673 = vrcp.pop %v5657
      %v5674 = vmul.f32 1.0, %v5673
      %v5675 = vrcp.pop %v5658
      %v5676 = vmul.f32 1.0, %v5675
      %v5677 = vrcp.pop %v5659
      %v5678 = vmul.f32 1.0, %v5677
      %v5679 = vrcp.pop %v5660
      %v5680 = vmul.f32 1.0, %v5679
      %v5681 = vrcp.pop %v5661
      %v5682 = vmul.f32 1.0, %v5681
      %v5683 = vrcp.pop %v5662
      %v5684 = vmul.f32 1.0, %v5683
      %v5685 = vrcp.pop %v5663
      %v5686 = vmul.f32 1.0, %v5685
      %v5687 = vrcp.pop %v5664
      %v5688 = vmul.f32 1.0, %v5687
      %v5689 = vrcp.pop %v5665
      %v5690 = vmul.f32 1.0, %v5689
      %v5691 = vrcp.pop %v5666
      %v5692 = vmul.f32 1.0, %v5691
      %v5693 = vrcp.pop %v5667
      %v5694 = vmul.f32 1.0, %v5693
      %v5695 = vrcp.pop %v5668
      %v5696 = vmul.f32 1.0, %v5695
      %v5697 = vrcp.pop %v5669
      %v5698 = vmul.f32 1.0, %v5697
      %v5699 = vrcp.pop %v5670
      %v5700 = vmul.f32 1.0, %v5699
      %v5701 = vrcp.pop %v5671
      %v5702 = vmul.f32 1.0, %v5701
      %v5703 = vrcp.pop %v5672
      %v5704 = vmul.f32 1.0, %v5703
      %v5705 = vpack.c.bf16 %v5676, %v5674
      %v5706 = vpack.c.bf16 %v5680, %v5678
      %v5707 = vpack.c.bf16 %v5684, %v5682
      %v5708 = vpack.c.bf16 %v5688, %v5686
      %v5709 = vpack.c.bf16 %v5692, %v5690
      %v5710 = vpack.c.bf16 %v5696, %v5694
      %v5711 = vpack.c.bf16 %v5700, %v5698
      %v5712 = vpack.c.bf16 %v5704, %v5702
      %v5721 = vunpack.c.l.b16 %v5705
      %v5722 = vunpack.c.h.b16 %v5705
      %v5723 = vunpack.c.l.b16 %v5706
      %v5724 = vunpack.c.h.b16 %v5706
      %v5725 = vunpack.c.l.b16 %v5707
      %v5726 = vunpack.c.h.b16 %v5707
      %v5727 = vunpack.c.l.b16 %v5708
      %v5728 = vunpack.c.h.b16 %v5708
      %v5729 = vunpack.c.l.b16 %v5709
      %v5730 = vunpack.c.h.b16 %v5709
      %v5731 = vunpack.c.l.b16 %v5710
      %v5732 = vunpack.c.h.b16 %v5710
      %v5733 = vunpack.c.l.b16 %v5711
      %v5734 = vunpack.c.h.b16 %v5711
      %v5735 = vunpack.c.l.b16 %v5712
      %v5736 = vunpack.c.h.b16 %v5712
      %v5737 = vpack.c.b16 %v5721, %v5721
      %v5738 = vpack.c.b16 %v5722, %v5722
      %v5739 = vpack.c.b16 %v5723, %v5723
      %v5740 = vpack.c.b16 %v5724, %v5724
      %v5741 = vpack.c.b16 %v5725, %v5725
      %v5742 = vpack.c.b16 %v5726, %v5726
      %v5743 = vpack.c.b16 %v5727, %v5727
      %v5744 = vpack.c.b16 %v5728, %v5728
      %v5745 = vpack.c.b16 %v5729, %v5729
      %v5746 = vpack.c.b16 %v5730, %v5730
      %v5747 = vpack.c.b16 %v5731, %v5731
      %v5748 = vpack.c.b16 %v5732, %v5732
      %v5749 = vpack.c.b16 %v5733, %v5733
      %v5750 = vpack.c.b16 %v5734, %v5734
      %v5751 = vpack.c.b16 %v5735, %v5735
      %v5752 = vpack.c.b16 %v5736, %v5736
      %5769 = vst [vmem:[%s496] sm:$0xf] %v5737
      %5770 = vst [vmem:[%s496 + $0x4] sm:$0xf] %v5738
      %5771 = vst [vmem:[%s496 + $0x8] sm:$0xf] %v5739
      %5772 = vst [vmem:[%s496 + $0xc] sm:$0xf] %v5740
      %5773 = vst [vmem:[%s496 + $0x10] sm:$0xf] %v5741
      %5774 = vst [vmem:[%s496 + $0x14] sm:$0xf] %v5742
      %5775 = vst [vmem:[%s496 + $0x18] sm:$0xf] %v5743
      %5776 = vst [vmem:[%s496 + $0x1c] sm:$0xf] %v5744
      %5777 = vst [vmem:[%s496 + $0x20] sm:$0xf] %v5745
      %5778 = vst [vmem:[%s496 + $0x24] sm:$0xf] %v5746
      %5779 = vst [vmem:[%s496 + $0x28] sm:$0xf] %v5747
      %5780 = vst [vmem:[%s496 + $0x2c] sm:$0xf] %v5748
      %5781 = vst [vmem:[%s496 + $0x30] sm:$0xf] %v5749
      %5782 = vst [vmem:[%s496 + $0x34] sm:$0xf] %v5750
      %5783 = vst [vmem:[%s496 + $0x38] sm:$0xf] %v5751
      %5784 = vst [vmem:[%s496 + $0x3c] sm:$0xf] %v5752
      %s5785 = smul.u32 16, %s26
      %p5786 = scmp.lt.s32.totalorder %s5785, 31
      %s5787 = scalar_select %p5786, %s5785, 31
      %s5788 = smul.addr %s5787, 4
      %s5789 = scalar_lea.vmem %s15, %s5788
      // Predicated region
      $region81: #{general_mlp_forward.1} parent=79 // pred_check
        %p5790 = pneg %p364
      $region82: #{general_mlp_forward.1} parent=79 // pred_check_branch
        %5792 = sbr.rel (%p5790) target = $region84
      $region83: #{general_mlp_forward.1} parent=79 // pred_region
        %s5793 = smul.u32 16, %s26
      $region84: #{general_mlp_forward.1} parent=79 // pred_fallthru
        _
    $region80: #{general_mlp_forward.1} parent=5 // pred_fallthru
      _
    %p5794 = scmp.le.s32.totalorder 2, %s21
    // Predicated region
    $region85: #{general_mlp_forward.1} parent=5 // pred_check
      %p5795 = pneg %p5794
    $region86: #{general_mlp_forward.1} parent=5 // pred_check_branch
      %5797 = sbr.rel (%p5795) target = $region88
    $region87: #{general_mlp_forward.1} parent=5 // pred_region
      %s5798 = ssub.s32 %s21, 2
      // Predicated region
      $region89: #{general_mlp_forward.1} parent=87 // pred_check
        %p5799 = pneg %p370
      $region90: #{general_mlp_forward.1} parent=87 // pred_check_branch
        %5801 = sbr.rel (%p5799) target = $region92
      $region91: #{general_mlp_forward.1} parent=87 // pred_region
        %s5802 = smul.u32 16, %s27
        %p5803 = scmp.lt.s32.totalorder %s5802, 31
        %s5804 = scalar_select %p5803, %s5802, 31
        %s5805 = smul.addr %s5804, 4
        %s5806 = scalar_lea.vmem %s15, %s5805
      $region92: #{general_mlp_forward.1} parent=87 // pred_fallthru
        _
    $region88: #{general_mlp_forward.1} parent=5 // pred_fallthru
      _
  $region6: #{general_mlp_forward.1} parent=0 // loop_footer
    %s25 = sadd.s32 1, %s21
  $region7: #{general_mlp_forward.1} parent=0 // loop_footer_branch
    %20 = sbr.rel target = $region3
  $region8: #{general_mlp_forward.1} parent=0 // loop_exit
    _

</llo_original>
